<compile_context>
chip_gen: v7x
topology: tpu7x:2x2x1
jax: 0.10.0
libtpu: 0.0.40
codegen_flags: <defaults>
</compile_context>

<pallas_src>
import jax
import jax.numpy as jnp
from jax import lax
from jax.experimental import pallas as pl
from jax.experimental.pallas import tpu as pltpu


def _round_up(x, m):
    return ((x + m - 1) // m) * m


def _pick_tile(limit, total, min_trips=1):
    """Largest multiple of 128 that divides `total`, is <= limit and (if possible)
    leaves at least `min_trips` grid steps (v7x: keep both TensorCores fed)."""
    best = 128
    t = 128
    cap = min(limit, total)
    while t <= cap:
        if total % t == 0 and total // t >= min_trips:
            best = t
        t += 128
    return best


# ----------------------------------------------------------------------------
# Kernel 1:  acc <- adj @ [1 | x | 0pad]   (tiled over K, accumulated in VMEM)
#            at last K step:  h = x + agg/deg ; h = MLP(h) ; h_hat = h/max(|h|,eps)
# adj streamed as int8 (upcast to bf16 in-kernel); x_aug is VMEM-resident.
# ----------------------------------------------------------------------------
def _prop_mlp_kernel(adj_ref, x_ref, w1_ref, b1_ref, w2_ref, b2_ref,
                     w3_ref, b3_ref, h_ref, acc_ref):
    i = pl.program_id(0)
    k = pl.program_id(1)
    tile_m, tile_k = adj_ref.shape

    @pl.when(k == 0)
    def _():
        acc_ref[...] = jnp.zeros_like(acc_ref)

    # int8 adjacency (exact for 0/1 edges) -> bf16, so the MXU runs one bf16 pass.
    adj = adj_ref[...].astype(jnp.bfloat16)
    k0 = pl.multiple_of(k * tile_k, tile_k)
    xk = x_ref[pl.ds(k0, tile_k), :].astype(jnp.bfloat16)   # resident x_aug, K slice
    acc_ref[...] += jnp.dot(adj, xk, preferred_element_type=jnp.float32)

    @pl.when(k == pl.num_programs(1) - 1)
    def _():
        # MLP epilogue over row sub-chunks: bounds vreg live ranges at big row tiles.
        chunk = 256 if tile_m % 256 == 0 else 128
        chunk = min(chunk, tile_m)

        def body(c, carry):
            r0 = pl.multiple_of(c * chunk, chunk)
            row = pl.multiple_of(i * tile_m + c * chunk, chunk)
            acc = acc_ref[pl.ds(r0, chunk), :]
            xrow = x_ref[pl.ds(row, chunk), :]
            deg = acc[:, :1] + 1e-6                    # ones column -> row degree
            inv_deg = 1.0 / deg                        # exact f32, only (chunk,1) elems
            # Column 0 of h is junk (~2) but row 0 of w1 is zero, so it is killed.
            h = xrow + acc * inv_deg
            h = jnp.maximum(
                jnp.dot(h, w1_ref[...], preferred_element_type=jnp.float32)
                + b1_ref[...], 0.0)
            h = jnp.maximum(
                jnp.dot(h, w2_ref[...], preferred_element_type=jnp.float32)
                + b2_ref[...], 0.0)
            h = jnp.dot(h, w3_ref[...], preferred_element_type=jnp.float32) + b3_ref[...]
            # Pre-normalize (torch CosineSimilarity eps=1e-8): h_hat = h / max(||h||, eps),
            # so kernel 2's cosine products are plain dot products.
            nrm2 = jnp.sum(h * h, axis=-1, keepdims=True)
            h_hat = h * lax.rsqrt(jnp.maximum(nrm2, 1e-16))
            h_ref[pl.ds(r0, chunk), :] = h_hat.astype(h_ref.dtype)   # bf16 out
            return carry

        lax.fori_loop(0, tile_m // chunk, body, 0, unroll=True)


def _prop_mlp(adj_i8, x_aug, p, *, tile_m, tile_k, d_out):
    n_pad, dxp = x_aug.shape
    grid = (n_pad // tile_m, n_pad // tile_k)
    return pl.pallas_call(
        _prop_mlp_kernel,
        out_shape=jax.ShapeDtypeStruct((n_pad, d_out), jnp.bfloat16),
        grid_spec=pltpu.PrefetchScalarGridSpec(
            num_scalar_prefetch=0,
            grid=grid,
            in_specs=[
                pl.BlockSpec((tile_m, tile_k), lambda i, k: (i, k)),   # adj tile (int8)
                pl.BlockSpec((n_pad, dxp), lambda i, k: (0, 0)),       # resident x_aug (f32)
                pl.BlockSpec(p["w1"].shape, lambda i, k: (0, 0)),      # resident MLP weights
                pl.BlockSpec(p["b1"].shape, lambda i, k: (0, 0)),
                pl.BlockSpec(p["w2"].shape, lambda i, k: (0, 0)),
                pl.BlockSpec(p["b2"].shape, lambda i, k: (0, 0)),
                pl.BlockSpec(p["w3"].shape, lambda i, k: (0, 0)),
                pl.BlockSpec(p["b3"].shape, lambda i, k: (0, 0)),
            ],
            out_specs=pl.BlockSpec((tile_m, d_out), lambda i, k: (i, 0)),
            scratch_shapes=[pltpu.VMEM((tile_m, dxp), jnp.float32)],
        ),
        compiler_params=pltpu.CompilerParams(
            dimension_semantics=("parallel", "arbitrary"),
            # TODO(synk): for very large graphs, re-budget the resident x_aug against
            # v7x's 64 MiB physical VMEM and fall back to K-streamed x_aug.
            vmem_limit_bytes=64 * 1024 * 1024),
    )(adj_i8, x_aug, p["w1"], p["b1"], p["w2"], p["b2"], p["w3"], p["b3"])


# ----------------------------------------------------------------------------
# Kernel 2: per-edge weighted common-neighbor score, tiled over (edges, neighbors)
#   cu[e, w] = h_hat[u_e] . h_hat[w]   (cosine, since h_hat is pre-normalized)
#   score[e] = sum_w adj[u_e,w] * adj[v_e,w] * cu[e,w] * cv[e,w]   (adj is 0/1)
# h_hat is VMEM-resident; accumulation is done in a lane-dense (1, TE) scratch.
# ----------------------------------------------------------------------------
def _edge_score_kernel(hu_ref, hv_ref, au_ref, av_ref, h_ref, out_ref, acc_ref):
    n = pl.program_id(1)
    tile_n = au_ref.shape[1]

    @pl.when(n == 0)
    def _():
        acc_ref[...] = jnp.zeros_like(acc_ref)

    n0 = pl.multiple_of(n * tile_n, tile_n)
    hblk = h_ref[pl.ds(n0, tile_n), :]     # resident bf16 (TN, D) candidate neighbors

    dn = (((1,), (1,)), ((), ()))   # contract feature axes: A @ B^T without transposes
    cu = lax.dot_general(hu_ref[...], hblk, dn,
                         preferred_element_type=jnp.float32)     # (TE, TN)
    cv = lax.dot_general(hv_ref[...], hblk, dn,
                         preferred_element_type=jnp.float32)     # (TE, TN)

    # Common-neighbor indicator: adjacency is 0/1, so au*av == (au!=0)&(av!=0)
    # (matching the sparse .mul().indices() pattern-only semantics of the reference).
    common = au_ref[...].astype(jnp.float32) * av_ref[...].astype(jnp.float32)
    prod = common * (cu * cv)                                    # (TE, TN)

    # Reduce over the neighbor axis directly into lane orientation: (1,TN)@(TE,TN)^T.
    ones = jnp.ones((1, tile_n), jnp.float32)
    acc_ref[...] += lax.dot_general(ones, prod, dn,
                                    preferred_element_type=jnp.float32)  # (1, TE)

    @pl.when(n == pl.num_programs(1) - 1)
    def _():
        out_ref[...] = jax.nn.sigmoid(acc_ref[...])


def _edge_scores(h_hat, adj_i8, edges_p, n_valid, *, tile_e, tile_n):
    n_pad, d = h_hat.shape
    e_pad = edges_p.shape[1]
    eu, ev = edges_p[0], edges_p[1]

    # Endpoint embedding gathers are tiny ((E, D), bf16); done in plain JAX.
    hu = jnp.take(h_hat, eu, axis=0)
    hv = jnp.take(h_hat, ev, axis=0)
    # TODO(synk): the (E_pad, N_pad) adjacency-row gathers still materialize in HBM;
    # moving them in-kernel (scalar-prefetched edge ids + manual make_async_copy row
    # DMAs) would remove the extra write+read. Kept wrapper-side (in int8) for robustness.
    au = jnp.take(adj_i8, eu, axis=0)
    av = jnp.take(adj_i8, ev, axis=0)

    grid = (e_pad // tile_e, n_pad // tile_n)
    out = pl.pallas_call(
        _edge_score_kernel,
        out_shape=jax.ShapeDtypeStruct((1, e_pad), jnp.float32),
        grid_spec=pltpu.PrefetchScalarGridSpec(
            num_scalar_prefetch=0,
            grid=grid,
            in_specs=[
                pl.BlockSpec((tile_e, d), lambda e, n: (e, 0)),        # hu_hat (bf16)
                pl.BlockSpec((tile_e, d), lambda e, n: (e, 0)),        # hv_hat (bf16)
                pl.BlockSpec((tile_e, tile_n), lambda e, n: (e, n)),   # adj rows of u (int8)
                pl.BlockSpec((tile_e, tile_n), lambda e, n: (e, n)),   # adj rows of v (int8)
                pl.BlockSpec((n_pad, d), lambda e, n: (0, 0)),         # resident h_hat (bf16)
            ],
            out_specs=pl.BlockSpec((1, tile_e), lambda e, n: (0, e)),
            scratch_shapes=[pltpu.VMEM((1, tile_e), jnp.float32)],
        ),
        compiler_params=pltpu.CompilerParams(
            dimension_semantics=("parallel", "arbitrary"),
            vmem_limit_bytes=64 * 1024 * 1024),
    )(hu, hv, au, av, h_hat)
    return out[0, :n_valid]


# ----------------------------------------------------------------------------
# Wrappers: edge-independent precompute (kernel 1) + per-edge-batch query (kernel 2)
# ----------------------------------------------------------------------------
def precompute_node_embeddings(x, adj, params, *, tile_m=512, tile_k=512):
    """Edge-independent part (propagation + MLP + normalization). Cache the returned
    (h_hat, adj_i8) across link-prediction queries so only kernel 2 reruns."""
    n, d_in = x.shape
    hid = params["w1"].shape[1]
    out_c = params["w3"].shape[1]

    n_pad = _round_up(n, 128)
    tile_m = _pick_tile(tile_m, n_pad, min_trips=2)   # parallel axis: feed both v7x TCs
    tile_k = _pick_tile(tile_k, n_pad, min_trips=1)

    dxp = _round_up(d_in + 1, 128)   # [ones | x | 0pad]
    hp = _round_up(hid, 128)
    op = _round_up(out_c, 128)

    # Adjacency: zero-pad, store as int8 (exact only for 0/1 edge indicators).
    # TODO(synk): if adjacency carries non-binary float weights, keep bf16/f32 here.
    adj_i8 = jnp.zeros((n_pad, n_pad), jnp.int8).at[:n, :n].set(adj.astype(jnp.int8))

    # Augmented node features [1 | x | 0]: adj @ x_aug gives [deg | agg | 0] in one pass.
    x_aug = jnp.zeros((n_pad, dxp), jnp.float32)
    x_aug = x_aug.at[:, 0].set(1.0)
    x_aug = x_aug.at[:n, 1:1 + d_in].set(x.astype(jnp.float32))

    # Zero-pad MLP params to 128-lane multiples (exact; padded lanes stay zero).
    def _pad(a, rows, cols, row_off=0):
        return jnp.zeros((rows, cols), jnp.float32).at[
            row_off:row_off + a.shape[0], :a.shape[1]].set(a.astype(jnp.float32))

    pp = {
        "w1": _pad(params["w1"], dxp, hp, row_off=1),   # row 0 (ones col) stays zero
        "b1": _pad(params["b1"], 1, hp),
        "w2": _pad(params["w2"], hp, hp),
        "b2": _pad(params["b2"], 1, hp),
        "w3": _pad(params["w3"], hp, op),
        "b3": _pad(params["b3"], 1, op),
    }

    h_hat = _prop_mlp(adj_i8, x_aug, pp, tile_m=tile_m, tile_k=tile_k, d_out=op)
    return h_hat, adj_i8


def predict_edges(h_hat, adj_i8, edges, *, tile_e=256, tile_n=512):
    n_pad = adj_i8.shape[0]
    n_edges = edges.shape[1]
    e_pad = _round_up(n_edges, 128)
    tile_e = _pick_tile(tile_e, e_pad, min_trips=2)
    tile_n = _pick_tile(tile_n, n_pad, min_trips=1)
    edges_p = jnp.zeros((2, e_pad), jnp.int32).at[:, :n_edges].set(edges.astype(jnp.int32))
    return _edge_scores(h_hat, adj_i8, edges_p, n_edges, tile_e=tile_e, tile_n=tile_n)


def weighted_common_neighbors_predictor(x, edges, adj, params, *,
                                        tile_m=512, tile_k=512,
                                        tile_e=256, tile_n=512):
    h_hat, adj_i8 = precompute_node_embeddings(x, adj, params,
                                               tile_m=tile_m, tile_k=tile_k)
    scores = predict_edges(h_hat, adj_i8, edges, tile_e=tile_e, tile_n=tile_n)
    return scores, None


def init_params(key, in_channels, hidden_channels, out_channels):
    # Shapes follow MLP.__init__ with num_layers=3; weights stored as (in, out).
    # BatchNorm1d params exist in the module but are never used in forward -> omitted.
    k1, k2, k3 = jax.random.split(key, 3)
    s1 = 1.0 / jnp.sqrt(in_channels)
    s2 = 1.0 / jnp.sqrt(hidden_channels)
    return {
        "w1": jax.random.uniform(k1, (in_channels, hidden_channels), jnp.float32, -s1, s1),
        "b1": jnp.zeros((1, hidden_channels), jnp.float32),
        "w2": jax.random.uniform(k2, (hidden_channels, hidden_channels), jnp.float32, -s2, s2),
        "b2": jnp.zeros((1, hidden_channels), jnp.float32),
        "w3": jax.random.uniform(k3, (hidden_channels, out_channels), jnp.float32, -s2, s2),
        "b3": jnp.zeros((1, out_channels), jnp.float32),
    }


if __name__ == "__main__":
    N = 512           # number of nodes
    IN_C = 16         # in_channels
    HID_C = 32        # hidden_channels
    OUT_C = 32        # out_channels
    E = 10            # number of query edges

    key = jax.random.PRNGKey(0)
    k_adj, k_x, k_e, k_p = jax.random.split(key, 4)

    # Dense 0/1 symmetric adjacency (equivalent of the SparseTensor `adj`).
    upper = (jax.random.uniform(k_adj, (N, N)) < 0.05).astype(jnp.float32)
    adj = jnp.triu(upper, k=1)
    adj = adj + adj.T

    x = jax.random.normal(k_x, (N, IN_C), dtype=jnp.float32)
    edges = jax.random.randint(k_e, (2, E), 0, N, dtype=jnp.int32)
    params = init_params(k_p, IN_C, HID_C, OUT_C)

    fwd = jax.jit(weighted_common_neighbors_predictor)
    scores, _ = fwd(x, edges, adj, params)
    scores = jax.block_until_ready(scores)

    assert scores.shape == (E,)
    assert bool(jnp.all(jnp.isfinite(scores)))
    print("KERNEL_OK")
</pallas_src>

<mosaic_0001>
module attributes {stable_mosaic.version = 11 : i64} {
  func.func @_prop_mlp_kernel(%arg0: i32, %arg1: i32, %arg2: memref<256x512xi8, #tpu.memory_space<vmem>>, %arg3: memref<512x128xf32, #tpu.memory_space<vmem>>, %arg4: memref<128x128xf32, #tpu.memory_space<vmem>>, %arg5: memref<1x128xf32, #tpu.memory_space<vmem>>, %arg6: memref<128x128xf32, #tpu.memory_space<vmem>>, %arg7: memref<1x128xf32, #tpu.memory_space<vmem>>, %arg8: memref<128x128xf32, #tpu.memory_space<vmem>>, %arg9: memref<1x128xf32, #tpu.memory_space<vmem>>, %arg10: memref<256x128xbf16, #tpu.memory_space<vmem>>, %arg11: memref<256x128xf32, #tpu.memory_space<vmem>>) attributes {dimension_semantics = [#tpu.dimension_semantics<parallel>, #tpu.dimension_semantics<arbitrary>], iteration_bounds = array<i64: 2, 1>, scalar_prefetch = 0 : i64, scratch_operands = 1 : i64, tpu.core_type = #tpu.core_type<tc>, window_params = [{transform_indices = @transform_0, window_bounds = array<i64: 256, 512>}, {pipeline_mode = #tpu.pipeline_mode<synchronous>, transform_indices = @transform_1, window_bounds = array<i64: 512, 128>}, {pipeline_mode = #tpu.pipeline_mode<synchronous>, transform_indices = @transform_2, window_bounds = array<i64: 128, 128>}, {pipeline_mode = #tpu.pipeline_mode<synchronous>, transform_indices = @transform_3, window_bounds = array<i64: 1, 128>}, {pipeline_mode = #tpu.pipeline_mode<synchronous>, transform_indices = @transform_4, window_bounds = array<i64: 128, 128>}, {pipeline_mode = #tpu.pipeline_mode<synchronous>, transform_indices = @transform_5, window_bounds = array<i64: 1, 128>}, {pipeline_mode = #tpu.pipeline_mode<synchronous>, transform_indices = @transform_6, window_bounds = array<i64: 128, 128>}, {pipeline_mode = #tpu.pipeline_mode<synchronous>, transform_indices = @transform_7, window_bounds = array<i64: 1, 128>}, {transform_indices = @transform_8, window_bounds = array<i64: 256, 128>}]} {
    %c0_i32 = arith.constant 0 : i32
    %0 = arith.cmpi eq, %arg1, %c0_i32 : i32
    %1 = arith.extui %0 : i1 to i32
    %c0_i32_0 = arith.constant 0 : i32
    %2 = arith.cmpi ne, %1, %c0_i32_0 : i32
    scf.if %2 {
      %cst_9 = arith.constant 0.000000e+00 : f32
      %17 = vector.broadcast %cst_9 : f32 to vector<256x128xf32>
      %c0_10 = arith.constant 0 : index
      %c0_11 = arith.constant 0 : index
      %18 = vector.load %arg11[%c0_10, %c0_11] : memref<256x128xf32, #tpu.memory_space<vmem>>, vector<256x128xf32>
      tpu.vector_store %arg11[%c0_10, %c0_11], %17 {strides = array<i32>} : memref<256x128xf32, #tpu.memory_space<vmem>>, vector<256x128xf32>,
    } else {
    }
    %c0 = arith.constant 0 : index
    %c0_1 = arith.constant 0 : index
    %3 = vector.load %arg2[%c0, %c0_1] : memref<256x512xi8, #tpu.memory_space<vmem>>, vector<256x512xi8>
    %4 = arith.sitofp %3 : vector<256x512xi8> to vector<256x512xbf16>
    %c512_i32 = arith.constant 512 : i32
    %5 = arith.muli %arg1, %c512_i32 : i32
    %6 = tpu.assume_multiple %5, 512 : i32
    %7 = arith.index_cast %6 : i32 to index
    %c0_2 = arith.constant 0 : index
    %8 = vector.load %arg3[%7, %c0_2] : memref<512x128xf32, #tpu.memory_space<vmem>>, vector<512x128xf32>
    %9 = arith.truncf %8 : vector<512x128xf32> to vector<512x128xbf16>
    %c0_3 = arith.constant 0 : index
    %c0_4 = arith.constant 0 : index
    %10 = vector.load %arg11[%c0_3, %c0_4] : memref<256x128xf32, #tpu.memory_space<vmem>>, vector<256x128xf32>
    %cst = arith.constant dense<0.000000e+00> : vector<256x128xf32>
    %11 = tpu.matmul %4, %9, %cst {dimension_numbers = #tpu.dot_dimension_numbers<[1], [0], [0], [1], [0, 0, 1, 1], [], []>} : vector<256x512xbf16>, vector<512x128xbf16>, vector<256x128xf32> -> vector<256x128xf32>
    %12 = arith.addf %10, %11 : vector<256x128xf32>
    %c0_5 = arith.constant 0 : index
    %c0_6 = arith.constant 0 : index
    %13 = vector.load %arg11[%c0_5, %c0_6] : memref<256x128xf32, #tpu.memory_space<vmem>>, vector<256x128xf32>
    tpu.vector_store %arg11[%c0_5, %c0_6], %12 {strides = array<i32>} : memref<256x128xf32, #tpu.memory_space<vmem>>, vector<256x128xf32>,
    %c0_i32_7 = arith.constant 0 : i32
    %14 = arith.cmpi eq, %arg1, %c0_i32_7 : i32
    %15 = arith.extui %14 : i1 to i32
    %c0_i32_8 = arith.constant 0 : i32
    %16 = arith.cmpi ne, %15, %c0_i32_8 : i32
    scf.if %16 {
      %c0_i32_9 = arith.constant 0 : i32
      %c256_i32 = arith.constant 256 : i32
      %17 = arith.muli %c0_i32_9, %c256_i32 : i32
      %18 = tpu.assume_multiple %17, 256 : i32
      %c256_i32_10 = arith.constant 256 : i32
      %19 = arith.muli %arg0, %c256_i32_10 : i32
      %c256_i32_11 = arith.constant 256 : i32
      %20 = arith.muli %c0_i32_9, %c256_i32_11 : i32
      %21 = arith.addi %19, %20 : i32
      %22 = tpu.assume_multiple %21, 256 : i32
      %23 = arith.index_cast %18 : i32 to index
      %c0_12 = arith.constant 0 : index
      %24 = vector.load %arg11[%23, %c0_12] : memref<256x128xf32, #tpu.memory_space<vmem>>, vector<256x128xf32>
      %25 = arith.index_cast %22 : i32 to index
      %c0_13 = arith.constant 0 : index
      %26 = vector.load %arg3[%25, %c0_13] : memref<512x128xf32, #tpu.memory_space<vmem>>, vector<256x128xf32>
      %27 = vector.extract_strided_slice %24 {offsets = [0, 0], sizes = [256, 1], strides = [1, 1]} : vector<256x128xf32> to vector<256x1xf32>
      %cst_14 = arith.constant 9.99999997E-7 : f32
      %28 = vector.broadcast %cst_14 : f32 to vector<256x1xf32>
      %29 = arith.addf %27, %28 : vector<256x1xf32>
      %cst_15 = arith.constant 1.000000e+00 : f32
      %30 = vector.broadcast %cst_15 : f32 to vector<256x1xf32>
      %31 = arith.divf %30, %29 : vector<256x1xf32>
      %32 = vector.broadcast %31 : vector<256x1xf32> to vector<256x128xf32>
      %33 = arith.mulf %24, %32 : vector<256x128xf32>
      %34 = arith.addf %26, %33 : vector<256x128xf32>
      %c0_16 = arith.constant 0 : index
      %c0_17 = arith.constant 0 : index
      %35 = vector.load %arg4[%c0_16, %c0_17] : memref<128x128xf32, #tpu.memory_space<vmem>>, vector<128x128xf32>
      %cst_18 = arith.constant dense<0.000000e+00> : vector<256x128xf32>
      %36 = tpu.matmul %34, %35, %cst_18 {dimension_numbers = #tpu.dot_dimension_numbers<[1], [0], [0], [1], [0, 0, 1, 1], [], []>} : vector<256x128xf32>, vector<128x128xf32>, vector<256x128xf32> -> vector<256x128xf32>
      %c0_19 = arith.constant 0 : index
      %c0_20 = arith.constant 0 : index
      %37 = vector.load %arg5[%c0_19, %c0_20] : memref<1x128xf32, #tpu.memory_space<vmem>>, vector<1x128xf32>
      %38 = vector.broadcast %37 : vector<1x128xf32> to vector<256x128xf32>
      %39 = arith.addf %36, %38 : vector<256x128xf32>
      %cst_21 = arith.constant 0.000000e+00 : f32
      %40 = vector.broadcast %cst_21 : f32 to vector<256x128xf32>
      %41 = arith.maximumf %39, %40 : vector<256x128xf32>
      %c0_22 = arith.constant 0 : index
      %c0_23 = arith.constant 0 : index
      %42 = vector.load %arg6[%c0_22, %c0_23] : memref<128x128xf32, #tpu.memory_space<vmem>>, vector<128x128xf32>
      %cst_24 = arith.constant dense<0.000000e+00> : vector<256x128xf32>
      %43 = tpu.matmul %41, %42, %cst_24 {dimension_numbers = #tpu.dot_dimension_numbers<[1], [0], [0], [1], [0, 0, 1, 1], [], []>} : vector<256x128xf32>, vector<128x128xf32>, vector<256x128xf32> -> vector<256x128xf32>
      %c0_25 = arith.constant 0 : index
      %c0_26 = arith.constant 0 : index
      %44 = vector.load %arg7[%c0_25, %c0_26] : memref<1x128xf32, #tpu.memory_space<vmem>>, vector<1x128xf32>
      %45 = vector.broadcast %44 : vector<1x128xf32> to vector<256x128xf32>
      %46 = arith.addf %43, %45 : vector<256x128xf32>
      %cst_27 = arith.constant 0.000000e+00 : f32
      %47 = vector.broadcast %cst_27 : f32 to vector<256x128xf32>
      %48 = arith.maximumf %46, %47 : vector<256x128xf32>
      %c0_28 = arith.constant 0 : index
      %c0_29 = arith.constant 0 : index
      %49 = vector.load %arg8[%c0_28, %c0_29] : memref<128x128xf32, #tpu.memory_space<vmem>>, vector<128x128xf32>
      %cst_30 = arith.constant dense<0.000000e+00> : vector<256x128xf32>
      %50 = tpu.matmul %48, %49, %cst_30 {dimension_numbers = #tpu.dot_dimension_numbers<[1], [0], [0], [1], [0, 0, 1, 1], [], []>} : vector<256x128xf32>, vector<128x128xf32>, vector<256x128xf32> -> vector<256x128xf32>
      %c0_31 = arith.constant 0 : index
      %c0_32 = arith.constant 0 : index
      %51 = vector.load %arg9[%c0_31, %c0_32] : memref<1x128xf32, #tpu.memory_space<vmem>>, vector<1x128xf32>
      %52 = vector.broadcast %51 : vector<1x128xf32> to vector<256x128xf32>
      %53 = arith.addf %50, %52 : vector<256x128xf32>
      %54 = arith.mulf %53, %53 : vector<256x128xf32>
      %cst_33 = arith.constant dense<0.000000e+00> : vector<256xf32>
      %55 = vector.multi_reduction <add>, %54, %cst_33 [1] : vector<256x128xf32> to vector<256xf32>
      %56 = vector.shape_cast %55 : vector<256xf32> to vector<256x1xf32>
      %cst_34 = arith.constant 1.000000e-16 : f32
      %57 = vector.broadcast %cst_34 : f32 to vector<256x1xf32>
      %58 = arith.maximumf %56, %57 : vector<256x1xf32>
      %59 = math.rsqrt %58 : vector<256x1xf32>
      %60 = vector.broadcast %59 : vector<256x1xf32> to vector<256x128xf32>
      %61 = arith.mulf %53, %60 : vector<256x128xf32>
      %62 = arith.truncf %61 : vector<256x128xf32> to vector<256x128xbf16>
      %63 = arith.index_cast %18 : i32 to index
      %c0_35 = arith.constant 0 : index
      %64 = vector.load %arg10[%63, %c0_35] : memref<256x128xbf16, #tpu.memory_space<vmem>>, vector<256x128xbf16>
      tpu.vector_store %arg10[%63, %c0_35], %62 {strides = array<i32>} : memref<256x128xbf16, #tpu.memory_space<vmem>>, vector<256x128xbf16>,
      %c1_i32 = arith.constant 1 : i32
    } else {
    }
    return
  }
  func.func @transform_0(%arg0: i32, %arg1: i32) -> (i32, i32) {
    %c0_i32 = arith.constant 0 : i32
    return %arg0, %arg1 : i32, i32
  }
  func.func @transform_1(%arg0: i32, %arg1: i32) -> (i32, i32) {
    %c0_i32 = arith.constant 0 : i32
    %c0_i32_0 = arith.constant 0 : i32
    %c0_i32_1 = arith.constant 0 : i32
    return %c0_i32, %c0_i32_0 : i32, i32
  }
  func.func @transform_2(%arg0: i32, %arg1: i32) -> (i32, i32) {
    %c0_i32 = arith.constant 0 : i32
    %c0_i32_0 = arith.constant 0 : i32
    %c0_i32_1 = arith.constant 0 : i32
    return %c0_i32, %c0_i32_0 : i32, i32
  }
  func.func @transform_3(%arg0: i32, %arg1: i32) -> (i32, i32) {
    %c0_i32 = arith.constant 0 : i32
    %c0_i32_0 = arith.constant 0 : i32
    %c0_i32_1 = arith.constant 0 : i32
    return %c0_i32, %c0_i32_0 : i32, i32
  }
  func.func @transform_4(%arg0: i32, %arg1: i32) -> (i32, i32) {
    %c0_i32 = arith.constant 0 : i32
    %c0_i32_0 = arith.constant 0 : i32
    %c0_i32_1 = arith.constant 0 : i32
    return %c0_i32, %c0_i32_0 : i32, i32
  }
  func.func @transform_5(%arg0: i32, %arg1: i32) -> (i32, i32) {
    %c0_i32 = arith.constant 0 : i32
    %c0_i32_0 = arith.constant 0 : i32
    %c0_i32_1 = arith.constant 0 : i32
    return %c0_i32, %c0_i32_0 : i32, i32
  }
  func.func @transform_6(%arg0: i32, %arg1: i32) -> (i32, i32) {
    %c0_i32 = arith.constant 0 : i32
    %c0_i32_0 = arith.constant 0 : i32
    %c0_i32_1 = arith.constant 0 : i32
    return %c0_i32, %c0_i32_0 : i32, i32
  }
  func.func @transform_7(%arg0: i32, %arg1: i32) -> (i32, i32) {
    %c0_i32 = arith.constant 0 : i32
    %c0_i32_0 = arith.constant 0 : i32
    %c0_i32_1 = arith.constant 0 : i32
    return %c0_i32, %c0_i32_0 : i32, i32
  }
  func.func @transform_8(%arg0: i32, %arg1: i32) -> (i32, i32) {
    %c0_i32 = arith.constant 0 : i32
    %c0_i32_0 = arith.constant 0 : i32
    return %arg0, %c0_i32 : i32, i32
  }
}

module attributes {stable_mosaic.version = 11 : i64} {
  func.func @_edge_score_kernel(%arg0: i32, %arg1: i32, %arg2: memref<128x128xbf16, #tpu.memory_space<vmem>>, %arg3: memref<128x128xbf16, #tpu.memory_space<vmem>>, %arg4: memref<128x512xi8, #tpu.memory_space<vmem>>, %arg5: memref<128x512xi8, #tpu.memory_space<vmem>>, %arg6: memref<512x128xbf16, #tpu.memory_space<vmem>>, %arg7: memref<1x128xf32, #tpu.memory_space<vmem>>, %arg8: memref<1x128xf32, #tpu.memory_space<vmem>>) attributes {dimension_semantics = [#tpu.dimension_semantics<parallel>, #tpu.dimension_semantics<arbitrary>], iteration_bounds = array<i64: 1, 1>, scalar_prefetch = 0 : i64, scratch_operands = 1 : i64, tpu.core_type = #tpu.core_type<tc>, window_params = [{transform_indices = @transform_0, window_bounds = array<i64: 128, 128>}, {transform_indices = @transform_1, window_bounds = array<i64: 128, 128>}, {transform_indices = @transform_2, window_bounds = array<i64: 128, 512>}, {transform_indices = @transform_3, window_bounds = array<i64: 128, 512>}, {pipeline_mode = #tpu.pipeline_mode<synchronous>, transform_indices = @transform_4, window_bounds = array<i64: 512, 128>}, {transform_indices = @transform_5, window_bounds = array<i64: 1, 128>}]} {
    %c0_i32 = arith.constant 0 : i32
    %0 = arith.cmpi eq, %arg1, %c0_i32 : i32
    %1 = arith.extui %0 : i1 to i32
    %c0_i32_0 = arith.constant 0 : i32
    %2 = arith.cmpi ne, %1, %c0_i32_0 : i32
    scf.if %2 {
      %cst_18 = arith.constant 0.000000e+00 : f32
      %26 = vector.broadcast %cst_18 : f32 to vector<1x128xf32>
      %c0_19 = arith.constant 0 : index
      %c0_20 = arith.constant 0 : index
      %27 = vector.load %arg8[%c0_19, %c0_20] : memref<1x128xf32, #tpu.memory_space<vmem>>, vector<1x128xf32>
      tpu.vector_store %arg8[%c0_19, %c0_20], %26 {strides = array<i32>} : memref<1x128xf32, #tpu.memory_space<vmem>>, vector<1x128xf32>,
    } else {
    }
    %c512_i32 = arith.constant 512 : i32
    %3 = arith.muli %arg1, %c512_i32 : i32
    %4 = tpu.assume_multiple %3, 512 : i32
    %5 = arith.index_cast %4 : i32 to index
    %c0 = arith.constant 0 : index
    %6 = vector.load %arg6[%5, %c0] : memref<512x128xbf16, #tpu.memory_space<vmem>>, vector<512x128xbf16>
    %c0_1 = arith.constant 0 : index
    %c0_2 = arith.constant 0 : index
    %7 = vector.load %arg2[%c0_1, %c0_2] : memref<128x128xbf16, #tpu.memory_space<vmem>>, vector<128x128xbf16>
    %cst = arith.constant dense<0.000000e+00> : vector<128x512xf32>
    %8 = tpu.matmul %7, %6, %cst {dimension_numbers = #tpu.dot_dimension_numbers<[1], [1], [0], [0], [0, 0, 1, 0], [], []>} : vector<128x128xbf16>, vector<512x128xbf16>, vector<128x512xf32> -> vector<128x512xf32>
    %c0_3 = arith.constant 0 : index
    %c0_4 = arith.constant 0 : index
    %9 = vector.load %arg3[%c0_3, %c0_4] : memref<128x128xbf16, #tpu.memory_space<vmem>>, vector<128x128xbf16>
    %cst_5 = arith.constant dense<0.000000e+00> : vector<128x512xf32>
    %10 = tpu.matmul %9, %6, %cst_5 {dimension_numbers = #tpu.dot_dimension_numbers<[1], [1], [0], [0], [0, 0, 1, 0], [], []>} : vector<128x128xbf16>, vector<512x128xbf16>, vector<128x512xf32> -> vector<128x512xf32>
    %c0_6 = arith.constant 0 : index
    %c0_7 = arith.constant 0 : index
    %11 = vector.load %arg4[%c0_6, %c0_7] : memref<128x512xi8, #tpu.memory_space<vmem>>, vector<128x512xi8>
    %12 = arith.sitofp %11 : vector<128x512xi8> to vector<128x512xf32>
    %c0_8 = arith.constant 0 : index
    %c0_9 = arith.constant 0 : index
    %13 = vector.load %arg5[%c0_8, %c0_9] : memref<128x512xi8, #tpu.memory_space<vmem>>, vector<128x512xi8>
    %14 = arith.sitofp %13 : vector<128x512xi8> to vector<128x512xf32>
    %15 = arith.mulf %12, %14 : vector<128x512xf32>
    %16 = arith.mulf %8, %10 : vector<128x512xf32>
    %17 = arith.mulf %15, %16 : vector<128x512xf32>
    %cst_10 = arith.constant 1.000000e+00 : f32
    %18 = vector.broadcast %cst_10 : f32 to vector<1x512xf32>
    %c0_11 = arith.constant 0 : index
    %c0_12 = arith.constant 0 : index
    %19 = vector.load %arg8[%c0_11, %c0_12] : memref<1x128xf32, #tpu.memory_space<vmem>>, vector<1x128xf32>
    %cst_13 = arith.constant dense<0.000000e+00> : vector<1x128xf32>
    %20 = tpu.matmul %18, %17, %cst_13 {dimension_numbers = #tpu.dot_dimension_numbers<[1], [1], [0], [0], [0, 0, 1, 0], [], []>} : vector<1x512xf32>, vector<128x512xf32>, vector<1x128xf32> -> vector<1x128xf32>
    %21 = arith.addf %19, %20 : vector<1x128xf32>
    %c0_14 = arith.constant 0 : index
    %c0_15 = arith.constant 0 : index
    %22 = vector.load %arg8[%c0_14, %c0_15] : memref<1x128xf32, #tpu.memory_space<vmem>>, vector<1x128xf32>
    tpu.vector_store %arg8[%c0_14, %c0_15], %21 {strides = array<i32>} : memref<1x128xf32, #tpu.memory_space<vmem>>, vector<1x128xf32>,
    %c0_i32_16 = arith.constant 0 : i32
    %23 = arith.cmpi eq, %arg1, %c0_i32_16 : i32
    %24 = arith.extui %23 : i1 to i32
    %c0_i32_17 = arith.constant 0 : i32
    %25 = arith.cmpi ne, %24, %c0_i32_17 : i32
    scf.if %25 {
      %c0_18 = arith.constant 0 : index
      %c0_19 = arith.constant 0 : index
      %26 = vector.load %arg8[%c0_18, %c0_19] : memref<1x128xf32, #tpu.memory_space<vmem>>, vector<1x128xf32>
      %27 = arith.negf %26 : vector<1x128xf32>
      %28 = math.exp %27 : vector<1x128xf32>
      %cst_20 = arith.constant 1.000000e+00 : f32
      %29 = vector.broadcast %cst_20 : f32 to vector<1x128xf32>
      %30 = arith.addf %29, %28 : vector<1x128xf32>
      %31 = arith.divf %29, %30 : vector<1x128xf32>
      %c0_21 = arith.constant 0 : index
      %c0_22 = arith.constant 0 : index
      %32 = vector.load %arg7[%c0_21, %c0_22] : memref<1x128xf32, #tpu.memory_space<vmem>>, vector<1x128xf32>
      tpu.vector_store %arg7[%c0_21, %c0_22], %31 {strides = array<i32>} : memref<1x128xf32, #tpu.memory_space<vmem>>, vector<1x128xf32>,
    } else {
    }
    return
  }
  func.func @transform_0(%arg0: i32, %arg1: i32) -> (i32, i32) {
    %c0_i32 = arith.constant 0 : i32
    %c0_i32_0 = arith.constant 0 : i32
    return %arg0, %c0_i32 : i32, i32
  }
  func.func @transform_1(%arg0: i32, %arg1: i32) -> (i32, i32) {
    %c0_i32 = arith.constant 0 : i32
    %c0_i32_0 = arith.constant 0 : i32
    return %arg0, %c0_i32 : i32, i32
  }
  func.func @transform_2(%arg0: i32, %arg1: i32) -> (i32, i32) {
    %c0_i32 = arith.constant 0 : i32
    return %arg0, %arg1 : i32, i32
  }
  func.func @transform_3(%arg0: i32, %arg1: i32) -> (i32, i32) {
    %c0_i32 = arith.constant 0 : i32
    return %arg0, %arg1 : i32, i32
  }
  func.func @transform_4(%arg0: i32, %arg1: i32) -> (i32, i32) {
    %c0_i32 = arith.constant 0 : i32
    %c0_i32_0 = arith.constant 0 : i32
    %c0_i32_1 = arith.constant 0 : i32
    return %c0_i32, %c0_i32_0 : i32, i32
  }
  func.func @transform_5(%arg0: i32, %arg1: i32) -> (i32, i32) {
    %c0_i32 = arith.constant 0 : i32
    %c0_i32_0 = arith.constant 0 : i32
    return %c0_i32, %arg0 : i32, i32
  }
}

</mosaic_0001>

<llo_original>
// kernel: weighted_common_neighbors_predictor.2
$region0: #{weighted_common_neighbors_predictor.2}
  #allocation0 [shape = 'u32[]', space=smem, size = 0x4, offset = 0x4, fixed_abs, tag = 'smem constant byte address 0x4 - core index']
  #allocation1 [shape = 'u32[144,128]{1,0:T(1,128)}', space=vmem, size = 0x12000, scoped, tag = 'internal scratch']
  #allocation2 [shape = 'f32[256,128]{1,0:T(8,128)}', space=vmem, size = 0x20000, scoped, tag = 'scratch operand']
  %s0 = inlined_call_operand.hbm [shape: s8[512,512], index: 0, kind: input, shape index: {}]
  %s1 = inlined_call_operand.hbm [shape: f32[512,128], index: 1, kind: input, shape index: {}]
  %s2 = inlined_call_operand.hbm [shape: f32[128,128], index: 2, kind: input, shape index: {}]
  %s3 = inlined_call_operand.hbm [shape: f32[1,128], index: 3, kind: input, shape index: {}]
  %s4 = inlined_call_operand.hbm [shape: f32[128,128], index: 4, kind: input, shape index: {}]
  %s5 = inlined_call_operand.hbm [shape: f32[1,128], index: 5, kind: input, shape index: {}]
  %s6 = inlined_call_operand.hbm [shape: f32[128,128], index: 6, kind: input, shape index: {}]
  %s7 = inlined_call_operand.hbm [shape: f32[1,128], index: 7, kind: input, shape index: {}]
  %s8 = inlined_call_operand.hbm [shape: bf16[512,128], index: 8, kind: output, shape index: {}]
  %s9 = sld [smem:[#allocation0]]
  $region105: #{weighted_common_neighbors_predictor.2} parent=0
    _
  %s11 = ssub.s32 1, %s9
  %s12 = scalar_select 0, %s11, %s9
  $region1: #{weighted_common_neighbors_predictor.2} parent=0
    #allocation3 [shape = 'u8[262144]{0}', space=vmem, size = 0x40000, scoped, tag = 'input window, operand 0']
    #allocation4 [shape = 's32[2]{0}', space=sflag, size = 0x8, scoped, tag = 'scoped memory for weighted_common_neighbors_predictor.2']
    #allocation5 [shape = 's32[2]{0}', space=sflag, size = 0x8, scoped, tag = 'scoped memory for weighted_common_neighbors_predictor.2']
    #allocation6 [shape = 'u8[262144]{0}', space=vmem, size = 0x40000, scoped, tag = 'input window, operand 1, single buffered']
    #allocation7 [shape = 's32[1]{0}', space=sflag, size = 0x4, scoped, tag = 'scoped memory for weighted_common_neighbors_predictor.2']
    #allocation8 [shape = 'u8[65536]{0}', space=vmem, size = 0x10000, scoped, tag = 'input window, operand 2, single buffered']
    #allocation9 [shape = 'u8[512]{0}', space=vmem, size = 0x400, scoped, tag = 'input window, operand 3, single buffered']
    #allocation10 [shape = 's32[1]{0}', space=sflag, size = 0x4, scoped, tag = 'scoped memory for weighted_common_neighbors_predictor.2']
    #allocation11 [shape = 'u8[65536]{0}', space=vmem, size = 0x10000, scoped, tag = 'input window, operand 4, single buffered']
    #allocation12 [shape = 'u8[512]{0}', space=vmem, size = 0x400, scoped, tag = 'input window, operand 5, single buffered']
    #allocation13 [shape = 's32[1]{0}', space=sflag, size = 0x4, scoped, tag = 'scoped memory for weighted_common_neighbors_predictor.2']
    #allocation14 [shape = 'u8[65536]{0}', space=vmem, size = 0x10000, scoped, tag = 'input window, operand 6, single buffered']
    #allocation15 [shape = 'u8[512]{0}', space=vmem, size = 0x400, scoped, tag = 'input window, operand 7, single buffered']
    #allocation16 [shape = 's32[1]{0}', space=sflag, size = 0x4, scoped, tag = 'scoped memory for weighted_common_neighbors_predictor.2']
    #allocation17 [shape = 'u8[131072]{0}', space=vmem, size = 0x20000, scoped, tag = 'output window, operand 0']
    %13 = vsyncpa [#allocation4], 0
    %s14 = scalar_lea.sflag [#allocation4], 1
    %15 = vsyncpa %s14, 0
    %16 = vsyncpa [#allocation7], 0
    %17 = vsyncpa [#allocation10], 0
    %18 = vsyncpa [#allocation13], 0
    %19 = vsyncpa [#allocation16], 0
    %20 = vsyncpa [#allocation5], 0
    %s21 = scalar_lea.sflag [#allocation5], 1
    %22 = vsyncpa %s21, 0
    loop: start=0, step=1, limit=4
    $region2: #{weighted_common_neighbors_predictor.2} parent=1 // loop_pre_header
      _
    $region3: #{weighted_common_neighbors_predictor.2} parent=1 // loop_header
      %s24 = sphi 0, %s28
      %p25 = scmp.ge.s32.totalorder %s24, 4
      %s31 = sphi 0, %s43
      %s32 = sphi 0, %s39
      %s33 = sphi 0, %s31
      %s34 = sphi 0, %s32
      %s35 = sphi 0, %s33
      %s36 = sphi 0, %s34
      %s48 = sphi 0, %s50
      %s51 = sphi 0, %s48
      %s52 = sphi 0, %s51
      %s68 = sphi 0, %s52
      %s72 = sphi 0, %s72
      %s74 = sphi 0, %s72
      %s75 = sphi 0, %s74
      %s89 = sphi 0, %s75
      %s93 = sphi 0, %s93
      %s95 = sphi 0, %s93
      %s96 = sphi 0, %s95
      %s110 = sphi 0, %s96
      %s114 = sphi 0, %s114
      %s116 = sphi 0, %s114
      %s117 = sphi 0, %s116
      %s131 = sphi 0, %s117
      %s135 = sphi 0, %s135
      %s137 = sphi 0, %s135
      %s138 = sphi 0, %s137
      %s152 = sphi 0, %s138
      %s156 = sphi 0, %s156
      %s158 = sphi 0, %s156
      %s159 = sphi 0, %s158
      %s173 = sphi 0, %s159
      %s177 = sphi 0, %s177
      %s179 = sphi 0, %s177
      %s180 = sphi 0, %s179
      %s194 = sphi 0, %s180
      %s198 = sphi 0, %s198
      %s200 = sphi 0, %s198
      %s201 = sphi 0, %s200
      %s215 = sphi 0, %s201
      %s221 = sphi 0, %s223
      %s224 = sphi 0, %s221
      %s225 = sphi 0, %s224
      %s241 = sphi 0, %s225
    $region4: #{weighted_common_neighbors_predictor.2} parent=1 // loop_header_branch
      %27 = sbr.rel (%p25) target = $region8
    $region5: #{weighted_common_neighbors_predictor.2} parent=1 // loop_body
      %s29 = ssub.s32 %s24, 1
      %s30 = ssub.s32 %s24, 2
      %s37 = sadd.s32 1, %s32
      %p38 = scmp.ge.s32.totalorder %s37, 1
      %s39 = scalar_select %p38, 0, %s37
      %s40 = sadd.s32 1, %s31
      %s41 = scalar_select %p38, %s40, %s31
      %p42 = scmp.ge.s32.totalorder %s41, 2
      %s43 = scalar_select %p42, 0, %s41
      %s44 = ssub.s32 %s31, %s43
      %s45 = ssub.s32 %s32, %s39
      %s46 = sor.u32 %s44, %s45
      %p47 = scmp.eq.s32.totalorder %s46, 0
      %s49 = sadd.s32 %s48, 1
      %s50 = scalar_select %p47, %s48, %s49
      %p53 = pneg %p47
      %p54 = scmp.eq.s32.totalorder %s24, 1
      %p55 = por %p53, %p54
      %p56 = scmp.ne.s32.totalorder %s48, %s51
      %p57 = scmp.eq.s32.totalorder %s24, 0
      %p58 = por %p56, %p57
      %p59 = scmp.ne.s32.totalorder %s48, %s51
      %p60 = scmp.eq.s32.totalorder %s29, 1
      %p61 = por %p59, %p60
      %p62 = scmp.ne.s32.totalorder %s51, %s52
      %p63 = scmp.eq.s32.totalorder %s29, 0
      %p64 = por %p62, %p63
      %p65 = scmp.ne.s32.totalorder %s51, %s52
      %p66 = scmp.eq.s32.totalorder %s30, 1
      %p67 = por %p65, %p66
      %p69 = scmp.ne.s32.totalorder %s52, %s68
      %p70 = scmp.eq.s32.totalorder %s30, 0
      %p71 = por %p69, %p70
      %s73 = sadd.s32 %s72, 1
      %p76 = scmp.eq.s32.totalorder %s24, 1
      %p77 = scmp.ne.s32.totalorder %s72, %s74
      %p78 = scmp.eq.s32.totalorder %s24, 0
      %p79 = por %p77, %p78
      %p80 = scmp.ne.s32.totalorder %s72, %s74
      %p81 = scmp.eq.s32.totalorder %s29, 1
      %p82 = por %p80, %p81
      %p83 = scmp.ne.s32.totalorder %s74, %s75
      %p84 = scmp.eq.s32.totalorder %s29, 0
      %p85 = por %p83, %p84
      %p86 = scmp.ne.s32.totalorder %s74, %s75
      %p87 = scmp.eq.s32.totalorder %s30, 1
      %p88 = por %p86, %p87
      %p90 = scmp.ne.s32.totalorder %s75, %s89
      %p91 = scmp.eq.s32.totalorder %s30, 0
      %p92 = por %p90, %p91
      %s94 = sadd.s32 %s93, 1
      %p97 = scmp.eq.s32.totalorder %s24, 1
      %p98 = scmp.ne.s32.totalorder %s93, %s95
      %p99 = scmp.eq.s32.totalorder %s24, 0
      %p100 = por %p98, %p99
      %p101 = scmp.ne.s32.totalorder %s93, %s95
      %p102 = scmp.eq.s32.totalorder %s29, 1
      %p103 = por %p101, %p102
      %p104 = scmp.ne.s32.totalorder %s95, %s96
      %p105 = scmp.eq.s32.totalorder %s29, 0
      %p106 = por %p104, %p105
      %p107 = scmp.ne.s32.totalorder %s95, %s96
      %p108 = scmp.eq.s32.totalorder %s30, 1
      %p109 = por %p107, %p108
      %p111 = scmp.ne.s32.totalorder %s96, %s110
      %p112 = scmp.eq.s32.totalorder %s30, 0
      %p113 = por %p111, %p112
      %s115 = sadd.s32 %s114, 1
      %p118 = scmp.eq.s32.totalorder %s24, 1
      %p119 = scmp.ne.s32.totalorder %s114, %s116
      %p120 = scmp.eq.s32.totalorder %s24, 0
      %p121 = por %p119, %p120
      %p122 = scmp.ne.s32.totalorder %s114, %s116
      %p123 = scmp.eq.s32.totalorder %s29, 1
      %p124 = por %p122, %p123
      %p125 = scmp.ne.s32.totalorder %s116, %s117
      %p126 = scmp.eq.s32.totalorder %s29, 0
      %p127 = por %p125, %p126
      %p128 = scmp.ne.s32.totalorder %s116, %s117
      %p129 = scmp.eq.s32.totalorder %s30, 1
      %p130 = por %p128, %p129
      %p132 = scmp.ne.s32.totalorder %s117, %s131
      %p133 = scmp.eq.s32.totalorder %s30, 0
      %p134 = por %p132, %p133
      %s136 = sadd.s32 %s135, 1
      %p139 = scmp.eq.s32.totalorder %s24, 1
      %p140 = scmp.ne.s32.totalorder %s135, %s137
      %p141 = scmp.eq.s32.totalorder %s24, 0
      %p142 = por %p140, %p141
      %p143 = scmp.ne.s32.totalorder %s135, %s137
      %p144 = scmp.eq.s32.totalorder %s29, 1
      %p145 = por %p143, %p144
      %p146 = scmp.ne.s32.totalorder %s137, %s138
      %p147 = scmp.eq.s32.totalorder %s29, 0
      %p148 = por %p146, %p147
      %p149 = scmp.ne.s32.totalorder %s137, %s138
      %p150 = scmp.eq.s32.totalorder %s30, 1
      %p151 = por %p149, %p150
      %p153 = scmp.ne.s32.totalorder %s138, %s152
      %p154 = scmp.eq.s32.totalorder %s30, 0
      %p155 = por %p153, %p154
      %s157 = sadd.s32 %s156, 1
      %p160 = scmp.eq.s32.totalorder %s24, 1
      %p161 = scmp.ne.s32.totalorder %s156, %s158
      %p162 = scmp.eq.s32.totalorder %s24, 0
      %p163 = por %p161, %p162
      %p164 = scmp.ne.s32.totalorder %s156, %s158
      %p165 = scmp.eq.s32.totalorder %s29, 1
      %p166 = por %p164, %p165
      %p167 = scmp.ne.s32.totalorder %s158, %s159
      %p168 = scmp.eq.s32.totalorder %s29, 0
      %p169 = por %p167, %p168
      %p170 = scmp.ne.s32.totalorder %s158, %s159
      %p171 = scmp.eq.s32.totalorder %s30, 1
      %p172 = por %p170, %p171
      %p174 = scmp.ne.s32.totalorder %s159, %s173
      %p175 = scmp.eq.s32.totalorder %s30, 0
      %p176 = por %p174, %p175
      %s178 = sadd.s32 %s177, 1
      %p181 = scmp.eq.s32.totalorder %s24, 1
      %p182 = scmp.ne.s32.totalorder %s177, %s179
      %p183 = scmp.eq.s32.totalorder %s24, 0
      %p184 = por %p182, %p183
      %p185 = scmp.ne.s32.totalorder %s177, %s179
      %p186 = scmp.eq.s32.totalorder %s29, 1
      %p187 = por %p185, %p186
      %p188 = scmp.ne.s32.totalorder %s179, %s180
      %p189 = scmp.eq.s32.totalorder %s29, 0
      %p190 = por %p188, %p189
      %p191 = scmp.ne.s32.totalorder %s179, %s180
      %p192 = scmp.eq.s32.totalorder %s30, 1
      %p193 = por %p191, %p192
      %p195 = scmp.ne.s32.totalorder %s180, %s194
      %p196 = scmp.eq.s32.totalorder %s30, 0
      %p197 = por %p195, %p196
      %s199 = sadd.s32 %s198, 1
      %p202 = scmp.eq.s32.totalorder %s24, 1
      %p203 = scmp.ne.s32.totalorder %s198, %s200
      %p204 = scmp.eq.s32.totalorder %s24, 0
      %p205 = por %p203, %p204
      %p206 = scmp.ne.s32.totalorder %s198, %s200
      %p207 = scmp.eq.s32.totalorder %s29, 1
      %p208 = por %p206, %p207
      %p209 = scmp.ne.s32.totalorder %s200, %s201
      %p210 = scmp.eq.s32.totalorder %s29, 0
      %p211 = por %p209, %p210
      %p212 = scmp.ne.s32.totalorder %s200, %s201
      %p213 = scmp.eq.s32.totalorder %s30, 1
      %p214 = por %p212, %p213
      %p216 = scmp.ne.s32.totalorder %s201, %s215
      %p217 = scmp.eq.s32.totalorder %s30, 0
      %p218 = por %p216, %p217
      %s219 = ssub.s32 %s31, %s43
      %p220 = scmp.eq.s32.totalorder %s219, 0
      %s222 = sadd.s32 %s221, 1
      %s223 = scalar_select %p220, %s221, %s222
      %p226 = pneg %p220
      %p227 = scmp.eq.s32.totalorder %s24, 1
      %p228 = por %p226, %p227
      %p229 = scmp.ne.s32.totalorder %s221, %s224
      %p230 = scmp.eq.s32.totalorder %s24, 0
      %p231 = por %p229, %p230
      %p232 = scmp.ne.s32.totalorder %s221, %s224
      %p233 = scmp.eq.s32.totalorder %s29, 1
      %p234 = por %p232, %p233
      %p235 = scmp.ne.s32.totalorder %s224, %s225
      %p236 = scmp.eq.s32.totalorder %s29, 0
      %p237 = por %p235, %p236
      %p238 = scmp.ne.s32.totalorder %s224, %s225
      %p239 = scmp.eq.s32.totalorder %s30, 1
      %p240 = por %p238, %p239
      %p242 = scmp.ne.s32.totalorder %s225, %s241
      %p243 = scmp.eq.s32.totalorder %s30, 0
      %p244 = por %p242, %p243
      %p245 = scmp.le.s32.totalorder 1, %s24
      %p246 = scmp.lt.s32.totalorder %s24, 3
      %p247 = pnand %p245, %p246
      %p248 = pneg %p247
      // Predicated region
      $region9: #{weighted_common_neighbors_predictor.2} parent=5 // pred_check
        _
      $region10: #{weighted_common_neighbors_predictor.2} parent=5 // pred_check_branch
        %250 = sbr.rel (%p247) target = $region12
      $region11: #{weighted_common_neighbors_predictor.2} parent=5 // pred_region
        %s251 = ssub.s32 %s24, 1
        // Predicated region
        $region13: #{weighted_common_neighbors_predictor.2} parent=11 // pred_check
          %p252 = pneg %p85
        $region14: #{weighted_common_neighbors_predictor.2} parent=11 // pred_check_branch
          %254 = sbr.rel (%p252) target = $region16
        $region15: #{weighted_common_neighbors_predictor.2} parent=11 // pred_region
          %s256 = ssub.s32 8192, 8192
          %257 = vsyncadd [#allocation7], %s256
          %s258 = sshll.u32 [#allocation6], 4
          %s259 = int_to_ptr.vmem [resolvable:$true] %s258
          %264 = dma.hbm_to_vmem [thread:$0]  %s1, 8192, %s259, [#allocation7], 128, 128, 8
        $region16: #{weighted_common_neighbors_predictor.2} parent=11 // pred_fallthru
          _
        // Predicated region
        $region17: #{weighted_common_neighbors_predictor.2} parent=11 // pred_check
          %p265 = pneg %p106
        $region18: #{weighted_common_neighbors_predictor.2} parent=11 // pred_check_branch
          %267 = sbr.rel (%p265) target = $region20
        $region19: #{weighted_common_neighbors_predictor.2} parent=11 // pred_region
          %s269 = ssub.s32 2048, 2048
          %270 = vsyncadd [#allocation7], %s269
          %s271 = sshll.u32 [#allocation8], 4
          %s272 = int_to_ptr.vmem [resolvable:$true] %s271
          %277 = dma.hbm_to_vmem [thread:$0]  %s2, 2048, %s272, [#allocation7], 128, 128, 8
        $region20: #{weighted_common_neighbors_predictor.2} parent=11 // pred_fallthru
          _
        // Predicated region
        $region21: #{weighted_common_neighbors_predictor.2} parent=11 // pred_check
          %p278 = pneg %p127
        $region22: #{weighted_common_neighbors_predictor.2} parent=11 // pred_check_branch
          %280 = sbr.rel (%p278) target = $region24
        $region23: #{weighted_common_neighbors_predictor.2} parent=11 // pred_region
          %s282 = ssub.s32 16, 16
          %283 = vsyncadd [#allocation10], %s282
          %s285 = sshll.u32 [#allocation9], 4
          %s286 = int_to_ptr.vmem [resolvable:$true] %s285
          %288 = dma.hbm_to_vmem [thread:$0]  %s3, 16, %s286, [#allocation10]
        $region24: #{weighted_common_neighbors_predictor.2} parent=11 // pred_fallthru
          _
        // Predicated region
        $region25: #{weighted_common_neighbors_predictor.2} parent=11 // pred_check
          %p289 = pneg %p148
        $region26: #{weighted_common_neighbors_predictor.2} parent=11 // pred_check_branch
          %291 = sbr.rel (%p289) target = $region28
        $region27: #{weighted_common_neighbors_predictor.2} parent=11 // pred_region
          %s293 = ssub.s32 2048, 2048
          %294 = vsyncadd [#allocation10], %s293
          %s295 = sshll.u32 [#allocation11], 4
          %s296 = int_to_ptr.vmem [resolvable:$true] %s295
          %301 = dma.hbm_to_vmem [thread:$0]  %s4, 2048, %s296, [#allocation10], 128, 128, 8
        $region28: #{weighted_common_neighbors_predictor.2} parent=11 // pred_fallthru
          _
        // Predicated region
        $region29: #{weighted_common_neighbors_predictor.2} parent=11 // pred_check
          %p302 = pneg %p169
        $region30: #{weighted_common_neighbors_predictor.2} parent=11 // pred_check_branch
          %304 = sbr.rel (%p302) target = $region32
        $region31: #{weighted_common_neighbors_predictor.2} parent=11 // pred_region
          %s306 = ssub.s32 16, 16
          %307 = vsyncadd [#allocation13], %s306
          %s309 = sshll.u32 [#allocation12], 4
          %s310 = int_to_ptr.vmem [resolvable:$true] %s309
          %312 = dma.hbm_to_vmem [thread:$0]  %s5, 16, %s310, [#allocation13]
        $region32: #{weighted_common_neighbors_predictor.2} parent=11 // pred_fallthru
          _
        // Predicated region
        $region33: #{weighted_common_neighbors_predictor.2} parent=11 // pred_check
          %p313 = pneg %p190
        $region34: #{weighted_common_neighbors_predictor.2} parent=11 // pred_check_branch
          %315 = sbr.rel (%p313) target = $region36
        $region35: #{weighted_common_neighbors_predictor.2} parent=11 // pred_region
          %s317 = ssub.s32 2048, 2048
          %318 = vsyncadd [#allocation13], %s317
          %s319 = sshll.u32 [#allocation14], 4
          %s320 = int_to_ptr.vmem [resolvable:$true] %s319
          %325 = dma.hbm_to_vmem [thread:$0]  %s6, 2048, %s320, [#allocation13], 128, 128, 8
        $region36: #{weighted_common_neighbors_predictor.2} parent=11 // pred_fallthru
          _
        // Predicated region
        $region37: #{weighted_common_neighbors_predictor.2} parent=11 // pred_check
          %p326 = pneg %p211
        $region38: #{weighted_common_neighbors_predictor.2} parent=11 // pred_check_branch
          %328 = sbr.rel (%p326) target = $region40
        $region39: #{weighted_common_neighbors_predictor.2} parent=11 // pred_region
          %s330 = ssub.s32 16, 16
          %331 = vsyncadd [#allocation16], %s330
          %s333 = sshll.u32 [#allocation15], 4
          %s334 = int_to_ptr.vmem [resolvable:$true] %s333
          %336 = dma.hbm_to_vmem [thread:$0]  %s7, 16, %s334, [#allocation16]
        $region40: #{weighted_common_neighbors_predictor.2} parent=11 // pred_fallthru
          _
      $region12: #{weighted_common_neighbors_predictor.2} parent=5 // pred_fallthru
        _
      %p337 = scmp.lt.s32.totalorder %s24, 2
      // Predicated region
      $region41: #{weighted_common_neighbors_predictor.2} parent=5 // pred_check
        %p338 = pneg %p337
      $region42: #{weighted_common_neighbors_predictor.2} parent=5 // pred_check_branch
        %340 = sbr.rel (%p338) target = $region44
      $region43: #{weighted_common_neighbors_predictor.2} parent=5 // pred_region
        // Predicated region
        $region45: #{weighted_common_neighbors_predictor.2} parent=43 // pred_check
          %p341 = pneg %p58
        $region46: #{weighted_common_neighbors_predictor.2} parent=43 // pred_check_branch
          %343 = sbr.rel (%p341) target = $region48
        $region47: #{weighted_common_neighbors_predictor.2} parent=43 // pred_region
          %s344 = sand.u32 %s48, 1
          %s345 = scalar_lea.sflag [#allocation4], %s344
          %s346 = sand.u32 %s48, 1
          %s347 = smul.addr %s346, 256
          %s348 = scalar_lea.vmem [#allocation3], %s347
          %s349 = smul.u32 8, %s31
          %s350 = smul.u32 4, %s32
          %s352 = ssub.s32 4096, 4096
          %353 = vsyncadd %s345, %s352
          %s354 = smul.addr %s349, 4
          %s355 = sadd.s32 %s350, %s354
          %s356 = smul.addr %s355, 128
          %s357 = scalar_lea.hbm %s0, %s356
          %s358 = sshll.u32 %s348, 4
          %s359 = int_to_ptr.vmem [resolvable:$true] %s358
          %364 = dma.hbm_to_vmem [thread:$0]  %s357, 4096, %s359, %s345, 512, 512, 32
        $region48: #{weighted_common_neighbors_predictor.2} parent=43 // pred_fallthru
          _
      $region44: #{weighted_common_neighbors_predictor.2} parent=5 // pred_fallthru
        _
      %p365 = scmp.le.s32.totalorder 1, %s24
      %p366 = scmp.lt.s32.totalorder %s24, 3
      %p367 = pnand %p365, %p366
      %p368 = pneg %p367
      // Predicated region
      $region49: #{weighted_common_neighbors_predictor.2} parent=5 // pred_check
        _
      $region50: #{weighted_common_neighbors_predictor.2} parent=5 // pred_check_branch
        %370 = sbr.rel (%p367) target = $region52
      $region51: #{weighted_common_neighbors_predictor.2} parent=5 // pred_region
        %s371 = ssub.s32 %s24, 1
        %s372 = sand.u32 %s51, 1
        %s373 = scalar_lea.sflag [#allocation4], %s372
        %s374 = sand.u32 %s51, 1
        %s375 = smul.addr %s374, 256
        %s376 = scalar_lea.vmem [#allocation3], %s375
        // Predicated region
        $region53: #{weighted_common_neighbors_predictor.2} parent=51 // pred_check
          %p377 = pneg %p64
        $region54: #{weighted_common_neighbors_predictor.2} parent=51 // pred_check_branch
          %379 = sbr.rel (%p377) target = $region56
        $region55: #{weighted_common_neighbors_predictor.2} parent=51 // pred_region
          %380 = dma.done %s373, 4096
        $region56: #{weighted_common_neighbors_predictor.2} parent=51 // pred_fallthru
          _
        // Predicated region
        $region57: #{weighted_common_neighbors_predictor.2} parent=51 // pred_check
          %p381 = pneg %p85
        $region58: #{weighted_common_neighbors_predictor.2} parent=51 // pred_check_branch
          %383 = sbr.rel (%p381) target = $region60
        $region59: #{weighted_common_neighbors_predictor.2} parent=51 // pred_region
          %384 = dma.done [#allocation7], 8192
        $region60: #{weighted_common_neighbors_predictor.2} parent=51 // pred_fallthru
          _
        // Predicated region
        $region61: #{weighted_common_neighbors_predictor.2} parent=51 // pred_check
          %p385 = pneg %p106
        $region62: #{weighted_common_neighbors_predictor.2} parent=51 // pred_check_branch
          %387 = sbr.rel (%p385) target = $region64
        $region63: #{weighted_common_neighbors_predictor.2} parent=51 // pred_region
          %388 = dma.done [#allocation7], 2048
        $region64: #{weighted_common_neighbors_predictor.2} parent=51 // pred_fallthru
          _
        // Predicated region
        $region65: #{weighted_common_neighbors_predictor.2} parent=51 // pred_check
          %p389 = pneg %p127
        $region66: #{weighted_common_neighbors_predictor.2} parent=51 // pred_check_branch
          %391 = sbr.rel (%p389) target = $region68
        $region67: #{weighted_common_neighbors_predictor.2} parent=51 // pred_region
          %392 = dma.done [#allocation10], 16
        $region68: #{weighted_common_neighbors_predictor.2} parent=51 // pred_fallthru
          _
        // Predicated region
        $region69: #{weighted_common_neighbors_predictor.2} parent=51 // pred_check
          %p393 = pneg %p148
        $region70: #{weighted_common_neighbors_predictor.2} parent=51 // pred_check_branch
          %395 = sbr.rel (%p393) target = $region72
        $region71: #{weighted_common_neighbors_predictor.2} parent=51 // pred_region
          %396 = dma.done [#allocation10], 2048
        $region72: #{weighted_common_neighbors_predictor.2} parent=51 // pred_fallthru
          _
        // Predicated region
        $region73: #{weighted_common_neighbors_predictor.2} parent=51 // pred_check
          %p397 = pneg %p169
        $region74: #{weighted_common_neighbors_predictor.2} parent=51 // pred_check_branch
          %399 = sbr.rel (%p397) target = $region76
        $region75: #{weighted_common_neighbors_predictor.2} parent=51 // pred_region
          %400 = dma.done [#allocation13], 16
        $region76: #{weighted_common_neighbors_predictor.2} parent=51 // pred_fallthru
          _
        // Predicated region
        $region77: #{weighted_common_neighbors_predictor.2} parent=51 // pred_check
          %p401 = pneg %p190
        $region78: #{weighted_common_neighbors_predictor.2} parent=51 // pred_check_branch
          %403 = sbr.rel (%p401) target = $region80
        $region79: #{weighted_common_neighbors_predictor.2} parent=51 // pred_region
          %404 = dma.done [#allocation13], 2048
        $region80: #{weighted_common_neighbors_predictor.2} parent=51 // pred_fallthru
          _
        // Predicated region
        $region81: #{weighted_common_neighbors_predictor.2} parent=51 // pred_check
          %p405 = pneg %p211
        $region82: #{weighted_common_neighbors_predictor.2} parent=51 // pred_check_branch
          %407 = sbr.rel (%p405) target = $region84
        $region83: #{weighted_common_neighbors_predictor.2} parent=51 // pred_region
          %408 = dma.done [#allocation16], 16
        $region84: #{weighted_common_neighbors_predictor.2} parent=51 // pred_fallthru
          _
        %s409 = sand.u32 %s51, 1
        %s410 = scalar_lea.sflag [#allocation4], %s409
        %s411 = sand.u32 %s51, 1
        %s412 = smul.addr %s411, 256
        %s413 = scalar_lea.vmem [#allocation3], %s412
        %p414 = pneg %p64
        %p415 = pneg %p61
        %p416 = pneg %p85
        %p417 = pneg %p82
        %p418 = pneg %p106
        %p419 = pneg %p103
        %p420 = pneg %p127
        %p421 = pneg %p124
        %p422 = pneg %p148
        %p423 = pneg %p145
        %p424 = pneg %p169
        %p425 = pneg %p166
        %p426 = pneg %p190
        %p427 = pneg %p187
        %p428 = pneg %p211
        %p429 = pneg %p208
        %p430 = pneg %p237
        %p431 = pneg %p234
        %s432 = sand.u32 %s224, 1
        %s433 = scalar_lea.sflag [#allocation5], %s432
        %s434 = sand.u32 %s224, 1
        %s435 = smul.addr %s434, 128
        %s436 = scalar_lea.vmem [#allocation17], %s435
        %s437 = smul.u32 8, %s33
        %s438 = smul.u32 4, %s34
        %s439 = smul.u32 32, %s33
        %p441 = scmp.eq.s32.totalorder %s34, 0
        // Predicated region
        $region85: #{weighted_common_neighbors_predictor.2} parent=51 // pred_check
          %p442 = pneg %p441
        $region86: #{weighted_common_neighbors_predictor.2} parent=51 // pred_check_branch
          %444 = sbr.rel (%p442) target = $region88
        $region87: #{weighted_common_neighbors_predictor.2} parent=51 // pred_region
          %445 = vst [vmem:[#allocation2] sm:$0xff] 0.0
          %446 = vst [vmem:[#allocation2 + $0x8] sm:$0xff] 0.0
          %447 = vst [vmem:[#allocation2 + $0x10] sm:$0xff] 0.0
          %448 = vst [vmem:[#allocation2 + $0x18] sm:$0xff] 0.0
          %449 = vst [vmem:[#allocation2 + $0x20] sm:$0xff] 0.0
          %450 = vst [vmem:[#allocation2 + $0x28] sm:$0xff] 0.0
          %451 = vst [vmem:[#allocation2 + $0x30] sm:$0xff] 0.0
          %452 = vst [vmem:[#allocation2 + $0x38] sm:$0xff] 0.0
          %453 = vst [vmem:[#allocation2 + $0x40] sm:$0xff] 0.0
          %454 = vst [vmem:[#allocation2 + $0x48] sm:$0xff] 0.0
          %455 = vst [vmem:[#allocation2 + $0x50] sm:$0xff] 0.0
          %456 = vst [vmem:[#allocation2 + $0x58] sm:$0xff] 0.0
          %457 = vst [vmem:[#allocation2 + $0x60] sm:$0xff] 0.0
          %458 = vst [vmem:[#allocation2 + $0x68] sm:$0xff] 0.0
          %459 = vst [vmem:[#allocation2 + $0x70] sm:$0xff] 0.0
          %460 = vst [vmem:[#allocation2 + $0x78] sm:$0xff] 0.0
          %461 = vst [vmem:[#allocation2 + $0x80] sm:$0xff] 0.0
          %462 = vst [vmem:[#allocation2 + $0x88] sm:$0xff] 0.0
          %463 = vst [vmem:[#allocation2 + $0x90] sm:$0xff] 0.0
          %464 = vst [vmem:[#allocation2 + $0x98] sm:$0xff] 0.0
          %465 = vst [vmem:[#allocation2 + $0xa0] sm:$0xff] 0.0
          %466 = vst [vmem:[#allocation2 + $0xa8] sm:$0xff] 0.0
          %467 = vst [vmem:[#allocation2 + $0xb0] sm:$0xff] 0.0
          %468 = vst [vmem:[#allocation2 + $0xb8] sm:$0xff] 0.0
          %469 = vst [vmem:[#allocation2 + $0xc0] sm:$0xff] 0.0
          %470 = vst [vmem:[#allocation2 + $0xc8] sm:$0xff] 0.0
          %471 = vst [vmem:[#allocation2 + $0xd0] sm:$0xff] 0.0
          %472 = vst [vmem:[#allocation2 + $0xd8] sm:$0xff] 0.0
          %473 = vst [vmem:[#allocation2 + $0xe0] sm:$0xff] 0.0
          %474 = vst [vmem:[#allocation2 + $0xe8] sm:$0xff] 0.0
          %475 = vst [vmem:[#allocation2 + $0xf0] sm:$0xff] 0.0
          %476 = vst [vmem:[#allocation2 + $0xf8] sm:$0xff] 0.0
        $region88: #{weighted_common_neighbors_predictor.2} parent=51 // pred_fallthru
          _
        %v477 = vld [vmem:[%s376] sm:$0xff]
        %v478 = vld [vmem:[%s376 + $0x8] sm:$0xff]
        %v479 = vld [vmem:[%s376 + $0x10] sm:$0xff]
        %v480 = vld [vmem:[%s376 + $0x18] sm:$0xff]
        %v481 = vld [vmem:[%s376 + $0x20] sm:$0xff]
        %v482 = vld [vmem:[%s376 + $0x28] sm:$0xff]
        %v483 = vld [vmem:[%s376 + $0x30] sm:$0xff]
        %v484 = vld [vmem:[%s376 + $0x38] sm:$0xff]
        %v485 = vld [vmem:[%s376 + $0x40] sm:$0xff]
        %v486 = vld [vmem:[%s376 + $0x48] sm:$0xff]
        %v487 = vld [vmem:[%s376 + $0x50] sm:$0xff]
        %v488 = vld [vmem:[%s376 + $0x58] sm:$0xff]
        %v489 = vld [vmem:[%s376 + $0x60] sm:$0xff]
        %v490 = vld [vmem:[%s376 + $0x68] sm:$0xff]
        %v491 = vld [vmem:[%s376 + $0x70] sm:$0xff]
        %v492 = vld [vmem:[%s376 + $0x78] sm:$0xff]
        %v493 = vld [vmem:[%s376 + $0x80] sm:$0xff]
        %v494 = vld [vmem:[%s376 + $0x88] sm:$0xff]
        %v495 = vld [vmem:[%s376 + $0x90] sm:$0xff]
        %v496 = vld [vmem:[%s376 + $0x98] sm:$0xff]
        %v497 = vld [vmem:[%s376 + $0xa0] sm:$0xff]
        %v498 = vld [vmem:[%s376 + $0xa8] sm:$0xff]
        %v499 = vld [vmem:[%s376 + $0xb0] sm:$0xff]
        %v500 = vld [vmem:[%s376 + $0xb8] sm:$0xff]
        %v501 = vld [vmem:[%s376 + $0xc0] sm:$0xff]
        %v502 = vld [vmem:[%s376 + $0xc8] sm:$0xff]
        %v503 = vld [vmem:[%s376 + $0xd0] sm:$0xff]
        %v504 = vld [vmem:[%s376 + $0xd8] sm:$0xff]
        %v505 = vld [vmem:[%s376 + $0xe0] sm:$0xff]
        %v506 = vld [vmem:[%s376 + $0xe8] sm:$0xff]
        %v507 = vld [vmem:[%s376 + $0xf0] sm:$0xff]
        %v508 = vld [vmem:[%s376 + $0xf8] sm:$0xff]
        %v509 = vunpack.c.l.s8.bf16 %v477
        %v510 = vunpack.c.l.s8.bf16 %v478
        %v511 = vunpack.c.l.s8.bf16 %v479
        %v512 = vunpack.c.l.s8.bf16 %v480
        %v513 = vunpack.c.h.s8.bf16 %v477
        %v514 = vunpack.c.h.s8.bf16 %v478
        %v515 = vunpack.c.h.s8.bf16 %v479
        %v516 = vunpack.c.h.s8.bf16 %v480
        %v517 = vunpack.c.l.s8.bf16 %v481
        %v518 = vunpack.c.l.s8.bf16 %v482
        %v519 = vunpack.c.l.s8.bf16 %v483
        %v520 = vunpack.c.l.s8.bf16 %v484
        %v521 = vunpack.c.h.s8.bf16 %v481
        %v522 = vunpack.c.h.s8.bf16 %v482
        %v523 = vunpack.c.h.s8.bf16 %v483
        %v524 = vunpack.c.h.s8.bf16 %v484
        %v525 = vunpack.c.l.s8.bf16 %v485
        %v526 = vunpack.c.l.s8.bf16 %v486
        %v527 = vunpack.c.l.s8.bf16 %v487
        %v528 = vunpack.c.l.s8.bf16 %v488
        %v529 = vunpack.c.h.s8.bf16 %v485
        %v530 = vunpack.c.h.s8.bf16 %v486
        %v531 = vunpack.c.h.s8.bf16 %v487
        %v532 = vunpack.c.h.s8.bf16 %v488
        %v533 = vunpack.c.l.s8.bf16 %v489
        %v534 = vunpack.c.l.s8.bf16 %v490
        %v535 = vunpack.c.l.s8.bf16 %v491
        %v536 = vunpack.c.l.s8.bf16 %v492
        %v537 = vunpack.c.h.s8.bf16 %v489
        %v538 = vunpack.c.h.s8.bf16 %v490
        %v539 = vunpack.c.h.s8.bf16 %v491
        %v540 = vunpack.c.h.s8.bf16 %v492
        %v541 = vunpack.c.l.s8.bf16 %v493
        %v542 = vunpack.c.l.s8.bf16 %v494
        %v543 = vunpack.c.l.s8.bf16 %v495
        %v544 = vunpack.c.l.s8.bf16 %v496
        %v545 = vunpack.c.h.s8.bf16 %v493
        %v546 = vunpack.c.h.s8.bf16 %v494
        %v547 = vunpack.c.h.s8.bf16 %v495
        %v548 = vunpack.c.h.s8.bf16 %v496
        %v549 = vunpack.c.l.s8.bf16 %v497
        %v550 = vunpack.c.l.s8.bf16 %v498
        %v551 = vunpack.c.l.s8.bf16 %v499
        %v552 = vunpack.c.l.s8.bf16 %v500
        %v553 = vunpack.c.h.s8.bf16 %v497
        %v554 = vunpack.c.h.s8.bf16 %v498
        %v555 = vunpack.c.h.s8.bf16 %v499
        %v556 = vunpack.c.h.s8.bf16 %v500
        %v557 = vunpack.c.l.s8.bf16 %v501
        %v558 = vunpack.c.l.s8.bf16 %v502
        %v559 = vunpack.c.l.s8.bf16 %v503
        %v560 = vunpack.c.l.s8.bf16 %v504
        %v561 = vunpack.c.h.s8.bf16 %v501
        %v562 = vunpack.c.h.s8.bf16 %v502
        %v563 = vunpack.c.h.s8.bf16 %v503
        %v564 = vunpack.c.h.s8.bf16 %v504
        %v565 = vunpack.c.l.s8.bf16 %v505
        %v566 = vunpack.c.l.s8.bf16 %v506
        %v567 = vunpack.c.l.s8.bf16 %v507
        %v568 = vunpack.c.l.s8.bf16 %v508
        %v569 = vunpack.c.h.s8.bf16 %v505
        %v570 = vunpack.c.h.s8.bf16 %v506
        %v571 = vunpack.c.h.s8.bf16 %v507
        %v572 = vunpack.c.h.s8.bf16 %v508
        %s573 = smul.u32 %s34, 512
        %s574 = scalar_lea.vmem [#allocation6], %s573
        %v575 = vld [vmem:[%s574] sm:$0xff]
        %v576 = vld [vmem:[%s574 + $0x8] sm:$0xff]
        %v577 = vld [vmem:[%s574 + $0x10] sm:$0xff]
        %v578 = vld [vmem:[%s574 + $0x18] sm:$0xff]
        %v579 = vld [vmem:[%s574 + $0x20] sm:$0xff]
        %v580 = vld [vmem:[%s574 + $0x28] sm:$0xff]
        %v581 = vld [vmem:[%s574 + $0x30] sm:$0xff]
        %v582 = vld [vmem:[%s574 + $0x38] sm:$0xff]
        %v583 = vld [vmem:[%s574 + $0x40] sm:$0xff]
        %v584 = vld [vmem:[%s574 + $0x48] sm:$0xff]
        %v585 = vld [vmem:[%s574 + $0x50] sm:$0xff]
        %v586 = vld [vmem:[%s574 + $0x58] sm:$0xff]
        %v587 = vld [vmem:[%s574 + $0x60] sm:$0xff]
        %v588 = vld [vmem:[%s574 + $0x68] sm:$0xff]
        %v589 = vld [vmem:[%s574 + $0x70] sm:$0xff]
        %v590 = vld [vmem:[%s574 + $0x78] sm:$0xff]
        %v591 = vld [vmem:[%s574 + $0x80] sm:$0xff]
        %v592 = vld [vmem:[%s574 + $0x88] sm:$0xff]
        %v593 = vld [vmem:[%s574 + $0x90] sm:$0xff]
        %v594 = vld [vmem:[%s574 + $0x98] sm:$0xff]
        %v595 = vld [vmem:[%s574 + $0xa0] sm:$0xff]
        %v596 = vld [vmem:[%s574 + $0xa8] sm:$0xff]
        %v597 = vld [vmem:[%s574 + $0xb0] sm:$0xff]
        %v598 = vld [vmem:[%s574 + $0xb8] sm:$0xff]
        %v599 = vld [vmem:[%s574 + $0xc0] sm:$0xff]
        %v600 = vld [vmem:[%s574 + $0xc8] sm:$0xff]
        %v601 = vld [vmem:[%s574 + $0xd0] sm:$0xff]
        %v602 = vld [vmem:[%s574 + $0xd8] sm:$0xff]
        %v603 = vld [vmem:[%s574 + $0xe0] sm:$0xff]
        %v604 = vld [vmem:[%s574 + $0xe8] sm:$0xff]
        %v605 = vld [vmem:[%s574 + $0xf0] sm:$0xff]
        %v606 = vld [vmem:[%s574 + $0xf8] sm:$0xff]
        %v607 = vld [vmem:[%s574 + $0x100] sm:$0xff]
        %v608 = vld [vmem:[%s574 + $0x108] sm:$0xff]
        %v609 = vld [vmem:[%s574 + $0x110] sm:$0xff]
        %v610 = vld [vmem:[%s574 + $0x118] sm:$0xff]
        %v611 = vld [vmem:[%s574 + $0x120] sm:$0xff]
        %v612 = vld [vmem:[%s574 + $0x128] sm:$0xff]
        %v613 = vld [vmem:[%s574 + $0x130] sm:$0xff]
        %v614 = vld [vmem:[%s574 + $0x138] sm:$0xff]
        %v615 = vld [vmem:[%s574 + $0x140] sm:$0xff]
        %v616 = vld [vmem:[%s574 + $0x148] sm:$0xff]
        %v617 = vld [vmem:[%s574 + $0x150] sm:$0xff]
        %v618 = vld [vmem:[%s574 + $0x158] sm:$0xff]
        %v619 = vld [vmem:[%s574 + $0x160] sm:$0xff]
        %v620 = vld [vmem:[%s574 + $0x168] sm:$0xff]
        %v621 = vld [vmem:[%s574 + $0x170] sm:$0xff]
        %v622 = vld [vmem:[%s574 + $0x178] sm:$0xff]
        %v623 = vld [vmem:[%s574 + $0x180] sm:$0xff]
        %v624 = vld [vmem:[%s574 + $0x188] sm:$0xff]
        %v625 = vld [vmem:[%s574 + $0x190] sm:$0xff]
        %v626 = vld [vmem:[%s574 + $0x198] sm:$0xff]
        %v627 = vld [vmem:[%s574 + $0x1a0] sm:$0xff]
        %v628 = vld [vmem:[%s574 + $0x1a8] sm:$0xff]
        %v629 = vld [vmem:[%s574 + $0x1b0] sm:$0xff]
        %v630 = vld [vmem:[%s574 + $0x1b8] sm:$0xff]
        %v631 = vld [vmem:[%s574 + $0x1c0] sm:$0xff]
        %v632 = vld [vmem:[%s574 + $0x1c8] sm:$0xff]
        %v633 = vld [vmem:[%s574 + $0x1d0] sm:$0xff]
        %v634 = vld [vmem:[%s574 + $0x1d8] sm:$0xff]
        %v635 = vld [vmem:[%s574 + $0x1e0] sm:$0xff]
        %v636 = vld [vmem:[%s574 + $0x1e8] sm:$0xff]
        %v637 = vld [vmem:[%s574 + $0x1f0] sm:$0xff]
        %v638 = vld [vmem:[%s574 + $0x1f8] sm:$0xff]
        %v639 = vpack.c.bf16 %v576, %v575
        %v640 = vpack.c.bf16 %v578, %v577
        %v641 = vpack.c.bf16 %v580, %v579
        %v642 = vpack.c.bf16 %v582, %v581
        %v643 = vpack.c.bf16 %v584, %v583
        %v644 = vpack.c.bf16 %v586, %v585
        %v645 = vpack.c.bf16 %v588, %v587
        %v646 = vpack.c.bf16 %v590, %v589
        %v647 = vpack.c.bf16 %v592, %v591
        %v648 = vpack.c.bf16 %v594, %v593
        %v649 = vpack.c.bf16 %v596, %v595
        %v650 = vpack.c.bf16 %v598, %v597
        %v651 = vpack.c.bf16 %v600, %v599
        %v652 = vpack.c.bf16 %v602, %v601
        %v653 = vpack.c.bf16 %v604, %v603
        %v654 = vpack.c.bf16 %v606, %v605
        %v655 = vpack.c.bf16 %v608, %v607
        %v656 = vpack.c.bf16 %v610, %v609
        %v657 = vpack.c.bf16 %v612, %v611
        %v658 = vpack.c.bf16 %v614, %v613
        %v659 = vpack.c.bf16 %v616, %v615
        %v660 = vpack.c.bf16 %v618, %v617
        %v661 = vpack.c.bf16 %v620, %v619
        %v662 = vpack.c.bf16 %v622, %v621
        %v663 = vpack.c.bf16 %v624, %v623
        %v664 = vpack.c.bf16 %v626, %v625
        %v665 = vpack.c.bf16 %v628, %v627
        %v666 = vpack.c.bf16 %v630, %v629
        %v667 = vpack.c.bf16 %v632, %v631
        %v668 = vpack.c.bf16 %v634, %v633
        %v669 = vpack.c.bf16 %v636, %v635
        %v670 = vpack.c.bf16 %v638, %v637
        %v671 = vld [vmem:[#allocation2] sm:$0xff]
        %v672 = vld [vmem:[#allocation2 + $0x8] sm:$0xff]
        %v673 = vld [vmem:[#allocation2 + $0x10] sm:$0xff]
        %v674 = vld [vmem:[#allocation2 + $0x18] sm:$0xff]
        %v675 = vld [vmem:[#allocation2 + $0x20] sm:$0xff]
        %v676 = vld [vmem:[#allocation2 + $0x28] sm:$0xff]
        %v677 = vld [vmem:[#allocation2 + $0x30] sm:$0xff]
        %v678 = vld [vmem:[#allocation2 + $0x38] sm:$0xff]
        %v679 = vld [vmem:[#allocation2 + $0x40] sm:$0xff]
        %v680 = vld [vmem:[#allocation2 + $0x48] sm:$0xff]
        %v681 = vld [vmem:[#allocation2 + $0x50] sm:$0xff]
        %v682 = vld [vmem:[#allocation2 + $0x58] sm:$0xff]
        %v683 = vld [vmem:[#allocation2 + $0x60] sm:$0xff]
        %v684 = vld [vmem:[#allocation2 + $0x68] sm:$0xff]
        %v685 = vld [vmem:[#allocation2 + $0x70] sm:$0xff]
        %v686 = vld [vmem:[#allocation2 + $0x78] sm:$0xff]
        %v687 = vld [vmem:[#allocation2 + $0x80] sm:$0xff]
        %v688 = vld [vmem:[#allocation2 + $0x88] sm:$0xff]
        %v689 = vld [vmem:[#allocation2 + $0x90] sm:$0xff]
        %v690 = vld [vmem:[#allocation2 + $0x98] sm:$0xff]
        %v691 = vld [vmem:[#allocation2 + $0xa0] sm:$0xff]
        %v692 = vld [vmem:[#allocation2 + $0xa8] sm:$0xff]
        %v693 = vld [vmem:[#allocation2 + $0xb0] sm:$0xff]
        %v694 = vld [vmem:[#allocation2 + $0xb8] sm:$0xff]
        %v695 = vld [vmem:[#allocation2 + $0xc0] sm:$0xff]
        %v696 = vld [vmem:[#allocation2 + $0xc8] sm:$0xff]
        %v697 = vld [vmem:[#allocation2 + $0xd0] sm:$0xff]
        %v698 = vld [vmem:[#allocation2 + $0xd8] sm:$0xff]
        %v699 = vld [vmem:[#allocation2 + $0xe0] sm:$0xff]
        %v700 = vld [vmem:[#allocation2 + $0xe8] sm:$0xff]
        %v701 = vld [vmem:[#allocation2 + $0xf0] sm:$0xff]
        %v702 = vld [vmem:[#allocation2 + $0xf8] sm:$0xff]
        %703 = vmatprep.subr.bf16.mxu0 0
        %704 = vmatpush1.bf16.msra.mxu0 %v639
        %705 = vmatprep.subr.bf16.mxu0 0
        %706 = vmatpush1.bf16.msra.mxu0 %v640
        %707 = vmatprep.subr.bf16.mxu0 0
        %708 = vmatpush1.bf16.msra.mxu0 %v641
        %709 = vmatprep.subr.bf16.mxu0 0
        %710 = vmatpush1.bf16.msra.mxu0 %v642
        %711 = vmatprep.subr.bf16.mxu0 0
        %712 = vmatpush1.bf16.msra.mxu0 %v643
        %713 = vmatprep.subr.bf16.mxu0 0
        %714 = vmatpush1.bf16.msra.mxu0 %v644
        %715 = vmatprep.subr.bf16.mxu0 0
        %716 = vmatpush1.bf16.msra.mxu0 %v645
        %717 = vmatprep.subr.bf16.mxu0 0
        %718 = vmatpush1.bf16.msra.mxu0 %v646
        %719 = vmatprep.subr.bf16.mxu0 0
        %720 = vmatpush1.bf16.msra.mxu0 %v647
        %721 = vmatprep.subr.bf16.mxu0 0
        %722 = vmatpush1.bf16.msra.mxu0 %v648
        %723 = vmatprep.subr.bf16.mxu0 0
        %724 = vmatpush1.bf16.msra.mxu0 %v649
        %725 = vmatprep.subr.bf16.mxu0 0
        %726 = vmatpush1.bf16.msra.mxu0 %v650
        %727 = vmatprep.subr.bf16.mxu0 0
        %728 = vmatpush1.bf16.msra.mxu0 %v651
        %729 = vmatprep.subr.bf16.mxu0 0
        %730 = vmatpush1.bf16.msra.mxu0 %v652
        %731 = vmatprep.subr.bf16.mxu0 0
        %732 = vmatpush1.bf16.msra.mxu0 %v653
        %733 = vmatprep.subr.bf16.mxu0 0
        %734 = vmatpush1.bf16.msra.mxu0 %v654
        %735 = vmatprep.mubr.bf16.mxu0 %v510
        %736 = vmatmul.mubr.bf16.gmra.mrb[0].mxu0 %v509
        %v737 = vpop.f32.mrb[0].mxu0
        %v738 = vadd.f32 0.0, %v737
        %v739 = vpop.f32.mrb[0].mxu0
        %v740 = vpop.f32.mrb[0].mxu0
        %v741 = vadd.f32 0.0, %v740
        %v742 = vpop.f32.mrb[0].mxu0
        %743 = vmatprep.mubr.bf16.mxu0 %v514
        %744 = vmatmul.mubr.bf16.gmra.mrb[0].mxu0 %v513
        %v745 = vpop.f32.mrb[0].mxu0
        %v746 = vadd.f32 0.0, %v745
        %v747 = vpop.f32.mrb[0].mxu0
        %v748 = vpop.f32.mrb[0].mxu0
        %v749 = vadd.f32 0.0, %v748
        %v750 = vpop.f32.mrb[0].mxu0
        %751 = vmatprep.mubr.bf16.mxu0 %v518
        %752 = vmatmul.mubr.bf16.gmra.mrb[0].mxu0 %v517
        %v753 = vpop.f32.mrb[0].mxu0
        %v754 = vadd.f32 0.0, %v753
        %v755 = vpop.f32.mrb[0].mxu0
        %v756 = vpop.f32.mrb[0].mxu0
        %v757 = vadd.f32 0.0, %v756
        %v758 = vpop.f32.mrb[0].mxu0
        %759 = vmatprep.mubr.bf16.mxu0 %v522
        %760 = vmatmul.mubr.bf16.gmra.mrb[0].mxu0 %v521
        %v761 = vpop.f32.mrb[0].mxu0
        %v762 = vadd.f32 0.0, %v761
        %v763 = vpop.f32.mrb[0].mxu0
        %v764 = vpop.f32.mrb[0].mxu0
        %v765 = vadd.f32 0.0, %v764
        %v766 = vpop.f32.mrb[0].mxu0
        %767 = vmatprep.mubr.bf16.mxu0 %v526
        %768 = vmatmul.mubr.bf16.gmra.mrb[0].mxu0 %v525
        %v769 = vpop.f32.mrb[0].mxu0
        %v770 = vadd.f32 0.0, %v769
        %v771 = vpop.f32.mrb[0].mxu0
        %v772 = vpop.f32.mrb[0].mxu0
        %v773 = vadd.f32 0.0, %v772
        %v774 = vpop.f32.mrb[0].mxu0
        %775 = vmatprep.mubr.bf16.mxu0 %v530
        %776 = vmatmul.mubr.bf16.gmra.mrb[0].mxu0 %v529
        %v777 = vpop.f32.mrb[0].mxu0
        %v778 = vadd.f32 0.0, %v777
        %v779 = vpop.f32.mrb[0].mxu0
        %v780 = vpop.f32.mrb[0].mxu0
        %v781 = vadd.f32 0.0, %v780
        %v782 = vpop.f32.mrb[0].mxu0
        %783 = vmatprep.mubr.bf16.mxu0 %v534
        %784 = vmatmul.mubr.bf16.gmra.mrb[0].mxu0 %v533
        %v785 = vpop.f32.mrb[0].mxu0
        %v786 = vadd.f32 0.0, %v785
        %v787 = vpop.f32.mrb[0].mxu0
        %v788 = vpop.f32.mrb[0].mxu0
        %v789 = vadd.f32 0.0, %v788
        %v790 = vpop.f32.mrb[0].mxu0
        %791 = vmatprep.mubr.bf16.mxu0 %v538
        %792 = vmatmul.mubr.bf16.gmra.mrb[0].mxu0 %v537
        %v793 = vpop.f32.mrb[0].mxu0
        %v794 = vadd.f32 0.0, %v793
        %v795 = vpop.f32.mrb[0].mxu0
        %v796 = vpop.f32.mrb[0].mxu0
        %v797 = vadd.f32 0.0, %v796
        %v798 = vpop.f32.mrb[0].mxu0
        %799 = vmatprep.mubr.bf16.mxu0 %v542
        %800 = vmatmul.mubr.bf16.gmra.mrb[0].mxu0 %v541
        %v801 = vpop.f32.mrb[0].mxu0
        %v802 = vadd.f32 0.0, %v801
        %v803 = vpop.f32.mrb[0].mxu0
        %v804 = vpop.f32.mrb[0].mxu0
        %v805 = vadd.f32 0.0, %v804
        %v806 = vpop.f32.mrb[0].mxu0
        %807 = vmatprep.mubr.bf16.mxu0 %v546
        %808 = vmatmul.mubr.bf16.gmra.mrb[0].mxu0 %v545
        %v809 = vpop.f32.mrb[0].mxu0
        %v810 = vadd.f32 0.0, %v809
        %v811 = vpop.f32.mrb[0].mxu0
        %v812 = vpop.f32.mrb[0].mxu0
        %v813 = vadd.f32 0.0, %v812
        %v814 = vpop.f32.mrb[0].mxu0
        %815 = vmatprep.mubr.bf16.mxu0 %v550
        %816 = vmatmul.mubr.bf16.gmra.mrb[0].mxu0 %v549
        %v817 = vpop.f32.mrb[0].mxu0
        %v818 = vadd.f32 0.0, %v817
        %v819 = vpop.f32.mrb[0].mxu0
        %v820 = vpop.f32.mrb[0].mxu0
        %v821 = vadd.f32 0.0, %v820
        %v822 = vpop.f32.mrb[0].mxu0
        %823 = vmatprep.mubr.bf16.mxu0 %v554
        %824 = vmatmul.mubr.bf16.gmra.mrb[0].mxu0 %v553
        %v825 = vpop.f32.mrb[0].mxu0
        %v826 = vadd.f32 0.0, %v825
        %v827 = vpop.f32.mrb[0].mxu0
        %v828 = vpop.f32.mrb[0].mxu0
        %v829 = vadd.f32 0.0, %v828
        %v830 = vpop.f32.mrb[0].mxu0
        %831 = vmatprep.mubr.bf16.mxu0 %v558
        %832 = vmatmul.mubr.bf16.gmra.mrb[0].mxu0 %v557
        %v833 = vpop.f32.mrb[0].mxu0
        %v834 = vadd.f32 0.0, %v833
        %v835 = vpop.f32.mrb[0].mxu0
        %v836 = vpop.f32.mrb[0].mxu0
        %v837 = vadd.f32 0.0, %v836
        %v838 = vpop.f32.mrb[0].mxu0
        %839 = vmatprep.mubr.bf16.mxu0 %v562
        %840 = vmatmul.mubr.bf16.gmra.mrb[0].mxu0 %v561
        %v841 = vpop.f32.mrb[0].mxu0
        %v842 = vadd.f32 0.0, %v841
        %v843 = vpop.f32.mrb[0].mxu0
        %v844 = vpop.f32.mrb[0].mxu0
        %v845 = vadd.f32 0.0, %v844
        %v846 = vpop.f32.mrb[0].mxu0
        %847 = vmatprep.mubr.bf16.mxu0 %v566
        %848 = vmatmul.mubr.bf16.gmra.mrb[0].mxu0 %v565
        %v849 = vpop.f32.mrb[0].mxu0
        %v850 = vadd.f32 0.0, %v849
        %v851 = vpop.f32.mrb[0].mxu0
        %v852 = vpop.f32.mrb[0].mxu0
        %v853 = vadd.f32 0.0, %v852
        %v854 = vpop.f32.mrb[0].mxu0
        %855 = vmatprep.mubr.bf16.mxu0 %v570
        %856 = vmatmul.mubr.bf16.gmra.mrb[0].mxu0 %v569
        %v857 = vpop.f32.mrb[0].mxu0
        %v858 = vadd.f32 0.0, %v857
        %v859 = vpop.f32.mrb[0].mxu0
        %v860 = vpop.f32.mrb[0].mxu0
        %v861 = vadd.f32 0.0, %v860
        %v862 = vpop.f32.mrb[0].mxu0
        %863 = vdwg.mxu0
        %864 = vmatprep.subr.bf16.mxu0 0
        %865 = vmatpush1.bf16.msra.mxu0 %v655
        %866 = vmatprep.subr.bf16.mxu0 0
        %867 = vmatpush1.bf16.msra.mxu0 %v656
        %868 = vmatprep.subr.bf16.mxu0 0
        %869 = vmatpush1.bf16.msra.mxu0 %v657
        %870 = vmatprep.subr.bf16.mxu0 0
        %871 = vmatpush1.bf16.msra.mxu0 %v658
        %872 = vmatprep.subr.bf16.mxu0 0
        %873 = vmatpush1.bf16.msra.mxu0 %v659
        %874 = vmatprep.subr.bf16.mxu0 0
        %875 = vmatpush1.bf16.msra.mxu0 %v660
        %876 = vmatprep.subr.bf16.mxu0 0
        %877 = vmatpush1.bf16.msra.mxu0 %v661
        %878 = vmatprep.subr.bf16.mxu0 0
        %879 = vmatpush1.bf16.msra.mxu0 %v662
        %880 = vmatprep.subr.bf16.mxu0 0
        %881 = vmatpush1.bf16.msra.mxu0 %v663
        %882 = vmatprep.subr.bf16.mxu0 0
        %883 = vmatpush1.bf16.msra.mxu0 %v664
        %884 = vmatprep.subr.bf16.mxu0 0
        %885 = vmatpush1.bf16.msra.mxu0 %v665
        %886 = vmatprep.subr.bf16.mxu0 0
        %887 = vmatpush1.bf16.msra.mxu0 %v666
        %888 = vmatprep.subr.bf16.mxu0 0
        %889 = vmatpush1.bf16.msra.mxu0 %v667
        %890 = vmatprep.subr.bf16.mxu0 0
        %891 = vmatpush1.bf16.msra.mxu0 %v668
        %892 = vmatprep.subr.bf16.mxu0 0
        %893 = vmatpush1.bf16.msra.mxu0 %v669
        %894 = vmatprep.subr.bf16.mxu0 0
        %895 = vmatpush1.bf16.msra.mxu0 %v670
        %896 = vmatprep.mubr.bf16.mxu0 %v512
        %897 = vmatmul.mubr.bf16.gmra.mrb[0].mxu0 %v511
        %v898 = vpop.f32.mrb[0].mxu0
        %v899 = vadd.f32 %v738, %v898
        %v900 = vpop.f32.mrb[0].mxu0
        %v901 = vpop.f32.mrb[0].mxu0
        %v902 = vadd.f32 %v741, %v901
        %v903 = vpop.f32.mrb[0].mxu0
        %904 = vmatprep.mubr.bf16.mxu0 %v516
        %905 = vmatmul.mubr.bf16.gmra.mrb[0].mxu0 %v515
        %v906 = vpop.f32.mrb[0].mxu0
        %v907 = vadd.f32 %v746, %v906
        %v908 = vpop.f32.mrb[0].mxu0
        %v909 = vpop.f32.mrb[0].mxu0
        %v910 = vadd.f32 %v749, %v909
        %v911 = vpop.f32.mrb[0].mxu0
        %912 = vmatprep.mubr.bf16.mxu0 %v520
        %913 = vmatmul.mubr.bf16.gmra.mrb[0].mxu0 %v519
        %v914 = vpop.f32.mrb[0].mxu0
        %v915 = vadd.f32 %v754, %v914
        %v916 = vpop.f32.mrb[0].mxu0
        %v917 = vpop.f32.mrb[0].mxu0
        %v918 = vadd.f32 %v757, %v917
        %v919 = vpop.f32.mrb[0].mxu0
        %920 = vmatprep.mubr.bf16.mxu0 %v524
        %921 = vmatmul.mubr.bf16.gmra.mrb[0].mxu0 %v523
        %v922 = vpop.f32.mrb[0].mxu0
        %v923 = vadd.f32 %v762, %v922
        %v924 = vpop.f32.mrb[0].mxu0
        %v925 = vpop.f32.mrb[0].mxu0
        %v926 = vadd.f32 %v765, %v925
        %v927 = vpop.f32.mrb[0].mxu0
        %928 = vmatprep.mubr.bf16.mxu0 %v528
        %929 = vmatmul.mubr.bf16.gmra.mrb[0].mxu0 %v527
        %v930 = vpop.f32.mrb[0].mxu0
        %v931 = vadd.f32 %v770, %v930
        %v932 = vpop.f32.mrb[0].mxu0
        %v933 = vpop.f32.mrb[0].mxu0
        %v934 = vadd.f32 %v773, %v933
        %v935 = vpop.f32.mrb[0].mxu0
        %936 = vmatprep.mubr.bf16.mxu0 %v532
        %937 = vmatmul.mubr.bf16.gmra.mrb[0].mxu0 %v531
        %v938 = vpop.f32.mrb[0].mxu0
        %v939 = vadd.f32 %v778, %v938
        %v940 = vpop.f32.mrb[0].mxu0
        %v941 = vpop.f32.mrb[0].mxu0
        %v942 = vadd.f32 %v781, %v941
        %v943 = vpop.f32.mrb[0].mxu0
        %944 = vmatprep.mubr.bf16.mxu0 %v536
        %945 = vmatmul.mubr.bf16.gmra.mrb[0].mxu0 %v535
        %v946 = vpop.f32.mrb[0].mxu0
        %v947 = vadd.f32 %v786, %v946
        %v948 = vpop.f32.mrb[0].mxu0
        %v949 = vpop.f32.mrb[0].mxu0
        %v950 = vadd.f32 %v789, %v949
        %v951 = vpop.f32.mrb[0].mxu0
        %952 = vmatprep.mubr.bf16.mxu0 %v540
        %953 = vmatmul.mubr.bf16.gmra.mrb[0].mxu0 %v539
        %v954 = vpop.f32.mrb[0].mxu0
        %v955 = vadd.f32 %v794, %v954
        %v956 = vpop.f32.mrb[0].mxu0
        %v957 = vpop.f32.mrb[0].mxu0
        %v958 = vadd.f32 %v797, %v957
        %v959 = vpop.f32.mrb[0].mxu0
        %960 = vmatprep.mubr.bf16.mxu0 %v544
        %961 = vmatmul.mubr.bf16.gmra.mrb[0].mxu0 %v543
        %v962 = vpop.f32.mrb[0].mxu0
        %v963 = vadd.f32 %v802, %v962
        %v964 = vpop.f32.mrb[0].mxu0
        %v965 = vpop.f32.mrb[0].mxu0
        %v966 = vadd.f32 %v805, %v965
        %v967 = vpop.f32.mrb[0].mxu0
        %968 = vmatprep.mubr.bf16.mxu0 %v548
        %969 = vmatmul.mubr.bf16.gmra.mrb[0].mxu0 %v547
        %v970 = vpop.f32.mrb[0].mxu0
        %v971 = vadd.f32 %v810, %v970
        %v972 = vpop.f32.mrb[0].mxu0
        %v973 = vpop.f32.mrb[0].mxu0
        %v974 = vadd.f32 %v813, %v973
        %v975 = vpop.f32.mrb[0].mxu0
        %976 = vmatprep.mubr.bf16.mxu0 %v552
        %977 = vmatmul.mubr.bf16.gmra.mrb[0].mxu0 %v551
        %v978 = vpop.f32.mrb[0].mxu0
        %v979 = vadd.f32 %v818, %v978
        %v980 = vpop.f32.mrb[0].mxu0
        %v981 = vpop.f32.mrb[0].mxu0
        %v982 = vadd.f32 %v821, %v981
        %v983 = vpop.f32.mrb[0].mxu0
        %984 = vmatprep.mubr.bf16.mxu0 %v556
        %985 = vmatmul.mubr.bf16.gmra.mrb[0].mxu0 %v555
        %v986 = vpop.f32.mrb[0].mxu0
        %v987 = vadd.f32 %v826, %v986
        %v988 = vpop.f32.mrb[0].mxu0
        %v989 = vpop.f32.mrb[0].mxu0
        %v990 = vadd.f32 %v829, %v989
        %v991 = vpop.f32.mrb[0].mxu0
        %992 = vmatprep.mubr.bf16.mxu0 %v560
        %993 = vmatmul.mubr.bf16.gmra.mrb[0].mxu0 %v559
        %v994 = vpop.f32.mrb[0].mxu0
        %v995 = vadd.f32 %v834, %v994
        %v996 = vpop.f32.mrb[0].mxu0
        %v997 = vpop.f32.mrb[0].mxu0
        %v998 = vadd.f32 %v837, %v997
        %v999 = vpop.f32.mrb[0].mxu0
        %1000 = vmatprep.mubr.bf16.mxu0 %v564
        %1001 = vmatmul.mubr.bf16.gmra.mrb[0].mxu0 %v563
        %v1002 = vpop.f32.mrb[0].mxu0
        %v1003 = vadd.f32 %v842, %v1002
        %v1004 = vpop.f32.mrb[0].mxu0
        %v1005 = vpop.f32.mrb[0].mxu0
        %v1006 = vadd.f32 %v845, %v1005
        %v1007 = vpop.f32.mrb[0].mxu0
        %1008 = vmatprep.mubr.bf16.mxu0 %v568
        %1009 = vmatmul.mubr.bf16.gmra.mrb[0].mxu0 %v567
        %v1010 = vpop.f32.mrb[0].mxu0
        %v1011 = vadd.f32 %v850, %v1010
        %v1012 = vpop.f32.mrb[0].mxu0
        %v1013 = vpop.f32.mrb[0].mxu0
        %v1014 = vadd.f32 %v853, %v1013
        %v1015 = vpop.f32.mrb[0].mxu0
        %1016 = vmatprep.mubr.bf16.mxu0 %v572
        %1017 = vmatmul.mubr.bf16.gmra.mrb[0].mxu0 %v571
        %v1018 = vpop.f32.mrb[0].mxu0
        %v1019 = vadd.f32 %v858, %v1018
        %v1020 = vpop.f32.mrb[0].mxu0
        %v1021 = vpop.f32.mrb[0].mxu0
        %v1022 = vadd.f32 %v861, %v1021
        %v1023 = vpop.f32.mrb[0].mxu0
        %1024 = vdwg.mxu0
        %v1025 = vadd.f32 %v671, %v899
        %v1026 = vadd.f32 %v672, %v902
        %v1027 = vadd.f32 %v673, %v907
        %v1028 = vadd.f32 %v674, %v910
        %v1029 = vadd.f32 %v675, %v915
        %v1030 = vadd.f32 %v676, %v918
        %v1031 = vadd.f32 %v677, %v923
        %v1032 = vadd.f32 %v678, %v926
        %v1033 = vadd.f32 %v679, %v931
        %v1034 = vadd.f32 %v680, %v934
        %v1035 = vadd.f32 %v681, %v939
        %v1036 = vadd.f32 %v682, %v942
        %v1037 = vadd.f32 %v683, %v947
        %v1038 = vadd.f32 %v684, %v950
        %v1039 = vadd.f32 %v685, %v955
        %v1040 = vadd.f32 %v686, %v958
        %v1041 = vadd.f32 %v687, %v963
        %v1042 = vadd.f32 %v688, %v966
        %v1043 = vadd.f32 %v689, %v971
        %v1044 = vadd.f32 %v690, %v974
        %v1045 = vadd.f32 %v691, %v979
        %v1046 = vadd.f32 %v692, %v982
        %v1047 = vadd.f32 %v693, %v987
        %v1048 = vadd.f32 %v694, %v990
        %v1049 = vadd.f32 %v695, %v995
        %v1050 = vadd.f32 %v696, %v998
        %v1051 = vadd.f32 %v697, %v1003
        %v1052 = vadd.f32 %v698, %v1006
        %v1053 = vadd.f32 %v699, %v1011
        %v1054 = vadd.f32 %v700, %v1014
        %v1055 = vadd.f32 %v701, %v1019
        %v1056 = vadd.f32 %v702, %v1022
        %1057 = vst [vmem:[#allocation2] sm:$0xff] %v1025
        %1058 = vst [vmem:[#allocation2 + $0x8] sm:$0xff] %v1026
        %1059 = vst [vmem:[#allocation2 + $0x10] sm:$0xff] %v1027
        %1060 = vst [vmem:[#allocation2 + $0x18] sm:$0xff] %v1028
        %1061 = vst [vmem:[#allocation2 + $0x20] sm:$0xff] %v1029
        %1062 = vst [vmem:[#allocation2 + $0x28] sm:$0xff] %v1030
        %1063 = vst [vmem:[#allocation2 + $0x30] sm:$0xff] %v1031
        %1064 = vst [vmem:[#allocation2 + $0x38] sm:$0xff] %v1032
        %1065 = vst [vmem:[#allocation2 + $0x40] sm:$0xff] %v1033
        %1066 = vst [vmem:[#allocation2 + $0x48] sm:$0xff] %v1034
        %1067 = vst [vmem:[#allocation2 + $0x50] sm:$0xff] %v1035
        %1068 = vst [vmem:[#allocation2 + $0x58] sm:$0xff] %v1036
        %1069 = vst [vmem:[#allocation2 + $0x60] sm:$0xff] %v1037
        %1070 = vst [vmem:[#allocation2 + $0x68] sm:$0xff] %v1038
        %1071 = vst [vmem:[#allocation2 + $0x70] sm:$0xff] %v1039
        %1072 = vst [vmem:[#allocation2 + $0x78] sm:$0xff] %v1040
        %1073 = vst [vmem:[#allocation2 + $0x80] sm:$0xff] %v1041
        %1074 = vst [vmem:[#allocation2 + $0x88] sm:$0xff] %v1042
        %1075 = vst [vmem:[#allocation2 + $0x90] sm:$0xff] %v1043
        %1076 = vst [vmem:[#allocation2 + $0x98] sm:$0xff] %v1044
        %1077 = vst [vmem:[#allocation2 + $0xa0] sm:$0xff] %v1045
        %1078 = vst [vmem:[#allocation2 + $0xa8] sm:$0xff] %v1046
        %1079 = vst [vmem:[#allocation2 + $0xb0] sm:$0xff] %v1047
        %1080 = vst [vmem:[#allocation2 + $0xb8] sm:$0xff] %v1048
        %1081 = vst [vmem:[#allocation2 + $0xc0] sm:$0xff] %v1049
        %1082 = vst [vmem:[#allocation2 + $0xc8] sm:$0xff] %v1050
        %1083 = vst [vmem:[#allocation2 + $0xd0] sm:$0xff] %v1051
        %1084 = vst [vmem:[#allocation2 + $0xd8] sm:$0xff] %v1052
        %1085 = vst [vmem:[#allocation2 + $0xe0] sm:$0xff] %v1053
        %1086 = vst [vmem:[#allocation2 + $0xe8] sm:$0xff] %v1054
        %1087 = vst [vmem:[#allocation2 + $0xf0] sm:$0xff] %v1055
        %1088 = vst [vmem:[#allocation2 + $0xf8] sm:$0xff] %v1056
        // Predicated region
        $region89: #{weighted_common_neighbors_predictor.2} parent=51 // pred_check
          %p1089 = pneg %p441
        $region90: #{weighted_common_neighbors_predictor.2} parent=51 // pred_check_branch
          %1091 = sbr.rel (%p1089) target = $region92
        $region91: #{weighted_common_neighbors_predictor.2} parent=51 // pred_region
          %s1092 = smul.u32 %s33, 256
          %v1093 = vld [vmem:[#allocation2] sm:$0xff]
          %v1094 = vld [vmem:[#allocation2 + $0x8] sm:$0xff]
          %v1095 = vld [vmem:[#allocation2 + $0x10] sm:$0xff]
          %v1096 = vld [vmem:[#allocation2 + $0x18] sm:$0xff]
          %v1097 = vld [vmem:[#allocation2 + $0x20] sm:$0xff]
          %v1098 = vld [vmem:[#allocation2 + $0x28] sm:$0xff]
          %v1099 = vld [vmem:[#allocation2 + $0x30] sm:$0xff]
          %v1100 = vld [vmem:[#allocation2 + $0x38] sm:$0xff]
          %v1101 = vld [vmem:[#allocation2 + $0x40] sm:$0xff]
          %v1102 = vld [vmem:[#allocation2 + $0x48] sm:$0xff]
          %v1103 = vld [vmem:[#allocation2 + $0x50] sm:$0xff]
          %v1104 = vld [vmem:[#allocation2 + $0x58] sm:$0xff]
          %v1105 = vld [vmem:[#allocation2 + $0x60] sm:$0xff]
          %v1106 = vld [vmem:[#allocation2 + $0x68] sm:$0xff]
          %v1107 = vld [vmem:[#allocation2 + $0x70] sm:$0xff]
          %v1108 = vld [vmem:[#allocation2 + $0x78] sm:$0xff]
          %v1109 = vld [vmem:[#allocation2 + $0x80] sm:$0xff]
          %v1110 = vld [vmem:[#allocation2 + $0x88] sm:$0xff]
          %v1111 = vld [vmem:[#allocation2 + $0x90] sm:$0xff]
          %v1112 = vld [vmem:[#allocation2 + $0x98] sm:$0xff]
          %v1113 = vld [vmem:[#allocation2 + $0xa0] sm:$0xff]
          %v1114 = vld [vmem:[#allocation2 + $0xa8] sm:$0xff]
          %v1115 = vld [vmem:[#allocation2 + $0xb0] sm:$0xff]
          %v1116 = vld [vmem:[#allocation2 + $0xb8] sm:$0xff]
          %v1117 = vld [vmem:[#allocation2 + $0xc0] sm:$0xff]
          %v1118 = vld [vmem:[#allocation2 + $0xc8] sm:$0xff]
          %v1119 = vld [vmem:[#allocation2 + $0xd0] sm:$0xff]
          %v1120 = vld [vmem:[#allocation2 + $0xd8] sm:$0xff]
          %v1121 = vld [vmem:[#allocation2 + $0xe0] sm:$0xff]
          %v1122 = vld [vmem:[#allocation2 + $0xe8] sm:$0xff]
          %v1123 = vld [vmem:[#allocation2 + $0xf0] sm:$0xff]
          %v1124 = vld [vmem:[#allocation2 + $0xf8] sm:$0xff]
          %s1125 = scalar_lea.vmem [#allocation6], %s1092
          %v1126 = vld [vmem:[%s1125] sm:$0xff]
          %v1127 = vld [vmem:[%s1125 + $0x8] sm:$0xff]
          %v1128 = vld [vmem:[%s1125 + $0x10] sm:$0xff]
          %v1129 = vld [vmem:[%s1125 + $0x18] sm:$0xff]
          %v1130 = vld [vmem:[%s1125 + $0x20] sm:$0xff]
          %v1131 = vld [vmem:[%s1125 + $0x28] sm:$0xff]
          %v1132 = vld [vmem:[%s1125 + $0x30] sm:$0xff]
          %v1133 = vld [vmem:[%s1125 + $0x38] sm:$0xff]
          %v1134 = vld [vmem:[%s1125 + $0x40] sm:$0xff]
          %v1135 = vld [vmem:[%s1125 + $0x48] sm:$0xff]
          %v1136 = vld [vmem:[%s1125 + $0x50] sm:$0xff]
          %v1137 = vld [vmem:[%s1125 + $0x58] sm:$0xff]
          %v1138 = vld [vmem:[%s1125 + $0x60] sm:$0xff]
          %v1139 = vld [vmem:[%s1125 + $0x68] sm:$0xff]
          %v1140 = vld [vmem:[%s1125 + $0x70] sm:$0xff]
          %v1141 = vld [vmem:[%s1125 + $0x78] sm:$0xff]
          %v1142 = vld [vmem:[%s1125 + $0x80] sm:$0xff]
          %v1143 = vld [vmem:[%s1125 + $0x88] sm:$0xff]
          %v1144 = vld [vmem:[%s1125 + $0x90] sm:$0xff]
          %v1145 = vld [vmem:[%s1125 + $0x98] sm:$0xff]
          %v1146 = vld [vmem:[%s1125 + $0xa0] sm:$0xff]
          %v1147 = vld [vmem:[%s1125 + $0xa8] sm:$0xff]
          %v1148 = vld [vmem:[%s1125 + $0xb0] sm:$0xff]
          %v1149 = vld [vmem:[%s1125 + $0xb8] sm:$0xff]
          %v1150 = vld [vmem:[%s1125 + $0xc0] sm:$0xff]
          %v1151 = vld [vmem:[%s1125 + $0xc8] sm:$0xff]
          %v1152 = vld [vmem:[%s1125 + $0xd0] sm:$0xff]
          %v1153 = vld [vmem:[%s1125 + $0xd8] sm:$0xff]
          %v1154 = vld [vmem:[%s1125 + $0xe0] sm:$0xff]
          %v1155 = vld [vmem:[%s1125 + $0xe8] sm:$0xff]
          %v1156 = vld [vmem:[%s1125 + $0xf0] sm:$0xff]
          %v1157 = vld [vmem:[%s1125 + $0xf8] sm:$0xff]
          %v1158 = vadd.f32 %v1093, 1e-06
          %v1159 = vadd.f32 %v1094, 1e-06
          %v1160 = vadd.f32 %v1095, 1e-06
          %v1161 = vadd.f32 %v1096, 1e-06
          %v1162 = vadd.f32 %v1097, 1e-06
          %v1163 = vadd.f32 %v1098, 1e-06
          %v1164 = vadd.f32 %v1099, 1e-06
          %v1165 = vadd.f32 %v1100, 1e-06
          %v1166 = vadd.f32 %v1101, 1e-06
          %v1167 = vadd.f32 %v1102, 1e-06
          %v1168 = vadd.f32 %v1103, 1e-06
          %v1169 = vadd.f32 %v1104, 1e-06
          %v1170 = vadd.f32 %v1105, 1e-06
          %v1171 = vadd.f32 %v1106, 1e-06
          %v1172 = vadd.f32 %v1107, 1e-06
          %v1173 = vadd.f32 %v1108, 1e-06
          %v1174 = vadd.f32 %v1109, 1e-06
          %v1175 = vadd.f32 %v1110, 1e-06
          %v1176 = vadd.f32 %v1111, 1e-06
          %v1177 = vadd.f32 %v1112, 1e-06
          %v1178 = vadd.f32 %v1113, 1e-06
          %v1179 = vadd.f32 %v1114, 1e-06
          %v1180 = vadd.f32 %v1115, 1e-06
          %v1181 = vadd.f32 %v1116, 1e-06
          %v1182 = vadd.f32 %v1117, 1e-06
          %v1183 = vadd.f32 %v1118, 1e-06
          %v1184 = vadd.f32 %v1119, 1e-06
          %v1185 = vadd.f32 %v1120, 1e-06
          %v1186 = vadd.f32 %v1121, 1e-06
          %v1187 = vadd.f32 %v1122, 1e-06
          %v1188 = vadd.f32 %v1123, 1e-06
          %v1189 = vadd.f32 %v1124, 1e-06
          %v1190 = vrcp.pop %v1158
          %v1191 = vmul.f32 1.0, %v1190
          %v1192 = vrcp.pop %v1159
          %v1193 = vmul.f32 1.0, %v1192
          %v1194 = vrcp.pop %v1160
          %v1195 = vmul.f32 1.0, %v1194
          %v1196 = vrcp.pop %v1161
          %v1197 = vmul.f32 1.0, %v1196
          %v1198 = vrcp.pop %v1162
          %v1199 = vmul.f32 1.0, %v1198
          %v1200 = vrcp.pop %v1163
          %v1201 = vmul.f32 1.0, %v1200
          %v1202 = vrcp.pop %v1164
          %v1203 = vmul.f32 1.0, %v1202
          %v1204 = vrcp.pop %v1165
          %v1205 = vmul.f32 1.0, %v1204
          %v1206 = vrcp.pop %v1166
          %v1207 = vmul.f32 1.0, %v1206
          %v1208 = vrcp.pop %v1167
          %v1209 = vmul.f32 1.0, %v1208
          %v1210 = vrcp.pop %v1168
          %v1211 = vmul.f32 1.0, %v1210
          %v1212 = vrcp.pop %v1169
          %v1213 = vmul.f32 1.0, %v1212
          %v1214 = vrcp.pop %v1170
          %v1215 = vmul.f32 1.0, %v1214
          %v1216 = vrcp.pop %v1171
          %v1217 = vmul.f32 1.0, %v1216
          %v1218 = vrcp.pop %v1172
          %v1219 = vmul.f32 1.0, %v1218
          %v1220 = vrcp.pop %v1173
          %v1221 = vmul.f32 1.0, %v1220
          %v1222 = vrcp.pop %v1174
          %v1223 = vmul.f32 1.0, %v1222
          %v1224 = vrcp.pop %v1175
          %v1225 = vmul.f32 1.0, %v1224
          %v1226 = vrcp.pop %v1176
          %v1227 = vmul.f32 1.0, %v1226
          %v1228 = vrcp.pop %v1177
          %v1229 = vmul.f32 1.0, %v1228
          %v1230 = vrcp.pop %v1178
          %v1231 = vmul.f32 1.0, %v1230
          %v1232 = vrcp.pop %v1179
          %v1233 = vmul.f32 1.0, %v1232
          %v1234 = vrcp.pop %v1180
          %v1235 = vmul.f32 1.0, %v1234
          %v1236 = vrcp.pop %v1181
          %v1237 = vmul.f32 1.0, %v1236
          %v1238 = vrcp.pop %v1182
          %v1239 = vmul.f32 1.0, %v1238
          %v1240 = vrcp.pop %v1183
          %v1241 = vmul.f32 1.0, %v1240
          %v1242 = vrcp.pop %v1184
          %v1243 = vmul.f32 1.0, %v1242
          %v1244 = vrcp.pop %v1185
          %v1245 = vmul.f32 1.0, %v1244
          %v1246 = vrcp.pop %v1186
          %v1247 = vmul.f32 1.0, %v1246
          %v1248 = vrcp.pop %v1187
          %v1249 = vmul.f32 1.0, %v1248
          %v1250 = vrcp.pop %v1188
          %v1251 = vmul.f32 1.0, %v1250
          %v1252 = vrcp.pop %v1189
          %v1253 = vmul.f32 1.0, %v1252
          %1255 = vset.pattern.permute.xlu0 0
          %1256 = vperm.xlu0 %1255, %v1191
          %v1257 = vpop.permute.xlu0 %1256
          %1260 = vset.pattern.permute.xlu0 0
          %1261 = vperm.xlu0 %1260, %v1193
          %v1262 = vpop.permute.xlu0 %1261
          %1265 = vset.pattern.permute.xlu0 0
          %1266 = vperm.xlu0 %1265, %v1195
          %v1267 = vpop.permute.xlu0 %1266
          %1270 = vset.pattern.permute.xlu0 0
          %1271 = vperm.xlu0 %1270, %v1197
          %v1272 = vpop.permute.xlu0 %1271
          %1275 = vset.pattern.permute.xlu0 0
          %1276 = vperm.xlu0 %1275, %v1199
          %v1277 = vpop.permute.xlu0 %1276
          %1280 = vset.pattern.permute.xlu0 0
          %1281 = vperm.xlu0 %1280, %v1201
          %v1282 = vpop.permute.xlu0 %1281
          %1285 = vset.pattern.permute.xlu0 0
          %1286 = vperm.xlu0 %1285, %v1203
          %v1287 = vpop.permute.xlu0 %1286
          %1290 = vset.pattern.permute.xlu0 0
          %1291 = vperm.xlu0 %1290, %v1205
          %v1292 = vpop.permute.xlu0 %1291
          %1295 = vset.pattern.permute.xlu0 0
          %1296 = vperm.xlu0 %1295, %v1207
          %v1297 = vpop.permute.xlu0 %1296
          %1300 = vset.pattern.permute.xlu0 0
          %1301 = vperm.xlu0 %1300, %v1209
          %v1302 = vpop.permute.xlu0 %1301
          %1305 = vset.pattern.permute.xlu0 0
          %1306 = vperm.xlu0 %1305, %v1211
          %v1307 = vpop.permute.xlu0 %1306
          %1310 = vset.pattern.permute.xlu0 0
          %1311 = vperm.xlu0 %1310, %v1213
          %v1312 = vpop.permute.xlu0 %1311
          %1315 = vset.pattern.permute.xlu0 0
          %1316 = vperm.xlu0 %1315, %v1215
          %v1317 = vpop.permute.xlu0 %1316
          %1320 = vset.pattern.permute.xlu0 0
          %1321 = vperm.xlu0 %1320, %v1217
          %v1322 = vpop.permute.xlu0 %1321
          %1325 = vset.pattern.permute.xlu0 0
          %1326 = vperm.xlu0 %1325, %v1219
          %v1327 = vpop.permute.xlu0 %1326
          %1330 = vset.pattern.permute.xlu0 0
          %1331 = vperm.xlu0 %1330, %v1221
          %v1332 = vpop.permute.xlu0 %1331
          %1335 = vset.pattern.permute.xlu0 0
          %1336 = vperm.xlu0 %1335, %v1223
          %v1337 = vpop.permute.xlu0 %1336
          %1340 = vset.pattern.permute.xlu0 0
          %1341 = vperm.xlu0 %1340, %v1225
          %v1342 = vpop.permute.xlu0 %1341
          %1345 = vset.pattern.permute.xlu0 0
          %1346 = vperm.xlu0 %1345, %v1227
          %v1347 = vpop.permute.xlu0 %1346
          %1350 = vset.pattern.permute.xlu0 0
          %1351 = vperm.xlu0 %1350, %v1229
          %v1352 = vpop.permute.xlu0 %1351
          %1355 = vset.pattern.permute.xlu0 0
          %1356 = vperm.xlu0 %1355, %v1231
          %v1357 = vpop.permute.xlu0 %1356
          %1360 = vset.pattern.permute.xlu0 0
          %1361 = vperm.xlu0 %1360, %v1233
          %v1362 = vpop.permute.xlu0 %1361
          %1365 = vset.pattern.permute.xlu0 0
          %1366 = vperm.xlu0 %1365, %v1235
          %v1367 = vpop.permute.xlu0 %1366
          %1370 = vset.pattern.permute.xlu0 0
          %1371 = vperm.xlu0 %1370, %v1237
          %v1372 = vpop.permute.xlu0 %1371
          %1375 = vset.pattern.permute.xlu0 0
          %1376 = vperm.xlu0 %1375, %v1239
          %v1377 = vpop.permute.xlu0 %1376
          %1380 = vset.pattern.permute.xlu0 0
          %1381 = vperm.xlu0 %1380, %v1241
          %v1382 = vpop.permute.xlu0 %1381
          %1385 = vset.pattern.permute.xlu0 0
          %1386 = vperm.xlu0 %1385, %v1243
          %v1387 = vpop.permute.xlu0 %1386
          %1390 = vset.pattern.permute.xlu0 0
          %1391 = vperm.xlu0 %1390, %v1245
          %v1392 = vpop.permute.xlu0 %1391
          %1395 = vset.pattern.permute.xlu0 0
          %1396 = vperm.xlu0 %1395, %v1247
          %v1397 = vpop.permute.xlu0 %1396
          %1400 = vset.pattern.permute.xlu0 0
          %1401 = vperm.xlu0 %1400, %v1249
          %v1402 = vpop.permute.xlu0 %1401
          %1405 = vset.pattern.permute.xlu0 0
          %1406 = vperm.xlu0 %1405, %v1251
          %v1407 = vpop.permute.xlu0 %1406
          %1410 = vset.pattern.permute.xlu0 0
          %1411 = vperm.xlu0 %1410, %v1253
          %v1412 = vpop.permute.xlu0 %1411
          %v1414 = vmul.f32 %v1093, %v1257
          %v1415 = vmul.f32 %v1094, %v1262
          %v1416 = vmul.f32 %v1095, %v1267
          %v1417 = vmul.f32 %v1096, %v1272
          %v1418 = vmul.f32 %v1097, %v1277
          %v1419 = vmul.f32 %v1098, %v1282
          %v1420 = vmul.f32 %v1099, %v1287
          %v1421 = vmul.f32 %v1100, %v1292
          %v1422 = vmul.f32 %v1101, %v1297
          %v1423 = vmul.f32 %v1102, %v1302
          %v1424 = vmul.f32 %v1103, %v1307
          %v1425 = vmul.f32 %v1104, %v1312
          %v1426 = vmul.f32 %v1105, %v1317
          %v1427 = vmul.f32 %v1106, %v1322
          %v1428 = vmul.f32 %v1107, %v1327
          %v1429 = vmul.f32 %v1108, %v1332
          %v1430 = vmul.f32 %v1109, %v1337
          %v1431 = vmul.f32 %v1110, %v1342
          %v1432 = vmul.f32 %v1111, %v1347
          %v1433 = vmul.f32 %v1112, %v1352
          %v1434 = vmul.f32 %v1113, %v1357
          %v1435 = vmul.f32 %v1114, %v1362
          %v1436 = vmul.f32 %v1115, %v1367
          %v1437 = vmul.f32 %v1116, %v1372
          %v1438 = vmul.f32 %v1117, %v1377
          %v1439 = vmul.f32 %v1118, %v1382
          %v1440 = vmul.f32 %v1119, %v1387
          %v1441 = vmul.f32 %v1120, %v1392
          %v1442 = vmul.f32 %v1121, %v1397
          %v1443 = vmul.f32 %v1122, %v1402
          %v1444 = vmul.f32 %v1123, %v1407
          %v1445 = vmul.f32 %v1124, %v1412
          %v1446 = vadd.f32 %v1126, %v1414
          %v1447 = vadd.f32 %v1127, %v1415
          %v1448 = vadd.f32 %v1128, %v1416
          %v1449 = vadd.f32 %v1129, %v1417
          %v1450 = vadd.f32 %v1130, %v1418
          %v1451 = vadd.f32 %v1131, %v1419
          %v1452 = vadd.f32 %v1132, %v1420
          %v1453 = vadd.f32 %v1133, %v1421
          %v1454 = vadd.f32 %v1134, %v1422
          %v1455 = vadd.f32 %v1135, %v1423
          %v1456 = vadd.f32 %v1136, %v1424
          %v1457 = vadd.f32 %v1137, %v1425
          %v1458 = vadd.f32 %v1138, %v1426
          %v1459 = vadd.f32 %v1139, %v1427
          %v1460 = vadd.f32 %v1140, %v1428
          %v1461 = vadd.f32 %v1141, %v1429
          %v1462 = vadd.f32 %v1142, %v1430
          %v1463 = vadd.f32 %v1143, %v1431
          %v1464 = vadd.f32 %v1144, %v1432
          %v1465 = vadd.f32 %v1145, %v1433
          %v1466 = vadd.f32 %v1146, %v1434
          %v1467 = vadd.f32 %v1147, %v1435
          %v1468 = vadd.f32 %v1148, %v1436
          %v1469 = vadd.f32 %v1149, %v1437
          %v1470 = vadd.f32 %v1150, %v1438
          %v1471 = vadd.f32 %v1151, %v1439
          %v1472 = vadd.f32 %v1152, %v1440
          %v1473 = vadd.f32 %v1153, %v1441
          %v1474 = vadd.f32 %v1154, %v1442
          %v1475 = vadd.f32 %v1155, %v1443
          %v1476 = vadd.f32 %v1156, %v1444
          %v1477 = vadd.f32 %v1157, %v1445
          %v1478 = vld [vmem:[#allocation8] sm:$0xff]
          %v1479 = vld [vmem:[#allocation8 + $0x8] sm:$0xff]
          %v1480 = vld [vmem:[#allocation8 + $0x10] sm:$0xff]
          %v1481 = vld [vmem:[#allocation8 + $0x18] sm:$0xff]
          %v1482 = vld [vmem:[#allocation8 + $0x20] sm:$0xff]
          %v1483 = vld [vmem:[#allocation8 + $0x28] sm:$0xff]
          %v1484 = vld [vmem:[#allocation8 + $0x30] sm:$0xff]
          %v1485 = vld [vmem:[#allocation8 + $0x38] sm:$0xff]
          %v1486 = vld [vmem:[#allocation8 + $0x40] sm:$0xff]
          %v1487 = vld [vmem:[#allocation8 + $0x48] sm:$0xff]
          %v1488 = vld [vmem:[#allocation8 + $0x50] sm:$0xff]
          %v1489 = vld [vmem:[#allocation8 + $0x58] sm:$0xff]
          %v1490 = vld [vmem:[#allocation8 + $0x60] sm:$0xff]
          %v1491 = vld [vmem:[#allocation8 + $0x68] sm:$0xff]
          %v1492 = vld [vmem:[#allocation8 + $0x70] sm:$0xff]
          %v1493 = vld [vmem:[#allocation8 + $0x78] sm:$0xff]
          %v1494 = vld [vmem:[#allocation9] sm:$0x1]
          %v1496 = vlaneseq
          %v1497 = vshrl.u32 %v1496, 7
          %v1498 = vsub.s32 0, %v1497
          %v1499 = vrot.slane %v1494, %v1498
          %1501 = vmatprep.subr.mxu0 0.0
          %1502 = vmatpush1.msra.mxu0 %v1478
          %1503 = vmatprep.subr.mxu0 0.0
          %1504 = vmatpush1.msra.mxu0 %v1479
          %1505 = vmatprep.subr.mxu0 0.0
          %1506 = vmatpush1.msra.mxu0 %v1480
          %1507 = vmatprep.subr.mxu0 0.0
          %1508 = vmatpush1.msra.mxu0 %v1481
          %1509 = vmatprep.subr.mxu0 0.0
          %1510 = vmatpush1.msra.mxu0 %v1482
          %1511 = vmatprep.subr.mxu0 0.0
          %1512 = vmatpush1.msra.mxu0 %v1483
          %1513 = vmatprep.subr.mxu0 0.0
          %1514 = vmatpush1.msra.mxu0 %v1484
          %1515 = vmatprep.subr.mxu0 0.0
          %1516 = vmatpush1.msra.mxu0 %v1485
          %1517 = vmatprep.subr.mxu0 0.0
          %1518 = vmatpush1.msra.mxu0 %v1486
          %1519 = vmatprep.subr.mxu0 0.0
          %1520 = vmatpush1.msra.mxu0 %v1487
          %1521 = vmatprep.subr.mxu0 0.0
          %1522 = vmatpush1.msra.mxu0 %v1488
          %1523 = vmatprep.subr.mxu0 0.0
          %1524 = vmatpush1.msra.mxu0 %v1489
          %1525 = vmatprep.subr.mxu0 0.0
          %1526 = vmatpush1.msra.mxu0 %v1490
          %1527 = vmatprep.subr.mxu0 0.0
          %1528 = vmatpush1.msra.mxu0 %v1491
          %1529 = vmatprep.subr.mxu0 0.0
          %1530 = vmatpush1.msra.mxu0 %v1492
          %1531 = vmatprep.subr.mxu0 0.0
          %1532 = vmatpush1.msra.mxu0 %v1493
          %1533 = vmatprep.subr.mxu0 0.0
          %1534 = vmatpush1.msra.mxu0 0.0
          %1535 = vmatprep.subr.mxu0 0.0
          %1536 = vmatpush1.msra.mxu0 0.0
          %1537 = vmatprep.subr.mxu0 0.0
          %1538 = vmatpush1.msra.mxu0 0.0
          %1539 = vmatprep.subr.mxu0 0.0
          %1540 = vmatpush1.msra.mxu0 0.0
          %1541 = vmatprep.subr.mxu0 0.0
          %1542 = vmatpush1.msra.mxu0 0.0
          %1543 = vmatprep.subr.mxu0 0.0
          %1544 = vmatpush1.msra.mxu0 0.0
          %1545 = vmatprep.subr.mxu0 0.0
          %1546 = vmatpush1.msra.mxu0 0.0
          %1547 = vmatprep.subr.mxu0 0.0
          %1548 = vmatpush1.msra.mxu0 0.0
          %1549 = vmatprep.subr.mxu0 0.0
          %1550 = vmatpush1.msra.mxu0 0.0
          %1551 = vmatprep.subr.mxu0 0.0
          %1552 = vmatpush1.msra.mxu0 0.0
          %1553 = vmatprep.subr.mxu0 0.0
          %1554 = vmatpush1.msra.mxu0 0.0
          %1555 = vmatprep.subr.mxu0 0.0
          %1556 = vmatpush1.msra.mxu0 0.0
          %1557 = vmatprep.subr.mxu0 0.0
          %1558 = vmatpush1.msra.mxu0 0.0
          %1559 = vmatprep.subr.mxu0 0.0
          %1560 = vmatpush1.msra.mxu0 0.0
          %1561 = vmatprep.subr.mxu0 0.0
          %1562 = vmatpush1.msra.mxu0 0.0
          %1563 = vmatprep.subr.mxu0 0.0
          %1564 = vmatpush1.msra.mxu0 0.0
          %1565 = vmatprep.mubr.f32.mxu0 0.0
          %1566 = vmatmul.mubr.f32.gmra.mrb[0].mxu0 %v1446
          %v1567 = vpop.f32.mrb[0].mxu0
          %v1568 = vadd.f32 %v1499, %v1567
          %v1569 = vpop.f32.mrb[0].mxu0
          %1570 = vmatprep.mubr.f32.mxu0 0.0
          %1571 = vmatmul.mubr.f32.gmra.mrb[0].mxu0 %v1447
          %v1572 = vpop.f32.mrb[0].mxu0
          %v1573 = vadd.f32 %v1499, %v1572
          %v1574 = vpop.f32.mrb[0].mxu0
          %1575 = vmatprep.mubr.f32.mxu0 0.0
          %1576 = vmatmul.mubr.f32.gmra.mrb[0].mxu0 %v1448
          %v1577 = vpop.f32.mrb[0].mxu0
          %v1578 = vadd.f32 %v1499, %v1577
          %v1579 = vpop.f32.mrb[0].mxu0
          %1580 = vmatprep.mubr.f32.mxu0 0.0
          %1581 = vmatmul.mubr.f32.gmra.mrb[0].mxu0 %v1449
          %v1582 = vpop.f32.mrb[0].mxu0
          %v1583 = vadd.f32 %v1499, %v1582
          %v1584 = vpop.f32.mrb[0].mxu0
          %1585 = vmatprep.mubr.f32.mxu0 0.0
          %1586 = vmatmul.mubr.f32.gmra.mrb[0].mxu0 %v1450
          %v1587 = vpop.f32.mrb[0].mxu0
          %v1588 = vadd.f32 %v1499, %v1587
          %v1589 = vpop.f32.mrb[0].mxu0
          %1590 = vmatprep.mubr.f32.mxu0 0.0
          %1591 = vmatmul.mubr.f32.gmra.mrb[0].mxu0 %v1451
          %v1592 = vpop.f32.mrb[0].mxu0
          %v1593 = vadd.f32 %v1499, %v1592
          %v1594 = vpop.f32.mrb[0].mxu0
          %1595 = vmatprep.mubr.f32.mxu0 0.0
          %1596 = vmatmul.mubr.f32.gmra.mrb[0].mxu0 %v1452
          %v1597 = vpop.f32.mrb[0].mxu0
          %v1598 = vadd.f32 %v1499, %v1597
          %v1599 = vpop.f32.mrb[0].mxu0
          %1600 = vmatprep.mubr.f32.mxu0 0.0
          %1601 = vmatmul.mubr.f32.gmra.mrb[0].mxu0 %v1453
          %v1602 = vpop.f32.mrb[0].mxu0
          %v1603 = vadd.f32 %v1499, %v1602
          %v1604 = vpop.f32.mrb[0].mxu0
          %1605 = vmatprep.mubr.f32.mxu0 0.0
          %1606 = vmatmul.mubr.f32.gmra.mrb[0].mxu0 %v1454
          %v1607 = vpop.f32.mrb[0].mxu0
          %v1608 = vadd.f32 %v1499, %v1607
          %v1609 = vpop.f32.mrb[0].mxu0
          %1610 = vmatprep.mubr.f32.mxu0 0.0
          %1611 = vmatmul.mubr.f32.gmra.mrb[0].mxu0 %v1455
          %v1612 = vpop.f32.mrb[0].mxu0
          %v1613 = vadd.f32 %v1499, %v1612
          %v1614 = vpop.f32.mrb[0].mxu0
          %1615 = vmatprep.mubr.f32.mxu0 0.0
          %1616 = vmatmul.mubr.f32.gmra.mrb[0].mxu0 %v1456
          %v1617 = vpop.f32.mrb[0].mxu0
          %v1618 = vadd.f32 %v1499, %v1617
          %v1619 = vpop.f32.mrb[0].mxu0
          %1620 = vmatprep.mubr.f32.mxu0 0.0
          %1621 = vmatmul.mubr.f32.gmra.mrb[0].mxu0 %v1457
          %v1622 = vpop.f32.mrb[0].mxu0
          %v1623 = vadd.f32 %v1499, %v1622
          %v1624 = vpop.f32.mrb[0].mxu0
          %1625 = vmatprep.mubr.f32.mxu0 0.0
          %1626 = vmatmul.mubr.f32.gmra.mrb[0].mxu0 %v1458
          %v1627 = vpop.f32.mrb[0].mxu0
          %v1628 = vadd.f32 %v1499, %v1627
          %v1629 = vpop.f32.mrb[0].mxu0
          %1630 = vmatprep.mubr.f32.mxu0 0.0
          %1631 = vmatmul.mubr.f32.gmra.mrb[0].mxu0 %v1459
          %v1632 = vpop.f32.mrb[0].mxu0
          %v1633 = vadd.f32 %v1499, %v1632
          %v1634 = vpop.f32.mrb[0].mxu0
          %1635 = vmatprep.mubr.f32.mxu0 0.0
          %1636 = vmatmul.mubr.f32.gmra.mrb[0].mxu0 %v1460
          %v1637 = vpop.f32.mrb[0].mxu0
          %v1638 = vadd.f32 %v1499, %v1637
          %v1639 = vpop.f32.mrb[0].mxu0
          %1640 = vmatprep.mubr.f32.mxu0 0.0
          %1641 = vmatmul.mubr.f32.gmra.mrb[0].mxu0 %v1461
          %v1642 = vpop.f32.mrb[0].mxu0
          %v1643 = vadd.f32 %v1499, %v1642
          %v1644 = vpop.f32.mrb[0].mxu0
          %1645 = vmatprep.mubr.f32.mxu0 0.0
          %1646 = vmatmul.mubr.f32.gmra.mrb[0].mxu0 %v1462
          %v1647 = vpop.f32.mrb[0].mxu0
          %v1648 = vadd.f32 %v1499, %v1647
          %v1649 = vpop.f32.mrb[0].mxu0
          %1650 = vmatprep.mubr.f32.mxu0 0.0
          %1651 = vmatmul.mubr.f32.gmra.mrb[0].mxu0 %v1463
          %v1652 = vpop.f32.mrb[0].mxu0
          %v1653 = vadd.f32 %v1499, %v1652
          %v1654 = vpop.f32.mrb[0].mxu0
          %1655 = vmatprep.mubr.f32.mxu0 0.0
          %1656 = vmatmul.mubr.f32.gmra.mrb[0].mxu0 %v1464
          %v1657 = vpop.f32.mrb[0].mxu0
          %v1658 = vadd.f32 %v1499, %v1657
          %v1659 = vpop.f32.mrb[0].mxu0
          %1660 = vmatprep.mubr.f32.mxu0 0.0
          %1661 = vmatmul.mubr.f32.gmra.mrb[0].mxu0 %v1465
          %v1662 = vpop.f32.mrb[0].mxu0
          %v1663 = vadd.f32 %v1499, %v1662
          %v1664 = vpop.f32.mrb[0].mxu0
          %1665 = vmatprep.mubr.f32.mxu0 0.0
          %1666 = vmatmul.mubr.f32.gmra.mrb[0].mxu0 %v1466
          %v1667 = vpop.f32.mrb[0].mxu0
          %v1668 = vadd.f32 %v1499, %v1667
          %v1669 = vpop.f32.mrb[0].mxu0
          %1670 = vmatprep.mubr.f32.mxu0 0.0
          %1671 = vmatmul.mubr.f32.gmra.mrb[0].mxu0 %v1467
          %v1672 = vpop.f32.mrb[0].mxu0
          %v1673 = vadd.f32 %v1499, %v1672
          %v1674 = vpop.f32.mrb[0].mxu0
          %1675 = vmatprep.mubr.f32.mxu0 0.0
          %1676 = vmatmul.mubr.f32.gmra.mrb[0].mxu0 %v1468
          %v1677 = vpop.f32.mrb[0].mxu0
          %v1678 = vadd.f32 %v1499, %v1677
          %v1679 = vpop.f32.mrb[0].mxu0
          %1680 = vmatprep.mubr.f32.mxu0 0.0
          %1681 = vmatmul.mubr.f32.gmra.mrb[0].mxu0 %v1469
          %v1682 = vpop.f32.mrb[0].mxu0
          %v1683 = vadd.f32 %v1499, %v1682
          %v1684 = vpop.f32.mrb[0].mxu0
          %1685 = vmatprep.mubr.f32.mxu0 0.0
          %1686 = vmatmul.mubr.f32.gmra.mrb[0].mxu0 %v1470
          %v1687 = vpop.f32.mrb[0].mxu0
          %v1688 = vadd.f32 %v1499, %v1687
          %v1689 = vpop.f32.mrb[0].mxu0
          %1690 = vmatprep.mubr.f32.mxu0 0.0
          %1691 = vmatmul.mubr.f32.gmra.mrb[0].mxu0 %v1471
          %v1692 = vpop.f32.mrb[0].mxu0
          %v1693 = vadd.f32 %v1499, %v1692
          %v1694 = vpop.f32.mrb[0].mxu0
          %1695 = vmatprep.mubr.f32.mxu0 0.0
          %1696 = vmatmul.mubr.f32.gmra.mrb[0].mxu0 %v1472
          %v1697 = vpop.f32.mrb[0].mxu0
          %v1698 = vadd.f32 %v1499, %v1697
          %v1699 = vpop.f32.mrb[0].mxu0
          %1700 = vmatprep.mubr.f32.mxu0 0.0
          %1701 = vmatmul.mubr.f32.gmra.mrb[0].mxu0 %v1473
          %v1702 = vpop.f32.mrb[0].mxu0
          %v1703 = vadd.f32 %v1499, %v1702
          %v1704 = vpop.f32.mrb[0].mxu0
          %1705 = vmatprep.mubr.f32.mxu0 0.0
          %1706 = vmatmul.mubr.f32.gmra.mrb[0].mxu0 %v1474
          %v1707 = vpop.f32.mrb[0].mxu0
          %v1708 = vadd.f32 %v1499, %v1707
          %v1709 = vpop.f32.mrb[0].mxu0
          %1710 = vmatprep.mubr.f32.mxu0 0.0
          %1711 = vmatmul.mubr.f32.gmra.mrb[0].mxu0 %v1475
          %v1712 = vpop.f32.mrb[0].mxu0
          %v1713 = vadd.f32 %v1499, %v1712
          %v1714 = vpop.f32.mrb[0].mxu0
          %1715 = vmatprep.mubr.f32.mxu0 0.0
          %1716 = vmatmul.mubr.f32.gmra.mrb[0].mxu0 %v1476
          %v1717 = vpop.f32.mrb[0].mxu0
          %v1718 = vadd.f32 %v1499, %v1717
          %v1719 = vpop.f32.mrb[0].mxu0
          %1720 = vmatprep.mubr.f32.mxu0 0.0
          %1721 = vmatmul.mubr.f32.gmra.mrb[0].mxu0 %v1477
          %v1722 = vpop.f32.mrb[0].mxu0
          %v1723 = vadd.f32 %v1499, %v1722
          %v1724 = vpop.f32.mrb[0].mxu0
          %1725 = vdwg.mxu0
          %v1726 = vmax.f32 %v1568, 0.0
          %v1727 = vmax.f32 %v1573, 0.0
          %v1728 = vmax.f32 %v1578, 0.0
          %v1729 = vmax.f32 %v1583, 0.0
          %v1730 = vmax.f32 %v1588, 0.0
          %v1731 = vmax.f32 %v1593, 0.0
          %v1732 = vmax.f32 %v1598, 0.0
          %v1733 = vmax.f32 %v1603, 0.0
          %v1734 = vmax.f32 %v1608, 0.0
          %v1735 = vmax.f32 %v1613, 0.0
          %v1736 = vmax.f32 %v1618, 0.0
          %v1737 = vmax.f32 %v1623, 0.0
          %v1738 = vmax.f32 %v1628, 0.0
          %v1739 = vmax.f32 %v1633, 0.0
          %v1740 = vmax.f32 %v1638, 0.0
          %v1741 = vmax.f32 %v1643, 0.0
          %v1742 = vmax.f32 %v1648, 0.0
          %v1743 = vmax.f32 %v1653, 0.0
          %v1744 = vmax.f32 %v1658, 0.0
          %v1745 = vmax.f32 %v1663, 0.0
          %v1746 = vmax.f32 %v1668, 0.0
          %v1747 = vmax.f32 %v1673, 0.0
          %v1748 = vmax.f32 %v1678, 0.0
          %v1749 = vmax.f32 %v1683, 0.0
          %v1750 = vmax.f32 %v1688, 0.0
          %v1751 = vmax.f32 %v1693, 0.0
          %v1752 = vmax.f32 %v1698, 0.0
          %v1753 = vmax.f32 %v1703, 0.0
          %v1754 = vmax.f32 %v1708, 0.0
          %v1755 = vmax.f32 %v1713, 0.0
          %v1756 = vmax.f32 %v1718, 0.0
          %v1757 = vmax.f32 %v1723, 0.0
          %v1758 = vld [vmem:[#allocation11] sm:$0xff]
          %v1759 = vld [vmem:[#allocation11 + $0x8] sm:$0xff]
          %v1760 = vld [vmem:[#allocation11 + $0x10] sm:$0xff]
          %v1761 = vld [vmem:[#allocation11 + $0x18] sm:$0xff]
          %v1762 = vld [vmem:[#allocation11 + $0x20] sm:$0xff]
          %v1763 = vld [vmem:[#allocation11 + $0x28] sm:$0xff]
          %v1764 = vld [vmem:[#allocation11 + $0x30] sm:$0xff]
          %v1765 = vld [vmem:[#allocation11 + $0x38] sm:$0xff]
          %v1766 = vld [vmem:[#allocation11 + $0x40] sm:$0xff]
          %v1767 = vld [vmem:[#allocation11 + $0x48] sm:$0xff]
          %v1768 = vld [vmem:[#allocation11 + $0x50] sm:$0xff]
          %v1769 = vld [vmem:[#allocation11 + $0x58] sm:$0xff]
          %v1770 = vld [vmem:[#allocation11 + $0x60] sm:$0xff]
          %v1771 = vld [vmem:[#allocation11 + $0x68] sm:$0xff]
          %v1772 = vld [vmem:[#allocation11 + $0x70] sm:$0xff]
          %v1773 = vld [vmem:[#allocation11 + $0x78] sm:$0xff]
          %v1774 = vld [vmem:[#allocation12] sm:$0x1]
          %v1776 = vlaneseq
          %v1777 = vshrl.u32 %v1776, 7
          %v1778 = vsub.s32 0, %v1777
          %v1779 = vrot.slane %v1774, %v1778
          %1781 = vmatprep.subr.mxu0 0.0
          %1782 = vmatpush1.msra.mxu0 %v1758
          %1783 = vmatprep.subr.mxu0 0.0
          %1784 = vmatpush1.msra.mxu0 %v1759
          %1785 = vmatprep.subr.mxu0 0.0
          %1786 = vmatpush1.msra.mxu0 %v1760
          %1787 = vmatprep.subr.mxu0 0.0
          %1788 = vmatpush1.msra.mxu0 %v1761
          %1789 = vmatprep.subr.mxu0 0.0
          %1790 = vmatpush1.msra.mxu0 %v1762
          %1791 = vmatprep.subr.mxu0 0.0
          %1792 = vmatpush1.msra.mxu0 %v1763
          %1793 = vmatprep.subr.mxu0 0.0
          %1794 = vmatpush1.msra.mxu0 %v1764
          %1795 = vmatprep.subr.mxu0 0.0
          %1796 = vmatpush1.msra.mxu0 %v1765
          %1797 = vmatprep.subr.mxu0 0.0
          %1798 = vmatpush1.msra.mxu0 %v1766
          %1799 = vmatprep.subr.mxu0 0.0
          %1800 = vmatpush1.msra.mxu0 %v1767
          %1801 = vmatprep.subr.mxu0 0.0
          %1802 = vmatpush1.msra.mxu0 %v1768
          %1803 = vmatprep.subr.mxu0 0.0
          %1804 = vmatpush1.msra.mxu0 %v1769
          %1805 = vmatprep.subr.mxu0 0.0
          %1806 = vmatpush1.msra.mxu0 %v1770
          %1807 = vmatprep.subr.mxu0 0.0
          %1808 = vmatpush1.msra.mxu0 %v1771
          %1809 = vmatprep.subr.mxu0 0.0
          %1810 = vmatpush1.msra.mxu0 %v1772
          %1811 = vmatprep.subr.mxu0 0.0
          %1812 = vmatpush1.msra.mxu0 %v1773
          %1813 = vmatprep.subr.mxu0 0.0
          %1814 = vmatpush1.msra.mxu0 0.0
          %1815 = vmatprep.subr.mxu0 0.0
          %1816 = vmatpush1.msra.mxu0 0.0
          %1817 = vmatprep.subr.mxu0 0.0
          %1818 = vmatpush1.msra.mxu0 0.0
          %1819 = vmatprep.subr.mxu0 0.0
          %1820 = vmatpush1.msra.mxu0 0.0
          %1821 = vmatprep.subr.mxu0 0.0
          %1822 = vmatpush1.msra.mxu0 0.0
          %1823 = vmatprep.subr.mxu0 0.0
          %1824 = vmatpush1.msra.mxu0 0.0
          %1825 = vmatprep.subr.mxu0 0.0
          %1826 = vmatpush1.msra.mxu0 0.0
          %1827 = vmatprep.subr.mxu0 0.0
          %1828 = vmatpush1.msra.mxu0 0.0
          %1829 = vmatprep.subr.mxu0 0.0
          %1830 = vmatpush1.msra.mxu0 0.0
          %1831 = vmatprep.subr.mxu0 0.0
          %1832 = vmatpush1.msra.mxu0 0.0
          %1833 = vmatprep.subr.mxu0 0.0
          %1834 = vmatpush1.msra.mxu0 0.0
          %1835 = vmatprep.subr.mxu0 0.0
          %1836 = vmatpush1.msra.mxu0 0.0
          %1837 = vmatprep.subr.mxu0 0.0
          %1838 = vmatpush1.msra.mxu0 0.0
          %1839 = vmatprep.subr.mxu0 0.0
          %1840 = vmatpush1.msra.mxu0 0.0
          %1841 = vmatprep.subr.mxu0 0.0
          %1842 = vmatpush1.msra.mxu0 0.0
          %1843 = vmatprep.subr.mxu0 0.0
          %1844 = vmatpush1.msra.mxu0 0.0
          %1845 = vmatprep.mubr.f32.mxu0 0.0
          %1846 = vmatmul.mubr.f32.gmra.mrb[0].mxu0 %v1726
          %v1847 = vpop.f32.mrb[0].mxu0
          %v1848 = vadd.f32 %v1779, %v1847
          %v1849 = vpop.f32.mrb[0].mxu0
          %1850 = vmatprep.mubr.f32.mxu0 0.0
          %1851 = vmatmul.mubr.f32.gmra.mrb[0].mxu0 %v1727
          %v1852 = vpop.f32.mrb[0].mxu0
          %v1853 = vadd.f32 %v1779, %v1852
          %v1854 = vpop.f32.mrb[0].mxu0
          %1855 = vmatprep.mubr.f32.mxu0 0.0
          %1856 = vmatmul.mubr.f32.gmra.mrb[0].mxu0 %v1728
          %v1857 = vpop.f32.mrb[0].mxu0
          %v1858 = vadd.f32 %v1779, %v1857
          %v1859 = vpop.f32.mrb[0].mxu0
          %1860 = vmatprep.mubr.f32.mxu0 0.0
          %1861 = vmatmul.mubr.f32.gmra.mrb[0].mxu0 %v1729
          %v1862 = vpop.f32.mrb[0].mxu0
          %v1863 = vadd.f32 %v1779, %v1862
          %v1864 = vpop.f32.mrb[0].mxu0
          %1865 = vmatprep.mubr.f32.mxu0 0.0
          %1866 = vmatmul.mubr.f32.gmra.mrb[0].mxu0 %v1730
          %v1867 = vpop.f32.mrb[0].mxu0
          %v1868 = vadd.f32 %v1779, %v1867
          %v1869 = vpop.f32.mrb[0].mxu0
          %1870 = vmatprep.mubr.f32.mxu0 0.0
          %1871 = vmatmul.mubr.f32.gmra.mrb[0].mxu0 %v1731
          %v1872 = vpop.f32.mrb[0].mxu0
          %v1873 = vadd.f32 %v1779, %v1872
          %v1874 = vpop.f32.mrb[0].mxu0
          %1875 = vmatprep.mubr.f32.mxu0 0.0
          %1876 = vmatmul.mubr.f32.gmra.mrb[0].mxu0 %v1732
          %v1877 = vpop.f32.mrb[0].mxu0
          %v1878 = vadd.f32 %v1779, %v1877
          %v1879 = vpop.f32.mrb[0].mxu0
          %1880 = vmatprep.mubr.f32.mxu0 0.0
          %1881 = vmatmul.mubr.f32.gmra.mrb[0].mxu0 %v1733
          %v1882 = vpop.f32.mrb[0].mxu0
          %v1883 = vadd.f32 %v1779, %v1882
          %v1884 = vpop.f32.mrb[0].mxu0
          %1885 = vmatprep.mubr.f32.mxu0 0.0
          %1886 = vmatmul.mubr.f32.gmra.mrb[0].mxu0 %v1734
          %v1887 = vpop.f32.mrb[0].mxu0
          %v1888 = vadd.f32 %v1779, %v1887
          %v1889 = vpop.f32.mrb[0].mxu0
          %1890 = vmatprep.mubr.f32.mxu0 0.0
          %1891 = vmatmul.mubr.f32.gmra.mrb[0].mxu0 %v1735
          %v1892 = vpop.f32.mrb[0].mxu0
          %v1893 = vadd.f32 %v1779, %v1892
          %v1894 = vpop.f32.mrb[0].mxu0
          %1895 = vmatprep.mubr.f32.mxu0 0.0
          %1896 = vmatmul.mubr.f32.gmra.mrb[0].mxu0 %v1736
          %v1897 = vpop.f32.mrb[0].mxu0
          %v1898 = vadd.f32 %v1779, %v1897
          %v1899 = vpop.f32.mrb[0].mxu0
          %1900 = vmatprep.mubr.f32.mxu0 0.0
          %1901 = vmatmul.mubr.f32.gmra.mrb[0].mxu0 %v1737
          %v1902 = vpop.f32.mrb[0].mxu0
          %v1903 = vadd.f32 %v1779, %v1902
          %v1904 = vpop.f32.mrb[0].mxu0
          %1905 = vmatprep.mubr.f32.mxu0 0.0
          %1906 = vmatmul.mubr.f32.gmra.mrb[0].mxu0 %v1738
          %v1907 = vpop.f32.mrb[0].mxu0
          %v1908 = vadd.f32 %v1779, %v1907
          %v1909 = vpop.f32.mrb[0].mxu0
          %1910 = vmatprep.mubr.f32.mxu0 0.0
          %1911 = vmatmul.mubr.f32.gmra.mrb[0].mxu0 %v1739
          %v1912 = vpop.f32.mrb[0].mxu0
          %v1913 = vadd.f32 %v1779, %v1912
          %v1914 = vpop.f32.mrb[0].mxu0
          %1915 = vmatprep.mubr.f32.mxu0 0.0
          %1916 = vmatmul.mubr.f32.gmra.mrb[0].mxu0 %v1740
          %v1917 = vpop.f32.mrb[0].mxu0
          %v1918 = vadd.f32 %v1779, %v1917
          %v1919 = vpop.f32.mrb[0].mxu0
          %1920 = vmatprep.mubr.f32.mxu0 0.0
          %1921 = vmatmul.mubr.f32.gmra.mrb[0].mxu0 %v1741
          %v1922 = vpop.f32.mrb[0].mxu0
          %v1923 = vadd.f32 %v1779, %v1922
          %v1924 = vpop.f32.mrb[0].mxu0
          %1925 = vmatprep.mubr.f32.mxu0 0.0
          %1926 = vmatmul.mubr.f32.gmra.mrb[0].mxu0 %v1742
          %v1927 = vpop.f32.mrb[0].mxu0
          %v1928 = vadd.f32 %v1779, %v1927
          %v1929 = vpop.f32.mrb[0].mxu0
          %1930 = vmatprep.mubr.f32.mxu0 0.0
          %1931 = vmatmul.mubr.f32.gmra.mrb[0].mxu0 %v1743
          %v1932 = vpop.f32.mrb[0].mxu0
          %v1933 = vadd.f32 %v1779, %v1932
          %v1934 = vpop.f32.mrb[0].mxu0
          %1935 = vmatprep.mubr.f32.mxu0 0.0
          %1936 = vmatmul.mubr.f32.gmra.mrb[0].mxu0 %v1744
          %v1937 = vpop.f32.mrb[0].mxu0
          %v1938 = vadd.f32 %v1779, %v1937
          %v1939 = vpop.f32.mrb[0].mxu0
          %1940 = vmatprep.mubr.f32.mxu0 0.0
          %1941 = vmatmul.mubr.f32.gmra.mrb[0].mxu0 %v1745
          %v1942 = vpop.f32.mrb[0].mxu0
          %v1943 = vadd.f32 %v1779, %v1942
          %v1944 = vpop.f32.mrb[0].mxu0
          %1945 = vmatprep.mubr.f32.mxu0 0.0
          %1946 = vmatmul.mubr.f32.gmra.mrb[0].mxu0 %v1746
          %v1947 = vpop.f32.mrb[0].mxu0
          %v1948 = vadd.f32 %v1779, %v1947
          %v1949 = vpop.f32.mrb[0].mxu0
          %1950 = vmatprep.mubr.f32.mxu0 0.0
          %1951 = vmatmul.mubr.f32.gmra.mrb[0].mxu0 %v1747
          %v1952 = vpop.f32.mrb[0].mxu0
          %v1953 = vadd.f32 %v1779, %v1952
          %v1954 = vpop.f32.mrb[0].mxu0
          %1955 = vmatprep.mubr.f32.mxu0 0.0
          %1956 = vmatmul.mubr.f32.gmra.mrb[0].mxu0 %v1748
          %v1957 = vpop.f32.mrb[0].mxu0
          %v1958 = vadd.f32 %v1779, %v1957
          %v1959 = vpop.f32.mrb[0].mxu0
          %1960 = vmatprep.mubr.f32.mxu0 0.0
          %1961 = vmatmul.mubr.f32.gmra.mrb[0].mxu0 %v1749
          %v1962 = vpop.f32.mrb[0].mxu0
          %v1963 = vadd.f32 %v1779, %v1962
          %v1964 = vpop.f32.mrb[0].mxu0
          %1965 = vmatprep.mubr.f32.mxu0 0.0
          %1966 = vmatmul.mubr.f32.gmra.mrb[0].mxu0 %v1750
          %v1967 = vpop.f32.mrb[0].mxu0
          %v1968 = vadd.f32 %v1779, %v1967
          %v1969 = vpop.f32.mrb[0].mxu0
          %1970 = vmatprep.mubr.f32.mxu0 0.0
          %1971 = vmatmul.mubr.f32.gmra.mrb[0].mxu0 %v1751
          %v1972 = vpop.f32.mrb[0].mxu0
          %v1973 = vadd.f32 %v1779, %v1972
          %v1974 = vpop.f32.mrb[0].mxu0
          %1975 = vmatprep.mubr.f32.mxu0 0.0
          %1976 = vmatmul.mubr.f32.gmra.mrb[0].mxu0 %v1752
          %v1977 = vpop.f32.mrb[0].mxu0
          %v1978 = vadd.f32 %v1779, %v1977
          %v1979 = vpop.f32.mrb[0].mxu0
          %1980 = vmatprep.mubr.f32.mxu0 0.0
          %1981 = vmatmul.mubr.f32.gmra.mrb[0].mxu0 %v1753
          %v1982 = vpop.f32.mrb[0].mxu0
          %v1983 = vadd.f32 %v1779, %v1982
          %v1984 = vpop.f32.mrb[0].mxu0
          %1985 = vmatprep.mubr.f32.mxu0 0.0
          %1986 = vmatmul.mubr.f32.gmra.mrb[0].mxu0 %v1754
          %v1987 = vpop.f32.mrb[0].mxu0
          %v1988 = vadd.f32 %v1779, %v1987
          %v1989 = vpop.f32.mrb[0].mxu0
          %1990 = vmatprep.mubr.f32.mxu0 0.0
          %1991 = vmatmul.mubr.f32.gmra.mrb[0].mxu0 %v1755
          %v1992 = vpop.f32.mrb[0].mxu0
          %v1993 = vadd.f32 %v1779, %v1992
          %v1994 = vpop.f32.mrb[0].mxu0
          %1995 = vmatprep.mubr.f32.mxu0 0.0
          %1996 = vmatmul.mubr.f32.gmra.mrb[0].mxu0 %v1756
          %v1997 = vpop.f32.mrb[0].mxu0
          %v1998 = vadd.f32 %v1779, %v1997
          %v1999 = vpop.f32.mrb[0].mxu0
          %2000 = vmatprep.mubr.f32.mxu0 0.0
          %2001 = vmatmul.mubr.f32.gmra.mrb[0].mxu0 %v1757
          %v2002 = vpop.f32.mrb[0].mxu0
          %v2003 = vadd.f32 %v1779, %v2002
          %v2004 = vpop.f32.mrb[0].mxu0
          %2005 = vdwg.mxu0
          %v2006 = vmax.f32 %v1848, 0.0
          %v2007 = vmax.f32 %v1853, 0.0
          %v2008 = vmax.f32 %v1858, 0.0
          %v2009 = vmax.f32 %v1863, 0.0
          %v2010 = vmax.f32 %v1868, 0.0
          %v2011 = vmax.f32 %v1873, 0.0
          %v2012 = vmax.f32 %v1878, 0.0
          %v2013 = vmax.f32 %v1883, 0.0
          %v2014 = vmax.f32 %v1888, 0.0
          %v2015 = vmax.f32 %v1893, 0.0
          %v2016 = vmax.f32 %v1898, 0.0
          %v2017 = vmax.f32 %v1903, 0.0
          %v2018 = vmax.f32 %v1908, 0.0
          %v2019 = vmax.f32 %v1913, 0.0
          %v2020 = vmax.f32 %v1918, 0.0
          %v2021 = vmax.f32 %v1923, 0.0
          %v2022 = vmax.f32 %v1928, 0.0
          %v2023 = vmax.f32 %v1933, 0.0
          %v2024 = vmax.f32 %v1938, 0.0
          %v2025 = vmax.f32 %v1943, 0.0
          %v2026 = vmax.f32 %v1948, 0.0
          %v2027 = vmax.f32 %v1953, 0.0
          %v2028 = vmax.f32 %v1958, 0.0
          %v2029 = vmax.f32 %v1963, 0.0
          %v2030 = vmax.f32 %v1968, 0.0
          %v2031 = vmax.f32 %v1973, 0.0
          %v2032 = vmax.f32 %v1978, 0.0
          %v2033 = vmax.f32 %v1983, 0.0
          %v2034 = vmax.f32 %v1988, 0.0
          %v2035 = vmax.f32 %v1993, 0.0
          %v2036 = vmax.f32 %v1998, 0.0
          %v2037 = vmax.f32 %v2003, 0.0
          %v2038 = vld [vmem:[#allocation14] sm:$0xff]
          %v2039 = vld [vmem:[#allocation14 + $0x8] sm:$0xff]
          %v2040 = vld [vmem:[#allocation14 + $0x10] sm:$0xff]
          %v2041 = vld [vmem:[#allocation14 + $0x18] sm:$0xff]
          %v2042 = vld [vmem:[#allocation14 + $0x20] sm:$0xff]
          %v2043 = vld [vmem:[#allocation14 + $0x28] sm:$0xff]
          %v2044 = vld [vmem:[#allocation14 + $0x30] sm:$0xff]
          %v2045 = vld [vmem:[#allocation14 + $0x38] sm:$0xff]
          %v2046 = vld [vmem:[#allocation14 + $0x40] sm:$0xff]
          %v2047 = vld [vmem:[#allocation14 + $0x48] sm:$0xff]
          %v2048 = vld [vmem:[#allocation14 + $0x50] sm:$0xff]
          %v2049 = vld [vmem:[#allocation14 + $0x58] sm:$0xff]
          %v2050 = vld [vmem:[#allocation14 + $0x60] sm:$0xff]
          %v2051 = vld [vmem:[#allocation14 + $0x68] sm:$0xff]
          %v2052 = vld [vmem:[#allocation14 + $0x70] sm:$0xff]
          %v2053 = vld [vmem:[#allocation14 + $0x78] sm:$0xff]
          %v2054 = vld [vmem:[#allocation15] sm:$0x1]
          %v2056 = vlaneseq
          %v2057 = vshrl.u32 %v2056, 7
          %v2058 = vsub.s32 0, %v2057
          %v2059 = vrot.slane %v2054, %v2058
          %2061 = vmatprep.subr.mxu0 0.0
          %2062 = vmatpush1.msra.mxu0 %v2038
          %2063 = vmatprep.subr.mxu0 0.0
          %2064 = vmatpush1.msra.mxu0 %v2039
          %2065 = vmatprep.subr.mxu0 0.0
          %2066 = vmatpush1.msra.mxu0 %v2040
          %2067 = vmatprep.subr.mxu0 0.0
          %2068 = vmatpush1.msra.mxu0 %v2041
          %2069 = vmatprep.subr.mxu0 0.0
          %2070 = vmatpush1.msra.mxu0 %v2042
          %2071 = vmatprep.subr.mxu0 0.0
          %2072 = vmatpush1.msra.mxu0 %v2043
          %2073 = vmatprep.subr.mxu0 0.0
          %2074 = vmatpush1.msra.mxu0 %v2044
          %2075 = vmatprep.subr.mxu0 0.0
          %2076 = vmatpush1.msra.mxu0 %v2045
          %2077 = vmatprep.subr.mxu0 0.0
          %2078 = vmatpush1.msra.mxu0 %v2046
          %2079 = vmatprep.subr.mxu0 0.0
          %2080 = vmatpush1.msra.mxu0 %v2047
          %2081 = vmatprep.subr.mxu0 0.0
          %2082 = vmatpush1.msra.mxu0 %v2048
          %2083 = vmatprep.subr.mxu0 0.0
          %2084 = vmatpush1.msra.mxu0 %v2049
          %2085 = vmatprep.subr.mxu0 0.0
          %2086 = vmatpush1.msra.mxu0 %v2050
          %2087 = vmatprep.subr.mxu0 0.0
          %2088 = vmatpush1.msra.mxu0 %v2051
          %2089 = vmatprep.subr.mxu0 0.0
          %2090 = vmatpush1.msra.mxu0 %v2052
          %2091 = vmatprep.subr.mxu0 0.0
          %2092 = vmatpush1.msra.mxu0 %v2053
          %2093 = vmatprep.subr.mxu0 0.0
          %2094 = vmatpush1.msra.mxu0 0.0
          %2095 = vmatprep.subr.mxu0 0.0
          %2096 = vmatpush1.msra.mxu0 0.0
          %2097 = vmatprep.subr.mxu0 0.0
          %2098 = vmatpush1.msra.mxu0 0.0
          %2099 = vmatprep.subr.mxu0 0.0
          %2100 = vmatpush1.msra.mxu0 0.0
          %2101 = vmatprep.subr.mxu0 0.0
          %2102 = vmatpush1.msra.mxu0 0.0
          %2103 = vmatprep.subr.mxu0 0.0
          %2104 = vmatpush1.msra.mxu0 0.0
          %2105 = vmatprep.subr.mxu0 0.0
          %2106 = vmatpush1.msra.mxu0 0.0
          %2107 = vmatprep.subr.mxu0 0.0
          %2108 = vmatpush1.msra.mxu0 0.0
          %2109 = vmatprep.subr.mxu0 0.0
          %2110 = vmatpush1.msra.mxu0 0.0
          %2111 = vmatprep.subr.mxu0 0.0
          %2112 = vmatpush1.msra.mxu0 0.0
          %2113 = vmatprep.subr.mxu0 0.0
          %2114 = vmatpush1.msra.mxu0 0.0
          %2115 = vmatprep.subr.mxu0 0.0
          %2116 = vmatpush1.msra.mxu0 0.0
          %2117 = vmatprep.subr.mxu0 0.0
          %2118 = vmatpush1.msra.mxu0 0.0
          %2119 = vmatprep.subr.mxu0 0.0
          %2120 = vmatpush1.msra.mxu0 0.0
          %2121 = vmatprep.subr.mxu0 0.0
          %2122 = vmatpush1.msra.mxu0 0.0
          %2123 = vmatprep.subr.mxu0 0.0
          %2124 = vmatpush1.msra.mxu0 0.0
          %2125 = vmatprep.mubr.f32.mxu0 0.0
          %2126 = vmatmul.mubr.f32.gmra.mrb[0].mxu0 %v2006
          %v2127 = vpop.f32.mrb[0].mxu0
          %v2128 = vadd.f32 %v2059, %v2127
          %v2129 = vpop.f32.mrb[0].mxu0
          %2130 = vmatprep.mubr.f32.mxu0 0.0
          %2131 = vmatmul.mubr.f32.gmra.mrb[0].mxu0 %v2007
          %v2132 = vpop.f32.mrb[0].mxu0
          %v2133 = vadd.f32 %v2059, %v2132
          %v2134 = vpop.f32.mrb[0].mxu0
          %2135 = vmatprep.mubr.f32.mxu0 0.0
          %2136 = vmatmul.mubr.f32.gmra.mrb[0].mxu0 %v2008
          %v2137 = vpop.f32.mrb[0].mxu0
          %v2138 = vadd.f32 %v2059, %v2137
          %v2139 = vpop.f32.mrb[0].mxu0
          %2140 = vmatprep.mubr.f32.mxu0 0.0
          %2141 = vmatmul.mubr.f32.gmra.mrb[0].mxu0 %v2009
          %v2142 = vpop.f32.mrb[0].mxu0
          %v2143 = vadd.f32 %v2059, %v2142
          %v2144 = vpop.f32.mrb[0].mxu0
          %2145 = vmatprep.mubr.f32.mxu0 0.0
          %2146 = vmatmul.mubr.f32.gmra.mrb[0].mxu0 %v2010
          %v2147 = vpop.f32.mrb[0].mxu0
          %v2148 = vadd.f32 %v2059, %v2147
          %v2149 = vpop.f32.mrb[0].mxu0
          %2150 = vmatprep.mubr.f32.mxu0 0.0
          %2151 = vmatmul.mubr.f32.gmra.mrb[0].mxu0 %v2011
          %v2152 = vpop.f32.mrb[0].mxu0
          %v2153 = vadd.f32 %v2059, %v2152
          %v2154 = vpop.f32.mrb[0].mxu0
          %2155 = vmatprep.mubr.f32.mxu0 0.0
          %2156 = vmatmul.mubr.f32.gmra.mrb[0].mxu0 %v2012
          %v2157 = vpop.f32.mrb[0].mxu0
          %v2158 = vadd.f32 %v2059, %v2157
          %v2159 = vpop.f32.mrb[0].mxu0
          %2160 = vmatprep.mubr.f32.mxu0 0.0
          %2161 = vmatmul.mubr.f32.gmra.mrb[0].mxu0 %v2013
          %v2162 = vpop.f32.mrb[0].mxu0
          %v2163 = vadd.f32 %v2059, %v2162
          %v2164 = vpop.f32.mrb[0].mxu0
          %2165 = vmatprep.mubr.f32.mxu0 0.0
          %2166 = vmatmul.mubr.f32.gmra.mrb[0].mxu0 %v2014
          %v2167 = vpop.f32.mrb[0].mxu0
          %v2168 = vadd.f32 %v2059, %v2167
          %v2169 = vpop.f32.mrb[0].mxu0
          %2170 = vmatprep.mubr.f32.mxu0 0.0
          %2171 = vmatmul.mubr.f32.gmra.mrb[0].mxu0 %v2015
          %v2172 = vpop.f32.mrb[0].mxu0
          %v2173 = vadd.f32 %v2059, %v2172
          %v2174 = vpop.f32.mrb[0].mxu0
          %2175 = vmatprep.mubr.f32.mxu0 0.0
          %2176 = vmatmul.mubr.f32.gmra.mrb[0].mxu0 %v2016
          %v2177 = vpop.f32.mrb[0].mxu0
          %v2178 = vadd.f32 %v2059, %v2177
          %v2179 = vpop.f32.mrb[0].mxu0
          %2180 = vmatprep.mubr.f32.mxu0 0.0
          %2181 = vmatmul.mubr.f32.gmra.mrb[0].mxu0 %v2017
          %v2182 = vpop.f32.mrb[0].mxu0
          %v2183 = vadd.f32 %v2059, %v2182
          %v2184 = vpop.f32.mrb[0].mxu0
          %2185 = vmatprep.mubr.f32.mxu0 0.0
          %2186 = vmatmul.mubr.f32.gmra.mrb[0].mxu0 %v2018
          %v2187 = vpop.f32.mrb[0].mxu0
          %v2188 = vadd.f32 %v2059, %v2187
          %v2189 = vpop.f32.mrb[0].mxu0
          %2190 = vmatprep.mubr.f32.mxu0 0.0
          %2191 = vmatmul.mubr.f32.gmra.mrb[0].mxu0 %v2019
          %v2192 = vpop.f32.mrb[0].mxu0
          %v2193 = vadd.f32 %v2059, %v2192
          %v2194 = vpop.f32.mrb[0].mxu0
          %2195 = vmatprep.mubr.f32.mxu0 0.0
          %2196 = vmatmul.mubr.f32.gmra.mrb[0].mxu0 %v2020
          %v2197 = vpop.f32.mrb[0].mxu0
          %v2198 = vadd.f32 %v2059, %v2197
          %v2199 = vpop.f32.mrb[0].mxu0
          %2200 = vmatprep.mubr.f32.mxu0 0.0
          %2201 = vmatmul.mubr.f32.gmra.mrb[0].mxu0 %v2021
          %v2202 = vpop.f32.mrb[0].mxu0
          %v2203 = vadd.f32 %v2059, %v2202
          %v2204 = vpop.f32.mrb[0].mxu0
          %2205 = vmatprep.mubr.f32.mxu0 0.0
          %2206 = vmatmul.mubr.f32.gmra.mrb[0].mxu0 %v2022
          %v2207 = vpop.f32.mrb[0].mxu0
          %v2208 = vadd.f32 %v2059, %v2207
          %v2209 = vpop.f32.mrb[0].mxu0
          %2210 = vmatprep.mubr.f32.mxu0 0.0
          %2211 = vmatmul.mubr.f32.gmra.mrb[0].mxu0 %v2023
          %v2212 = vpop.f32.mrb[0].mxu0
          %v2213 = vadd.f32 %v2059, %v2212
          %v2214 = vpop.f32.mrb[0].mxu0
          %2215 = vmatprep.mubr.f32.mxu0 0.0
          %2216 = vmatmul.mubr.f32.gmra.mrb[0].mxu0 %v2024
          %v2217 = vpop.f32.mrb[0].mxu0
          %v2218 = vadd.f32 %v2059, %v2217
          %v2219 = vpop.f32.mrb[0].mxu0
          %2220 = vmatprep.mubr.f32.mxu0 0.0
          %2221 = vmatmul.mubr.f32.gmra.mrb[0].mxu0 %v2025
          %v2222 = vpop.f32.mrb[0].mxu0
          %v2223 = vadd.f32 %v2059, %v2222
          %v2224 = vpop.f32.mrb[0].mxu0
          %2225 = vmatprep.mubr.f32.mxu0 0.0
          %2226 = vmatmul.mubr.f32.gmra.mrb[0].mxu0 %v2026
          %v2227 = vpop.f32.mrb[0].mxu0
          %v2228 = vadd.f32 %v2059, %v2227
          %v2229 = vpop.f32.mrb[0].mxu0
          %2230 = vmatprep.mubr.f32.mxu0 0.0
          %2231 = vmatmul.mubr.f32.gmra.mrb[0].mxu0 %v2027
          %v2232 = vpop.f32.mrb[0].mxu0
          %v2233 = vadd.f32 %v2059, %v2232
          %v2234 = vpop.f32.mrb[0].mxu0
          %2235 = vmatprep.mubr.f32.mxu0 0.0
          %2236 = vmatmul.mubr.f32.gmra.mrb[0].mxu0 %v2028
          %v2237 = vpop.f32.mrb[0].mxu0
          %v2238 = vadd.f32 %v2059, %v2237
          %v2239 = vpop.f32.mrb[0].mxu0
          %2240 = vmatprep.mubr.f32.mxu0 0.0
          %2241 = vmatmul.mubr.f32.gmra.mrb[0].mxu0 %v2029
          %v2242 = vpop.f32.mrb[0].mxu0
          %v2243 = vadd.f32 %v2059, %v2242
          %v2244 = vpop.f32.mrb[0].mxu0
          %2245 = vmatprep.mubr.f32.mxu0 0.0
          %2246 = vmatmul.mubr.f32.gmra.mrb[0].mxu0 %v2030
          %v2247 = vpop.f32.mrb[0].mxu0
          %v2248 = vadd.f32 %v2059, %v2247
          %v2249 = vpop.f32.mrb[0].mxu0
          %2250 = vmatprep.mubr.f32.mxu0 0.0
          %2251 = vmatmul.mubr.f32.gmra.mrb[0].mxu0 %v2031
          %v2252 = vpop.f32.mrb[0].mxu0
          %v2253 = vadd.f32 %v2059, %v2252
          %v2254 = vpop.f32.mrb[0].mxu0
          %2255 = vmatprep.mubr.f32.mxu0 0.0
          %2256 = vmatmul.mubr.f32.gmra.mrb[0].mxu0 %v2032
          %v2257 = vpop.f32.mrb[0].mxu0
          %v2258 = vadd.f32 %v2059, %v2257
          %v2259 = vpop.f32.mrb[0].mxu0
          %2260 = vmatprep.mubr.f32.mxu0 0.0
          %2261 = vmatmul.mubr.f32.gmra.mrb[0].mxu0 %v2033
          %v2262 = vpop.f32.mrb[0].mxu0
          %v2263 = vadd.f32 %v2059, %v2262
          %v2264 = vpop.f32.mrb[0].mxu0
          %2265 = vmatprep.mubr.f32.mxu0 0.0
          %2266 = vmatmul.mubr.f32.gmra.mrb[0].mxu0 %v2034
          %v2267 = vpop.f32.mrb[0].mxu0
          %v2268 = vadd.f32 %v2059, %v2267
          %v2269 = vpop.f32.mrb[0].mxu0
          %2270 = vmatprep.mubr.f32.mxu0 0.0
          %2271 = vmatmul.mubr.f32.gmra.mrb[0].mxu0 %v2035
          %v2272 = vpop.f32.mrb[0].mxu0
          %v2273 = vadd.f32 %v2059, %v2272
          %v2274 = vpop.f32.mrb[0].mxu0
          %2275 = vmatprep.mubr.f32.mxu0 0.0
          %2276 = vmatmul.mubr.f32.gmra.mrb[0].mxu0 %v2036
          %v2277 = vpop.f32.mrb[0].mxu0
          %v2278 = vadd.f32 %v2059, %v2277
          %v2279 = vpop.f32.mrb[0].mxu0
          %2280 = vmatprep.mubr.f32.mxu0 0.0
          %2281 = vmatmul.mubr.f32.gmra.mrb[0].mxu0 %v2037
          %v2282 = vpop.f32.mrb[0].mxu0
          %v2283 = vadd.f32 %v2059, %v2282
          %v2284 = vpop.f32.mrb[0].mxu0
          %2285 = vdwg.mxu0
          %v2286 = vmul.f32 %v2128, %v2128
          %v2287 = vmul.f32 %v2133, %v2133
          %v2288 = vmul.f32 %v2138, %v2138
          %v2289 = vmul.f32 %v2143, %v2143
          %v2290 = vmul.f32 %v2148, %v2148
          %v2291 = vmul.f32 %v2153, %v2153
          %v2292 = vmul.f32 %v2158, %v2158
          %v2293 = vmul.f32 %v2163, %v2163
          %v2294 = vmul.f32 %v2168, %v2168
          %v2295 = vmul.f32 %v2173, %v2173
          %v2296 = vmul.f32 %v2178, %v2178
          %v2297 = vmul.f32 %v2183, %v2183
          %v2298 = vmul.f32 %v2188, %v2188
          %v2299 = vmul.f32 %v2193, %v2193
          %v2300 = vmul.f32 %v2198, %v2198
          %v2301 = vmul.f32 %v2203, %v2203
          %v2302 = vmul.f32 %v2208, %v2208
          %v2303 = vmul.f32 %v2213, %v2213
          %v2304 = vmul.f32 %v2218, %v2218
          %v2305 = vmul.f32 %v2223, %v2223
          %v2306 = vmul.f32 %v2228, %v2228
          %v2307 = vmul.f32 %v2233, %v2233
          %v2308 = vmul.f32 %v2238, %v2238
          %v2309 = vmul.f32 %v2243, %v2243
          %v2310 = vmul.f32 %v2248, %v2248
          %v2311 = vmul.f32 %v2253, %v2253
          %v2312 = vmul.f32 %v2258, %v2258
          %v2313 = vmul.f32 %v2263, %v2263
          %v2314 = vmul.f32 %v2268, %v2268
          %v2315 = vmul.f32 %v2273, %v2273
          %v2316 = vmul.f32 %v2278, %v2278
          %v2317 = vmul.f32 %v2283, %v2283
          %2318 = vadd.xlane.f32.xlu0 %v2286
          %v2319 = vpop.xlane.xlu0 %2318
          %2320 = vadd.xlane.f32.xlu0 %v2287
          %v2321 = vpop.xlane.xlu0 %2320
          %2322 = vadd.xlane.f32.xlu0 %v2288
          %v2323 = vpop.xlane.xlu0 %2322
          %2324 = vadd.xlane.f32.xlu0 %v2289
          %v2325 = vpop.xlane.xlu0 %2324
          %2326 = vadd.xlane.f32.xlu0 %v2290
          %v2327 = vpop.xlane.xlu0 %2326
          %2328 = vadd.xlane.f32.xlu0 %v2291
          %v2329 = vpop.xlane.xlu0 %2328
          %2330 = vadd.xlane.f32.xlu0 %v2292
          %v2331 = vpop.xlane.xlu0 %2330
          %2332 = vadd.xlane.f32.xlu0 %v2293
          %v2333 = vpop.xlane.xlu0 %2332
          %2334 = vadd.xlane.f32.xlu0 %v2294
          %v2335 = vpop.xlane.xlu0 %2334
          %2336 = vadd.xlane.f32.xlu0 %v2295
          %v2337 = vpop.xlane.xlu0 %2336
          %2338 = vadd.xlane.f32.xlu0 %v2296
          %v2339 = vpop.xlane.xlu0 %2338
          %2340 = vadd.xlane.f32.xlu0 %v2297
          %v2341 = vpop.xlane.xlu0 %2340
          %2342 = vadd.xlane.f32.xlu0 %v2298
          %v2343 = vpop.xlane.xlu0 %2342
          %2344 = vadd.xlane.f32.xlu0 %v2299
          %v2345 = vpop.xlane.xlu0 %2344
          %2346 = vadd.xlane.f32.xlu0 %v2300
          %v2347 = vpop.xlane.xlu0 %2346
          %2348 = vadd.xlane.f32.xlu0 %v2301
          %v2349 = vpop.xlane.xlu0 %2348
          %2350 = vadd.xlane.f32.xlu0 %v2302
          %v2351 = vpop.xlane.xlu0 %2350
          %2352 = vadd.xlane.f32.xlu0 %v2303
          %v2353 = vpop.xlane.xlu0 %2352
          %2354 = vadd.xlane.f32.xlu0 %v2304
          %v2355 = vpop.xlane.xlu0 %2354
          %2356 = vadd.xlane.f32.xlu0 %v2305
          %v2357 = vpop.xlane.xlu0 %2356
          %2358 = vadd.xlane.f32.xlu0 %v2306
          %v2359 = vpop.xlane.xlu0 %2358
          %2360 = vadd.xlane.f32.xlu0 %v2307
          %v2361 = vpop.xlane.xlu0 %2360
          %2362 = vadd.xlane.f32.xlu0 %v2308
          %v2363 = vpop.xlane.xlu0 %2362
          %2364 = vadd.xlane.f32.xlu0 %v2309
          %v2365 = vpop.xlane.xlu0 %2364
          %2366 = vadd.xlane.f32.xlu0 %v2310
          %v2367 = vpop.xlane.xlu0 %2366
          %2368 = vadd.xlane.f32.xlu0 %v2311
          %v2369 = vpop.xlane.xlu0 %2368
          %2370 = vadd.xlane.f32.xlu0 %v2312
          %v2371 = vpop.xlane.xlu0 %2370
          %2372 = vadd.xlane.f32.xlu0 %v2313
          %v2373 = vpop.xlane.xlu0 %2372
          %2374 = vadd.xlane.f32.xlu0 %v2314
          %v2375 = vpop.xlane.xlu0 %2374
          %2376 = vadd.xlane.f32.xlu0 %v2315
          %v2377 = vpop.xlane.xlu0 %2376
          %2378 = vadd.xlane.f32.xlu0 %v2316
          %v2379 = vpop.xlane.xlu0 %2378
          %2380 = vadd.xlane.f32.xlu0 %v2317
          %v2381 = vpop.xlane.xlu0 %2380
          %v2382 = vmax.f32 %v2319, 1e-16
          %v2383 = vmax.f32 %v2321, 1e-16
          %v2384 = vmax.f32 %v2323, 1e-16
          %v2385 = vmax.f32 %v2325, 1e-16
          %v2386 = vmax.f32 %v2327, 1e-16
          %v2387 = vmax.f32 %v2329, 1e-16
          %v2388 = vmax.f32 %v2331, 1e-16
          %v2389 = vmax.f32 %v2333, 1e-16
          %v2390 = vmax.f32 %v2335, 1e-16
          %v2391 = vmax.f32 %v2337, 1e-16
          %v2392 = vmax.f32 %v2339, 1e-16
          %v2393 = vmax.f32 %v2341, 1e-16
          %v2394 = vmax.f32 %v2343, 1e-16
          %v2395 = vmax.f32 %v2345, 1e-16
          %v2396 = vmax.f32 %v2347, 1e-16
          %v2397 = vmax.f32 %v2349, 1e-16
          %v2398 = vmax.f32 %v2351, 1e-16
          %v2399 = vmax.f32 %v2353, 1e-16
          %v2400 = vmax.f32 %v2355, 1e-16
          %v2401 = vmax.f32 %v2357, 1e-16
          %v2402 = vmax.f32 %v2359, 1e-16
          %v2403 = vmax.f32 %v2361, 1e-16
          %v2404 = vmax.f32 %v2363, 1e-16
          %v2405 = vmax.f32 %v2365, 1e-16
          %v2406 = vmax.f32 %v2367, 1e-16
          %v2407 = vmax.f32 %v2369, 1e-16
          %v2408 = vmax.f32 %v2371, 1e-16
          %v2409 = vmax.f32 %v2373, 1e-16
          %v2410 = vmax.f32 %v2375, 1e-16
          %v2411 = vmax.f32 %v2377, 1e-16
          %v2412 = vmax.f32 %v2379, 1e-16
          %v2413 = vmax.f32 %v2381, 1e-16
          %v2414 = vrsqrt.pop %v2382
          %v2415 = vrsqrt.pop %v2383
          %v2416 = vrsqrt.pop %v2384
          %v2417 = vrsqrt.pop %v2385
          %v2418 = vrsqrt.pop %v2386
          %v2419 = vrsqrt.pop %v2387
          %v2420 = vrsqrt.pop %v2388
          %v2421 = vrsqrt.pop %v2389
          %v2422 = vrsqrt.pop %v2390
          %v2423 = vrsqrt.pop %v2391
          %v2424 = vrsqrt.pop %v2392
          %v2425 = vrsqrt.pop %v2393
          %v2426 = vrsqrt.pop %v2394
          %v2427 = vrsqrt.pop %v2395
          %v2428 = vrsqrt.pop %v2396
          %v2429 = vrsqrt.pop %v2397
          %v2430 = vrsqrt.pop %v2398
          %v2431 = vrsqrt.pop %v2399
          %v2432 = vrsqrt.pop %v2400
          %v2433 = vrsqrt.pop %v2401
          %v2434 = vrsqrt.pop %v2402
          %v2435 = vrsqrt.pop %v2403
          %v2436 = vrsqrt.pop %v2404
          %v2437 = vrsqrt.pop %v2405
          %v2438 = vrsqrt.pop %v2406
          %v2439 = vrsqrt.pop %v2407
          %v2440 = vrsqrt.pop %v2408
          %v2441 = vrsqrt.pop %v2409
          %v2442 = vrsqrt.pop %v2410
          %v2443 = vrsqrt.pop %v2411
          %v2444 = vrsqrt.pop %v2412
          %v2445 = vrsqrt.pop %v2413
          %v2446 = vmul.f32 %v2128, %v2414
          %v2447 = vmul.f32 %v2133, %v2415
          %v2448 = vmul.f32 %v2138, %v2416
          %v2449 = vmul.f32 %v2143, %v2417
          %v2450 = vmul.f32 %v2148, %v2418
          %v2451 = vmul.f32 %v2153, %v2419
          %v2452 = vmul.f32 %v2158, %v2420
          %v2453 = vmul.f32 %v2163, %v2421
          %v2454 = vmul.f32 %v2168, %v2422
          %v2455 = vmul.f32 %v2173, %v2423
          %v2456 = vmul.f32 %v2178, %v2424
          %v2457 = vmul.f32 %v2183, %v2425
          %v2458 = vmul.f32 %v2188, %v2426
          %v2459 = vmul.f32 %v2193, %v2427
          %v2460 = vmul.f32 %v2198, %v2428
          %v2461 = vmul.f32 %v2203, %v2429
          %v2462 = vmul.f32 %v2208, %v2430
          %v2463 = vmul.f32 %v2213, %v2431
          %v2464 = vmul.f32 %v2218, %v2432
          %v2465 = vmul.f32 %v2223, %v2433
          %v2466 = vmul.f32 %v2228, %v2434
          %v2467 = vmul.f32 %v2233, %v2435
          %v2468 = vmul.f32 %v2238, %v2436
          %v2469 = vmul.f32 %v2243, %v2437
          %v2470 = vmul.f32 %v2248, %v2438
          %v2471 = vmul.f32 %v2253, %v2439
          %v2472 = vmul.f32 %v2258, %v2440
          %v2473 = vmul.f32 %v2263, %v2441
          %v2474 = vmul.f32 %v2268, %v2442
          %v2475 = vmul.f32 %v2273, %v2443
          %v2476 = vmul.f32 %v2278, %v2444
          %v2477 = vmul.f32 %v2283, %v2445
          %v2478 = vpack.c.bf16 %v2447, %v2446
          %v2479 = vpack.c.bf16 %v2449, %v2448
          %v2480 = vpack.c.bf16 %v2451, %v2450
          %v2481 = vpack.c.bf16 %v2453, %v2452
          %v2482 = vpack.c.bf16 %v2455, %v2454
          %v2483 = vpack.c.bf16 %v2457, %v2456
          %v2484 = vpack.c.bf16 %v2459, %v2458
          %v2485 = vpack.c.bf16 %v2461, %v2460
          %v2486 = vpack.c.bf16 %v2463, %v2462
          %v2487 = vpack.c.bf16 %v2465, %v2464
          %v2488 = vpack.c.bf16 %v2467, %v2466
          %v2489 = vpack.c.bf16 %v2469, %v2468
          %v2490 = vpack.c.bf16 %v2471, %v2470
          %v2491 = vpack.c.bf16 %v2473, %v2472
          %v2492 = vpack.c.bf16 %v2475, %v2474
          %v2493 = vpack.c.bf16 %v2477, %v2476
          %v2510 = vunpack.c.l.b16 %v2478
          %v2511 = vunpack.c.h.b16 %v2478
          %v2512 = vunpack.c.l.b16 %v2479
          %v2513 = vunpack.c.h.b16 %v2479
          %v2514 = vunpack.c.l.b16 %v2480
          %v2515 = vunpack.c.h.b16 %v2480
          %v2516 = vunpack.c.l.b16 %v2481
          %v2517 = vunpack.c.h.b16 %v2481
          %v2518 = vunpack.c.l.b16 %v2482
          %v2519 = vunpack.c.h.b16 %v2482
          %v2520 = vunpack.c.l.b16 %v2483
          %v2521 = vunpack.c.h.b16 %v2483
          %v2522 = vunpack.c.l.b16 %v2484
          %v2523 = vunpack.c.h.b16 %v2484
          %v2524 = vunpack.c.l.b16 %v2485
          %v2525 = vunpack.c.h.b16 %v2485
          %v2526 = vunpack.c.l.b16 %v2486
          %v2527 = vunpack.c.h.b16 %v2486
          %v2528 = vunpack.c.l.b16 %v2487
          %v2529 = vunpack.c.h.b16 %v2487
          %v2530 = vunpack.c.l.b16 %v2488
          %v2531 = vunpack.c.h.b16 %v2488
          %v2532 = vunpack.c.l.b16 %v2489
          %v2533 = vunpack.c.h.b16 %v2489
          %v2534 = vunpack.c.l.b16 %v2490
          %v2535 = vunpack.c.h.b16 %v2490
          %v2536 = vunpack.c.l.b16 %v2491
          %v2537 = vunpack.c.h.b16 %v2491
          %v2538 = vunpack.c.l.b16 %v2492
          %v2539 = vunpack.c.h.b16 %v2492
          %v2540 = vunpack.c.l.b16 %v2493
          %v2541 = vunpack.c.h.b16 %v2493
          %v2542 = vpack.c.b16 %v2510, %v2510
          %v2543 = vpack.c.b16 %v2511, %v2511
          %v2544 = vpack.c.b16 %v2512, %v2512
          %v2545 = vpack.c.b16 %v2513, %v2513
          %v2546 = vpack.c.b16 %v2514, %v2514
          %v2547 = vpack.c.b16 %v2515, %v2515
          %v2548 = vpack.c.b16 %v2516, %v2516
          %v2549 = vpack.c.b16 %v2517, %v2517
          %v2550 = vpack.c.b16 %v2518, %v2518
          %v2551 = vpack.c.b16 %v2519, %v2519
          %v2552 = vpack.c.b16 %v2520, %v2520
          %v2553 = vpack.c.b16 %v2521, %v2521
          %v2554 = vpack.c.b16 %v2522, %v2522
          %v2555 = vpack.c.b16 %v2523, %v2523
          %v2556 = vpack.c.b16 %v2524, %v2524
          %v2557 = vpack.c.b16 %v2525, %v2525
          %v2558 = vpack.c.b16 %v2526, %v2526
          %v2559 = vpack.c.b16 %v2527, %v2527
          %v2560 = vpack.c.b16 %v2528, %v2528
          %v2561 = vpack.c.b16 %v2529, %v2529
          %v2562 = vpack.c.b16 %v2530, %v2530
          %v2563 = vpack.c.b16 %v2531, %v2531
          %v2564 = vpack.c.b16 %v2532, %v2532
          %v2565 = vpack.c.b16 %v2533, %v2533
          %v2566 = vpack.c.b16 %v2534, %v2534
          %v2567 = vpack.c.b16 %v2535, %v2535
          %v2568 = vpack.c.b16 %v2536, %v2536
          %v2569 = vpack.c.b16 %v2537, %v2537
          %v2570 = vpack.c.b16 %v2538, %v2538
          %v2571 = vpack.c.b16 %v2539, %v2539
          %v2572 = vpack.c.b16 %v2540, %v2540
          %v2573 = vpack.c.b16 %v2541, %v2541
          %2606 = vst [vmem:[%s436] sm:$0xf] %v2542
          %2607 = vst [vmem:[%s436 + $0x4] sm:$0xf] %v2543
          %2608 = vst [vmem:[%s436 + $0x8] sm:$0xf] %v2544
          %2609 = vst [vmem:[%s436 + $0xc] sm:$0xf] %v2545
          %2610 = vst [vmem:[%s436 + $0x10] sm:$0xf] %v2546
          %2611 = vst [vmem:[%s436 + $0x14] sm:$0xf] %v2547
          %2612 = vst [vmem:[%s436 + $0x18] sm:$0xf] %v2548
          %2613 = vst [vmem:[%s436 + $0x1c] sm:$0xf] %v2549
          %2614 = vst [vmem:[%s436 + $0x20] sm:$0xf] %v2550
          %2615 = vst [vmem:[%s436 + $0x24] sm:$0xf] %v2551
          %2616 = vst [vmem:[%s436 + $0x28] sm:$0xf] %v2552
          %2617 = vst [vmem:[%s436 + $0x2c] sm:$0xf] %v2553
          %2618 = vst [vmem:[%s436 + $0x30] sm:$0xf] %v2554
          %2619 = vst [vmem:[%s436 + $0x34] sm:$0xf] %v2555
          %2620 = vst [vmem:[%s436 + $0x38] sm:$0xf] %v2556
          %2621 = vst [vmem:[%s436 + $0x3c] sm:$0xf] %v2557
          %2622 = vst [vmem:[%s436 + $0x40] sm:$0xf] %v2558
          %2623 = vst [vmem:[%s436 + $0x44] sm:$0xf] %v2559
          %2624 = vst [vmem:[%s436 + $0x48] sm:$0xf] %v2560
          %2625 = vst [vmem:[%s436 + $0x4c] sm:$0xf] %v2561
          %2626 = vst [vmem:[%s436 + $0x50] sm:$0xf] %v2562
          %2627 = vst [vmem:[%s436 + $0x54] sm:$0xf] %v2563
          %2628 = vst [vmem:[%s436 + $0x58] sm:$0xf] %v2564
          %2629 = vst [vmem:[%s436 + $0x5c] sm:$0xf] %v2565
          %2630 = vst [vmem:[%s436 + $0x60] sm:$0xf] %v2566
          %2631 = vst [vmem:[%s436 + $0x64] sm:$0xf] %v2567
          %2632 = vst [vmem:[%s436 + $0x68] sm:$0xf] %v2568
          %2633 = vst [vmem:[%s436 + $0x6c] sm:$0xf] %v2569
          %2634 = vst [vmem:[%s436 + $0x70] sm:$0xf] %v2570
          %2635 = vst [vmem:[%s436 + $0x74] sm:$0xf] %v2571
          %2636 = vst [vmem:[%s436 + $0x78] sm:$0xf] %v2572
          %2637 = vst [vmem:[%s436 + $0x7c] sm:$0xf] %v2573
        $region92: #{weighted_common_neighbors_predictor.2} parent=51 // pred_fallthru
          _
        %s2638 = sand.u32 %s224, 1
        %s2639 = scalar_lea.sflag [#allocation5], %s2638
        %s2640 = sand.u32 %s224, 1
        %s2641 = smul.addr %s2640, 128
        %s2642 = scalar_lea.vmem [#allocation17], %s2641
        // Predicated region
        $region93: #{weighted_common_neighbors_predictor.2} parent=51 // pred_check
          %p2643 = pneg %p234
        $region94: #{weighted_common_neighbors_predictor.2} parent=51 // pred_check_branch
          %2645 = sbr.rel (%p2643) target = $region96
        $region95: #{weighted_common_neighbors_predictor.2} parent=51 // pred_region
          %s2646 = smul.u32 32, %s33
          %s2648 = ssub.s32 2048, 2048
          %2649 = vsyncadd %s2639, %s2648
          %s2650 = smul.addr %s2646, 64
          %s2651 = scalar_lea.hbm %s8, %s2650
          %s2652 = sshll.u32 %s2642, 4
          %s2653 = int_to_ptr.vmem [resolvable:$true] %s2652
          %2658 = dma.vmem_to_hbm [thread:$0]  %s2653, 2048, %s2651, %s2639, 64, 64, 4
        $region96: #{weighted_common_neighbors_predictor.2} parent=51 // pred_fallthru
          _
      $region52: #{weighted_common_neighbors_predictor.2} parent=5 // pred_fallthru
        _
      %p2659 = scmp.le.s32.totalorder 2, %s24
      // Predicated region
      $region97: #{weighted_common_neighbors_predictor.2} parent=5 // pred_check
        %p2660 = pneg %p2659
      $region98: #{weighted_common_neighbors_predictor.2} parent=5 // pred_check_branch
        %2662 = sbr.rel (%p2660) target = $region100
      $region99: #{weighted_common_neighbors_predictor.2} parent=5 // pred_region
        %s2663 = ssub.s32 %s24, 2
        // Predicated region
        $region101: #{weighted_common_neighbors_predictor.2} parent=99 // pred_check
          %p2664 = pneg %p240
        $region102: #{weighted_common_neighbors_predictor.2} parent=99 // pred_check_branch
          %2666 = sbr.rel (%p2664) target = $region104
        $region103: #{weighted_common_neighbors_predictor.2} parent=99 // pred_region
          %s2667 = sand.u32 %s225, 1
          %s2668 = scalar_lea.sflag [#allocation5], %s2667
          %s2669 = sand.u32 %s225, 1
          %s2670 = smul.addr %s2669, 128
          %s2671 = scalar_lea.vmem [#allocation17], %s2670
          %2672 = dma.done %s2668, 2048
        $region104: #{weighted_common_neighbors_predictor.2} parent=99 // pred_fallthru
          _
      $region100: #{weighted_common_neighbors_predictor.2} parent=5 // pred_fallthru
        _
    $region6: #{weighted_common_neighbors_predictor.2} parent=1 // loop_footer
      %s28 = sadd.s32 1, %s24
    $region7: #{weighted_common_neighbors_predictor.2} parent=1 // loop_footer_branch
      %23 = sbr.rel target = $region3
    $region8: #{weighted_common_neighbors_predictor.2} parent=1 // loop_exit
      _
    %2673 = vsyncpa [#allocation4], 1
    %s2674 = scalar_lea.sflag [#allocation4], 1
    %2675 = vsyncpa %s2674, 1
    %2676 = vsyncpa [#allocation7], 1
    %2677 = vsyncpa [#allocation10], 1
    %2678 = vsyncpa [#allocation13], 1
    %2679 = vsyncpa [#allocation16], 1
    %2680 = vsyncpa [#allocation5], 1
    %s2681 = scalar_lea.sflag [#allocation5], 1
    %2682 = vsyncpa %s2681, 1

// kernel: weighted_common_neighbors_predictor.3
$region0: #{weighted_common_neighbors_predictor.3}
  #allocation0 [shape = 'u32[]', space=smem, size = 0x4, offset = 0x4, fixed_abs, tag = 'smem constant byte address 0x4 - core index']
  #allocation1 [shape = 'u32[144,128]{1,0:T(1,128)}', space=vmem, size = 0x12000, scoped, tag = 'internal scratch']
  #allocation2 [shape = 'f32[1,128]{1,0:T(1,128)}', space=vmem, size = 0x200, scoped, tag = 'scratch operand']
  %s0 = inlined_call_operand.hbm [shape: bf16[128,128], index: 0, kind: input, shape index: {}]
  %s1 = inlined_call_operand.hbm [shape: bf16[128,128], index: 1, kind: input, shape index: {}]
  %s2 = inlined_call_operand.hbm [shape: s8[128,512], index: 2, kind: input, shape index: {}]
  %s3 = inlined_call_operand.hbm [shape: s8[128,512], index: 3, kind: input, shape index: {}]
  %s4 = inlined_call_operand.hbm [shape: bf16[512,128], index: 4, kind: input, shape index: {}]
  %s5 = inlined_call_operand.hbm [shape: f32[1,128], index: 5, kind: output, shape index: {}]
  %s6 = sld [smem:[#allocation0]]
  $region58: #{weighted_common_neighbors_predictor.3} parent=0
    _
  %s8 = ssub.s32 1, %s6
  %s9 = scalar_select 0, %s8, %s6
  $region1: #{weighted_common_neighbors_predictor.3} parent=0
    #allocation3 [shape = 'u8[32768]{0}', space=vmem, size = 0x8000, scoped, tag = 'input window, operand 0, single buffered']
    #allocation4 [shape = 's32[1]{0}', space=sflag, size = 0x4, scoped, tag = 'scoped memory for weighted_common_neighbors_predictor.3']
    #allocation5 [shape = 's32[1]{0}', space=sflag, size = 0x4, scoped, tag = 'scoped memory for weighted_common_neighbors_predictor.3']
    #allocation6 [shape = 'u8[32768]{0}', space=vmem, size = 0x8000, scoped, tag = 'input window, operand 1, single buffered']
    #allocation7 [shape = 's32[1]{0}', space=sflag, size = 0x4, scoped, tag = 'scoped memory for weighted_common_neighbors_predictor.3']
    #allocation8 [shape = 'u8[65536]{0}', space=vmem, size = 0x10000, scoped, tag = 'input window, operand 2, single buffered']
    #allocation9 [shape = 'u8[65536]{0}', space=vmem, size = 0x10000, scoped, tag = 'input window, operand 3, single buffered']
    #allocation10 [shape = 's32[1]{0}', space=sflag, size = 0x4, scoped, tag = 'scoped memory for weighted_common_neighbors_predictor.3']
    #allocation11 [shape = 'u8[131072]{0}', space=vmem, size = 0x20000, scoped, tag = 'input window, operand 4, single buffered']
    #allocation12 [shape = 'u8[512]{0}', space=vmem, size = 0x400, scoped, tag = 'output window, operand 0, single buffered']
    %10 = vsyncpa [#allocation4], 0
    %11 = vsyncpa [#allocation7], 0
    %12 = vsyncpa [#allocation10], 0
    %13 = vsyncpa [#allocation5], 0
    // Predicated region
    $region2: #{weighted_common_neighbors_predictor.3} parent=1 // pred_check
      _
    $region3: #{weighted_common_neighbors_predictor.3} parent=1 // pred_check_branch
      %15 = sbr.rel (0) target = $region5
    $region4: #{weighted_common_neighbors_predictor.3} parent=1 // pred_region
      %s17 = ssub.s32 1024, 1024
      %18 = vsyncadd [#allocation4], %s17
      %s19 = sshll.u32 [#allocation3], 4
      %s20 = int_to_ptr.vmem [resolvable:$true] %s19
      %25 = dma.hbm_to_vmem [thread:$0]  %s0, 1024, %s20, [#allocation4], 64, 64, 4
    $region5: #{weighted_common_neighbors_predictor.3} parent=1 // pred_fallthru
      _
    // Predicated region
    $region6: #{weighted_common_neighbors_predictor.3} parent=1 // pred_check
      _
    $region7: #{weighted_common_neighbors_predictor.3} parent=1 // pred_check_branch
      %27 = sbr.rel (0) target = $region9
    $region8: #{weighted_common_neighbors_predictor.3} parent=1 // pred_region
      %s29 = ssub.s32 1024, 1024
      %30 = vsyncadd [#allocation7], %s29
      %s31 = sshll.u32 [#allocation6], 4
      %s32 = int_to_ptr.vmem [resolvable:$true] %s31
      %37 = dma.hbm_to_vmem [thread:$0]  %s1, 1024, %s32, [#allocation7], 64, 64, 4
    $region9: #{weighted_common_neighbors_predictor.3} parent=1 // pred_fallthru
      _
    // Predicated region
    $region10: #{weighted_common_neighbors_predictor.3} parent=1 // pred_check
      _
    $region11: #{weighted_common_neighbors_predictor.3} parent=1 // pred_check_branch
      %39 = sbr.rel (0) target = $region13
    $region12: #{weighted_common_neighbors_predictor.3} parent=1 // pred_region
      %s41 = ssub.s32 2048, 2048
      %42 = vsyncadd [#allocation7], %s41
      %s43 = sshll.u32 [#allocation8], 4
      %s44 = int_to_ptr.vmem [resolvable:$true] %s43
      %49 = dma.hbm_to_vmem [thread:$0]  %s2, 2048, %s44, [#allocation7], 512, 512, 32
    $region13: #{weighted_common_neighbors_predictor.3} parent=1 // pred_fallthru
      _
    // Predicated region
    $region14: #{weighted_common_neighbors_predictor.3} parent=1 // pred_check
      _
    $region15: #{weighted_common_neighbors_predictor.3} parent=1 // pred_check_branch
      %51 = sbr.rel (0) target = $region17
    $region16: #{weighted_common_neighbors_predictor.3} parent=1 // pred_region
      %s53 = ssub.s32 2048, 2048
      %54 = vsyncadd [#allocation10], %s53
      %s55 = sshll.u32 [#allocation9], 4
      %s56 = int_to_ptr.vmem [resolvable:$true] %s55
      %61 = dma.hbm_to_vmem [thread:$0]  %s3, 2048, %s56, [#allocation10], 512, 512, 32
    $region17: #{weighted_common_neighbors_predictor.3} parent=1 // pred_fallthru
      _
    // Predicated region
    $region18: #{weighted_common_neighbors_predictor.3} parent=1 // pred_check
      _
    $region19: #{weighted_common_neighbors_predictor.3} parent=1 // pred_check_branch
      %63 = sbr.rel (0) target = $region21
    $region20: #{weighted_common_neighbors_predictor.3} parent=1 // pred_region
      %s65 = ssub.s32 4096, 4096
      %66 = vsyncadd [#allocation10], %s65
      %s67 = sshll.u32 [#allocation11], 4
      %s68 = int_to_ptr.vmem [resolvable:$true] %s67
      %73 = dma.hbm_to_vmem [thread:$0]  %s4, 4096, %s68, [#allocation10], 64, 64, 4
    $region21: #{weighted_common_neighbors_predictor.3} parent=1 // pred_fallthru
      _
    // Predicated region
    $region22: #{weighted_common_neighbors_predictor.3} parent=1 // pred_check
      _
    $region23: #{weighted_common_neighbors_predictor.3} parent=1 // pred_check_branch
      %75 = sbr.rel (0) target = $region25
    $region24: #{weighted_common_neighbors_predictor.3} parent=1 // pred_region
      %76 = dma.done [#allocation4], 1024
    $region25: #{weighted_common_neighbors_predictor.3} parent=1 // pred_fallthru
      _
    // Predicated region
    $region26: #{weighted_common_neighbors_predictor.3} parent=1 // pred_check
      _
    $region27: #{weighted_common_neighbors_predictor.3} parent=1 // pred_check_branch
      %78 = sbr.rel (0) target = $region29
    $region28: #{weighted_common_neighbors_predictor.3} parent=1 // pred_region
      %79 = dma.done [#allocation7], 1024
    $region29: #{weighted_common_neighbors_predictor.3} parent=1 // pred_fallthru
      _
    // Predicated region
    $region30: #{weighted_common_neighbors_predictor.3} parent=1 // pred_check
      _
    $region31: #{weighted_common_neighbors_predictor.3} parent=1 // pred_check_branch
      %81 = sbr.rel (0) target = $region33
    $region32: #{weighted_common_neighbors_predictor.3} parent=1 // pred_region
      %82 = dma.done [#allocation7], 2048
    $region33: #{weighted_common_neighbors_predictor.3} parent=1 // pred_fallthru
      _
    // Predicated region
    $region34: #{weighted_common_neighbors_predictor.3} parent=1 // pred_check
      _
    $region35: #{weighted_common_neighbors_predictor.3} parent=1 // pred_check_branch
      %84 = sbr.rel (0) target = $region37
    $region36: #{weighted_common_neighbors_predictor.3} parent=1 // pred_region
      %85 = dma.done [#allocation10], 2048
    $region37: #{weighted_common_neighbors_predictor.3} parent=1 // pred_fallthru
      _
    // Predicated region
    $region38: #{weighted_common_neighbors_predictor.3} parent=1 // pred_check
      _
    $region39: #{weighted_common_neighbors_predictor.3} parent=1 // pred_check_branch
      %87 = sbr.rel (0) target = $region41
    $region40: #{weighted_common_neighbors_predictor.3} parent=1 // pred_region
      %88 = dma.done [#allocation10], 4096
    $region41: #{weighted_common_neighbors_predictor.3} parent=1 // pred_fallthru
      _
    %p90 = scmp.eq.s32.totalorder 0, 0
    // Predicated region
    $region42: #{weighted_common_neighbors_predictor.3} parent=1 // pred_check
      %p91 = pneg %p90
    $region43: #{weighted_common_neighbors_predictor.3} parent=1 // pred_check_branch
      %93 = sbr.rel (%p91) target = $region45
    $region44: #{weighted_common_neighbors_predictor.3} parent=1 // pred_region
      %94 = vst [vmem:[#allocation2] sm:$0x1] 0.0
    $region45: #{weighted_common_neighbors_predictor.3} parent=1 // pred_fallthru
      _
    %s95 = smul.u32 0, 512
    %s96 = sshra.s32 %s95, 3
    %s97 = sand.u32 %s95, 7
    %s98 = smul.addr %s96, 4
    %s99 = scalar_lea.vmem [#allocation11], %s98
    %v100 = vld [vmem:[%s99] sm:$0xf]
    %v101 = vld [vmem:[%s99 + $0x4] sm:$0xf]
    %v102 = vld [vmem:[%s99 + $0x8] sm:$0xf]
    %v103 = vld [vmem:[%s99 + $0xc] sm:$0xf]
    %v104 = vld [vmem:[%s99 + $0x10] sm:$0xf]
    %v105 = vld [vmem:[%s99 + $0x14] sm:$0xf]
    %v106 = vld [vmem:[%s99 + $0x18] sm:$0xf]
    %v107 = vld [vmem:[%s99 + $0x1c] sm:$0xf]
    %v108 = vld [vmem:[%s99 + $0x20] sm:$0xf]
    %v109 = vld [vmem:[%s99 + $0x24] sm:$0xf]
    %v110 = vld [vmem:[%s99 + $0x28] sm:$0xf]
    %v111 = vld [vmem:[%s99 + $0x2c] sm:$0xf]
    %v112 = vld [vmem:[%s99 + $0x30] sm:$0xf]
    %v113 = vld [vmem:[%s99 + $0x34] sm:$0xf]
    %v114 = vld [vmem:[%s99 + $0x38] sm:$0xf]
    %v115 = vld [vmem:[%s99 + $0x3c] sm:$0xf]
    %v116 = vld [vmem:[%s99 + $0x40] sm:$0xf]
    %v117 = vld [vmem:[%s99 + $0x44] sm:$0xf]
    %v118 = vld [vmem:[%s99 + $0x48] sm:$0xf]
    %v119 = vld [vmem:[%s99 + $0x4c] sm:$0xf]
    %v120 = vld [vmem:[%s99 + $0x50] sm:$0xf]
    %v121 = vld [vmem:[%s99 + $0x54] sm:$0xf]
    %v122 = vld [vmem:[%s99 + $0x58] sm:$0xf]
    %v123 = vld [vmem:[%s99 + $0x5c] sm:$0xf]
    %v124 = vld [vmem:[%s99 + $0x60] sm:$0xf]
    %v125 = vld [vmem:[%s99 + $0x64] sm:$0xf]
    %v126 = vld [vmem:[%s99 + $0x68] sm:$0xf]
    %v127 = vld [vmem:[%s99 + $0x6c] sm:$0xf]
    %v128 = vld [vmem:[%s99 + $0x70] sm:$0xf]
    %v129 = vld [vmem:[%s99 + $0x74] sm:$0xf]
    %v130 = vld [vmem:[%s99 + $0x78] sm:$0xf]
    %v131 = vld [vmem:[%s99 + $0x7c] sm:$0xf]
    %v132 = vld [vmem:[%s99 + $0x80] sm:$0xf]
    %v133 = vld [vmem:[%s99 + $0x84] sm:$0xf]
    %v134 = vld [vmem:[%s99 + $0x88] sm:$0xf]
    %v135 = vld [vmem:[%s99 + $0x8c] sm:$0xf]
    %v136 = vld [vmem:[%s99 + $0x90] sm:$0xf]
    %v137 = vld [vmem:[%s99 + $0x94] sm:$0xf]
    %v138 = vld [vmem:[%s99 + $0x98] sm:$0xf]
    %v139 = vld [vmem:[%s99 + $0x9c] sm:$0xf]
    %v140 = vld [vmem:[%s99 + $0xa0] sm:$0xf]
    %v141 = vld [vmem:[%s99 + $0xa4] sm:$0xf]
    %v142 = vld [vmem:[%s99 + $0xa8] sm:$0xf]
    %v143 = vld [vmem:[%s99 + $0xac] sm:$0xf]
    %v144 = vld [vmem:[%s99 + $0xb0] sm:$0xf]
    %v145 = vld [vmem:[%s99 + $0xb4] sm:$0xf]
    %v146 = vld [vmem:[%s99 + $0xb8] sm:$0xf]
    %v147 = vld [vmem:[%s99 + $0xbc] sm:$0xf]
    %v148 = vld [vmem:[%s99 + $0xc0] sm:$0xf]
    %v149 = vld [vmem:[%s99 + $0xc4] sm:$0xf]
    %v150 = vld [vmem:[%s99 + $0xc8] sm:$0xf]
    %v151 = vld [vmem:[%s99 + $0xcc] sm:$0xf]
    %v152 = vld [vmem:[%s99 + $0xd0] sm:$0xf]
    %v153 = vld [vmem:[%s99 + $0xd4] sm:$0xf]
    %v154 = vld [vmem:[%s99 + $0xd8] sm:$0xf]
    %v155 = vld [vmem:[%s99 + $0xdc] sm:$0xf]
    %v156 = vld [vmem:[%s99 + $0xe0] sm:$0xf]
    %v157 = vld [vmem:[%s99 + $0xe4] sm:$0xf]
    %v158 = vld [vmem:[%s99 + $0xe8] sm:$0xf]
    %v159 = vld [vmem:[%s99 + $0xec] sm:$0xf]
    %v160 = vld [vmem:[%s99 + $0xf0] sm:$0xf]
    %v161 = vld [vmem:[%s99 + $0xf4] sm:$0xf]
    %v162 = vld [vmem:[%s99 + $0xf8] sm:$0xf]
    %v163 = vld [vmem:[%s99 + $0xfc] sm:$0xf]
    %v164 = vld [vmem:[#allocation3] sm:$0xf]
    %v165 = vld [vmem:[#allocation3 + $0x4] sm:$0xf]
    %v166 = vld [vmem:[#allocation3 + $0x8] sm:$0xf]
    %v167 = vld [vmem:[#allocation3 + $0xc] sm:$0xf]
    %v168 = vld [vmem:[#allocation3 + $0x10] sm:$0xf]
    %v169 = vld [vmem:[#allocation3 + $0x14] sm:$0xf]
    %v170 = vld [vmem:[#allocation3 + $0x18] sm:$0xf]
    %v171 = vld [vmem:[#allocation3 + $0x1c] sm:$0xf]
    %v172 = vld [vmem:[#allocation3 + $0x20] sm:$0xf]
    %v173 = vld [vmem:[#allocation3 + $0x24] sm:$0xf]
    %v174 = vld [vmem:[#allocation3 + $0x28] sm:$0xf]
    %v175 = vld [vmem:[#allocation3 + $0x2c] sm:$0xf]
    %v176 = vld [vmem:[#allocation3 + $0x30] sm:$0xf]
    %v177 = vld [vmem:[#allocation3 + $0x34] sm:$0xf]
    %v178 = vld [vmem:[#allocation3 + $0x38] sm:$0xf]
    %v179 = vld [vmem:[#allocation3 + $0x3c] sm:$0xf]
    %v196 = vunpack.c.l.b16 %v164
    %v197 = vunpack.c.l.b16 %v165
    %v198 = vunpack.c.l.b16 %v166
    %v199 = vunpack.c.l.b16 %v167
    %v200 = vunpack.c.l.b16 %v168
    %v201 = vunpack.c.l.b16 %v169
    %v202 = vunpack.c.l.b16 %v170
    %v203 = vunpack.c.l.b16 %v171
    %v204 = vunpack.c.l.b16 %v172
    %v205 = vunpack.c.l.b16 %v173
    %v206 = vunpack.c.l.b16 %v174
    %v207 = vunpack.c.l.b16 %v175
    %v208 = vunpack.c.l.b16 %v176
    %v209 = vunpack.c.l.b16 %v177
    %v210 = vunpack.c.l.b16 %v178
    %v211 = vunpack.c.l.b16 %v179
    %v212 = vpack.c.b16 %v197, %v196
    %v213 = vpack.c.b16 %v199, %v198
    %v214 = vpack.c.b16 %v201, %v200
    %v215 = vpack.c.b16 %v203, %v202
    %v216 = vpack.c.b16 %v205, %v204
    %v217 = vpack.c.b16 %v207, %v206
    %v218 = vpack.c.b16 %v209, %v208
    %v219 = vpack.c.b16 %v211, %v210
    %v292 = vunpack.c.l.b16 %v100
    %v293 = vunpack.c.l.b16 %v101
    %v294 = vunpack.c.l.b16 %v102
    %v295 = vunpack.c.l.b16 %v103
    %v296 = vunpack.c.l.b16 %v104
    %v297 = vunpack.c.l.b16 %v105
    %v298 = vunpack.c.l.b16 %v106
    %v299 = vunpack.c.l.b16 %v107
    %v300 = vunpack.c.l.b16 %v108
    %v301 = vunpack.c.l.b16 %v109
    %v302 = vunpack.c.l.b16 %v110
    %v303 = vunpack.c.l.b16 %v111
    %v304 = vunpack.c.l.b16 %v112
    %v305 = vunpack.c.l.b16 %v113
    %v306 = vunpack.c.l.b16 %v114
    %v307 = vunpack.c.l.b16 %v115
    %v308 = vunpack.c.l.b16 %v116
    %v309 = vunpack.c.l.b16 %v117
    %v310 = vunpack.c.l.b16 %v118
    %v311 = vunpack.c.l.b16 %v119
    %v312 = vunpack.c.l.b16 %v120
    %v313 = vunpack.c.l.b16 %v121
    %v314 = vunpack.c.l.b16 %v122
    %v315 = vunpack.c.l.b16 %v123
    %v316 = vunpack.c.l.b16 %v124
    %v317 = vunpack.c.l.b16 %v125
    %v318 = vunpack.c.l.b16 %v126
    %v319 = vunpack.c.l.b16 %v127
    %v320 = vunpack.c.l.b16 %v128
    %v321 = vunpack.c.l.b16 %v129
    %v322 = vunpack.c.l.b16 %v130
    %v323 = vunpack.c.l.b16 %v131
    %v324 = vunpack.c.l.b16 %v132
    %v325 = vunpack.c.l.b16 %v133
    %v326 = vunpack.c.l.b16 %v134
    %v327 = vunpack.c.l.b16 %v135
    %v328 = vunpack.c.l.b16 %v136
    %v329 = vunpack.c.l.b16 %v137
    %v330 = vunpack.c.l.b16 %v138
    %v331 = vunpack.c.l.b16 %v139
    %v332 = vunpack.c.l.b16 %v140
    %v333 = vunpack.c.l.b16 %v141
    %v334 = vunpack.c.l.b16 %v142
    %v335 = vunpack.c.l.b16 %v143
    %v336 = vunpack.c.l.b16 %v144
    %v337 = vunpack.c.l.b16 %v145
    %v338 = vunpack.c.l.b16 %v146
    %v339 = vunpack.c.l.b16 %v147
    %v340 = vunpack.c.l.b16 %v148
    %v341 = vunpack.c.l.b16 %v149
    %v342 = vunpack.c.l.b16 %v150
    %v343 = vunpack.c.l.b16 %v151
    %v344 = vunpack.c.l.b16 %v152
    %v345 = vunpack.c.l.b16 %v153
    %v346 = vunpack.c.l.b16 %v154
    %v347 = vunpack.c.l.b16 %v155
    %v348 = vunpack.c.l.b16 %v156
    %v349 = vunpack.c.l.b16 %v157
    %v350 = vunpack.c.l.b16 %v158
    %v351 = vunpack.c.l.b16 %v159
    %v352 = vunpack.c.l.b16 %v160
    %v353 = vunpack.c.l.b16 %v161
    %v354 = vunpack.c.l.b16 %v162
    %v355 = vunpack.c.l.b16 %v163
    %v356 = vpack.c.b16 %v293, %v292
    %v357 = vpack.c.b16 %v295, %v294
    %v358 = vpack.c.b16 %v297, %v296
    %v359 = vpack.c.b16 %v299, %v298
    %v360 = vpack.c.b16 %v301, %v300
    %v361 = vpack.c.b16 %v303, %v302
    %v362 = vpack.c.b16 %v305, %v304
    %v363 = vpack.c.b16 %v307, %v306
    %v364 = vpack.c.b16 %v309, %v308
    %v365 = vpack.c.b16 %v311, %v310
    %v366 = vpack.c.b16 %v313, %v312
    %v367 = vpack.c.b16 %v315, %v314
    %v368 = vpack.c.b16 %v317, %v316
    %v369 = vpack.c.b16 %v319, %v318
    %v370 = vpack.c.b16 %v321, %v320
    %v371 = vpack.c.b16 %v323, %v322
    %v372 = vpack.c.b16 %v325, %v324
    %v373 = vpack.c.b16 %v327, %v326
    %v374 = vpack.c.b16 %v329, %v328
    %v375 = vpack.c.b16 %v331, %v330
    %v376 = vpack.c.b16 %v333, %v332
    %v377 = vpack.c.b16 %v335, %v334
    %v378 = vpack.c.b16 %v337, %v336
    %v379 = vpack.c.b16 %v339, %v338
    %v380 = vpack.c.b16 %v341, %v340
    %v381 = vpack.c.b16 %v343, %v342
    %v382 = vpack.c.b16 %v345, %v344
    %v383 = vpack.c.b16 %v347, %v346
    %v384 = vpack.c.b16 %v349, %v348
    %v385 = vpack.c.b16 %v351, %v350
    %v386 = vpack.c.b16 %v353, %v352
    %v387 = vpack.c.b16 %v355, %v354
    %420 = vmatprep.subr.bf16.mxu0 0
    %421 = vmatpush1.bf16.xpose.msra.mxu0 %v356
    %422 = vmatprep.subr.bf16.mxu0 0
    %423 = vmatpush1.bf16.xpose.msra.mxu0 %v357
    %424 = vmatprep.subr.bf16.mxu0 0
    %425 = vmatpush1.bf16.xpose.msra.mxu0 %v358
    %426 = vmatprep.subr.bf16.mxu0 0
    %427 = vmatpush1.bf16.xpose.msra.mxu0 %v359
    %428 = vmatprep.subr.bf16.mxu0 0
    %429 = vmatpush1.bf16.xpose.msra.mxu0 %v360
    %430 = vmatprep.subr.bf16.mxu0 0
    %431 = vmatpush1.bf16.xpose.msra.mxu0 %v361
    %432 = vmatprep.subr.bf16.mxu0 0
    %433 = vmatpush1.bf16.xpose.msra.mxu0 %v362
    %434 = vmatprep.subr.bf16.mxu0 0
    %435 = vmatpush1.bf16.xpose.msra.mxu0 %v363
    %436 = vmatprep.subr.bf16.mxu0 0
    %437 = vmatpush1.bf16.xpose.msra.mxu0 %v364
    %438 = vmatprep.subr.bf16.mxu0 0
    %439 = vmatpush1.bf16.xpose.msra.mxu0 %v365
    %440 = vmatprep.subr.bf16.mxu0 0
    %441 = vmatpush1.bf16.xpose.msra.mxu0 %v366
    %442 = vmatprep.subr.bf16.mxu0 0
    %443 = vmatpush1.bf16.xpose.msra.mxu0 %v367
    %444 = vmatprep.subr.bf16.mxu0 0
    %445 = vmatpush1.bf16.xpose.msra.mxu0 %v368
    %446 = vmatprep.subr.bf16.mxu0 0
    %447 = vmatpush1.bf16.xpose.msra.mxu0 %v369
    %448 = vmatprep.subr.bf16.mxu0 0
    %449 = vmatpush1.bf16.xpose.msra.mxu0 %v370
    %450 = vmatprep.subr.bf16.mxu0 0
    %451 = vmatpush1.bf16.xpose.msra.mxu0 %v371
    %452 = vmatprep.mubr.bf16.mxu0 0
    %453 = vmatmul.mubr.bf16.gmra.mrb[0].mxu0 %v212
    %v454 = vpop.f32.mrb[0].mxu0
    %v455 = vadd.f32 0.0, %v454
    %v456 = vpop.f32.mrb[0].mxu0
    %v457 = vadd.f32 0.0, %v456
    %v458 = vpop.f32.mrb[0].mxu0
    %v459 = vadd.f32 0.0, %v458
    %v460 = vpop.f32.mrb[0].mxu0
    %v461 = vadd.f32 0.0, %v460
    %462 = vmatprep.mubr.bf16.mxu0 0
    %463 = vmatmul.mubr.bf16.gmra.mrb[0].mxu0 %v213
    %v464 = vpop.f32.mrb[0].mxu0
    %v465 = vadd.f32 0.0, %v464
    %v466 = vpop.f32.mrb[0].mxu0
    %v467 = vadd.f32 0.0, %v466
    %v468 = vpop.f32.mrb[0].mxu0
    %v469 = vadd.f32 0.0, %v468
    %v470 = vpop.f32.mrb[0].mxu0
    %v471 = vadd.f32 0.0, %v470
    %472 = vmatprep.mubr.bf16.mxu0 0
    %473 = vmatmul.mubr.bf16.gmra.mrb[0].mxu0 %v214
    %v474 = vpop.f32.mrb[0].mxu0
    %v475 = vadd.f32 0.0, %v474
    %v476 = vpop.f32.mrb[0].mxu0
    %v477 = vadd.f32 0.0, %v476
    %v478 = vpop.f32.mrb[0].mxu0
    %v479 = vadd.f32 0.0, %v478
    %v480 = vpop.f32.mrb[0].mxu0
    %v481 = vadd.f32 0.0, %v480
    %482 = vmatprep.mubr.bf16.mxu0 0
    %483 = vmatmul.mubr.bf16.gmra.mrb[0].mxu0 %v215
    %v484 = vpop.f32.mrb[0].mxu0
    %v485 = vadd.f32 0.0, %v484
    %v486 = vpop.f32.mrb[0].mxu0
    %v487 = vadd.f32 0.0, %v486
    %v488 = vpop.f32.mrb[0].mxu0
    %v489 = vadd.f32 0.0, %v488
    %v490 = vpop.f32.mrb[0].mxu0
    %v491 = vadd.f32 0.0, %v490
    %492 = vmatprep.mubr.bf16.mxu0 0
    %493 = vmatmul.mubr.bf16.gmra.mrb[0].mxu0 %v216
    %v494 = vpop.f32.mrb[0].mxu0
    %v495 = vadd.f32 0.0, %v494
    %v496 = vpop.f32.mrb[0].mxu0
    %v497 = vadd.f32 0.0, %v496
    %v498 = vpop.f32.mrb[0].mxu0
    %v499 = vadd.f32 0.0, %v498
    %v500 = vpop.f32.mrb[0].mxu0
    %v501 = vadd.f32 0.0, %v500
    %502 = vmatprep.mubr.bf16.mxu0 0
    %503 = vmatmul.mubr.bf16.gmra.mrb[0].mxu0 %v217
    %v504 = vpop.f32.mrb[0].mxu0
    %v505 = vadd.f32 0.0, %v504
    %v506 = vpop.f32.mrb[0].mxu0
    %v507 = vadd.f32 0.0, %v506
    %v508 = vpop.f32.mrb[0].mxu0
    %v509 = vadd.f32 0.0, %v508
    %v510 = vpop.f32.mrb[0].mxu0
    %v511 = vadd.f32 0.0, %v510
    %512 = vmatprep.mubr.bf16.mxu0 0
    %513 = vmatmul.mubr.bf16.gmra.mrb[0].mxu0 %v218
    %v514 = vpop.f32.mrb[0].mxu0
    %v515 = vadd.f32 0.0, %v514
    %v516 = vpop.f32.mrb[0].mxu0
    %v517 = vadd.f32 0.0, %v516
    %v518 = vpop.f32.mrb[0].mxu0
    %v519 = vadd.f32 0.0, %v518
    %v520 = vpop.f32.mrb[0].mxu0
    %v521 = vadd.f32 0.0, %v520
    %522 = vmatprep.mubr.bf16.mxu0 0
    %523 = vmatmul.mubr.bf16.gmra.mrb[0].mxu0 %v219
    %v524 = vpop.f32.mrb[0].mxu0
    %v525 = vadd.f32 0.0, %v524
    %v526 = vpop.f32.mrb[0].mxu0
    %v527 = vadd.f32 0.0, %v526
    %v528 = vpop.f32.mrb[0].mxu0
    %v529 = vadd.f32 0.0, %v528
    %v530 = vpop.f32.mrb[0].mxu0
    %v531 = vadd.f32 0.0, %v530
    %532 = vdwg.mxu0
    %533 = vmatprep.subr.bf16.mxu0 0
    %534 = vmatpush1.bf16.xpose.msra.mxu0 %v372
    %535 = vmatprep.subr.bf16.mxu0 0
    %536 = vmatpush1.bf16.xpose.msra.mxu0 %v373
    %537 = vmatprep.subr.bf16.mxu0 0
    %538 = vmatpush1.bf16.xpose.msra.mxu0 %v374
    %539 = vmatprep.subr.bf16.mxu0 0
    %540 = vmatpush1.bf16.xpose.msra.mxu0 %v375
    %541 = vmatprep.subr.bf16.mxu0 0
    %542 = vmatpush1.bf16.xpose.msra.mxu0 %v376
    %543 = vmatprep.subr.bf16.mxu0 0
    %544 = vmatpush1.bf16.xpose.msra.mxu0 %v377
    %545 = vmatprep.subr.bf16.mxu0 0
    %546 = vmatpush1.bf16.xpose.msra.mxu0 %v378
    %547 = vmatprep.subr.bf16.mxu0 0
    %548 = vmatpush1.bf16.xpose.msra.mxu0 %v379
    %549 = vmatprep.subr.bf16.mxu0 0
    %550 = vmatpush1.bf16.xpose.msra.mxu0 %v380
    %551 = vmatprep.subr.bf16.mxu0 0
    %552 = vmatpush1.bf16.xpose.msra.mxu0 %v381
    %553 = vmatprep.subr.bf16.mxu0 0
    %554 = vmatpush1.bf16.xpose.msra.mxu0 %v382
    %555 = vmatprep.subr.bf16.mxu0 0
    %556 = vmatpush1.bf16.xpose.msra.mxu0 %v383
    %557 = vmatprep.subr.bf16.mxu0 0
    %558 = vmatpush1.bf16.xpose.msra.mxu0 %v384
    %559 = vmatprep.subr.bf16.mxu0 0
    %560 = vmatpush1.bf16.xpose.msra.mxu0 %v385
    %561 = vmatprep.subr.bf16.mxu0 0
    %562 = vmatpush1.bf16.xpose.msra.mxu0 %v386
    %563 = vmatprep.subr.bf16.mxu0 0
    %564 = vmatpush1.bf16.xpose.msra.mxu0 %v387
    %565 = vmatprep.mubr.bf16.mxu0 0
    %566 = vmatmul.mubr.bf16.gmra.mrb[0].mxu0 %v212
    %v567 = vpop.f32.mrb[0].mxu0
    %v568 = vadd.f32 0.0, %v567
    %v569 = vpop.f32.mrb[0].mxu0
    %v570 = vadd.f32 0.0, %v569
    %v571 = vpop.f32.mrb[0].mxu0
    %v572 = vadd.f32 0.0, %v571
    %v573 = vpop.f32.mrb[0].mxu0
    %v574 = vadd.f32 0.0, %v573
    %575 = vmatprep.mubr.bf16.mxu0 0
    %576 = vmatmul.mubr.bf16.gmra.mrb[0].mxu0 %v213
    %v577 = vpop.f32.mrb[0].mxu0
    %v578 = vadd.f32 0.0, %v577
    %v579 = vpop.f32.mrb[0].mxu0
    %v580 = vadd.f32 0.0, %v579
    %v581 = vpop.f32.mrb[0].mxu0
    %v582 = vadd.f32 0.0, %v581
    %v583 = vpop.f32.mrb[0].mxu0
    %v584 = vadd.f32 0.0, %v583
    %585 = vmatprep.mubr.bf16.mxu0 0
    %586 = vmatmul.mubr.bf16.gmra.mrb[0].mxu0 %v214
    %v587 = vpop.f32.mrb[0].mxu0
    %v588 = vadd.f32 0.0, %v587
    %v589 = vpop.f32.mrb[0].mxu0
    %v590 = vadd.f32 0.0, %v589
    %v591 = vpop.f32.mrb[0].mxu0
    %v592 = vadd.f32 0.0, %v591
    %v593 = vpop.f32.mrb[0].mxu0
    %v594 = vadd.f32 0.0, %v593
    %595 = vmatprep.mubr.bf16.mxu0 0
    %596 = vmatmul.mubr.bf16.gmra.mrb[0].mxu0 %v215
    %v597 = vpop.f32.mrb[0].mxu0
    %v598 = vadd.f32 0.0, %v597
    %v599 = vpop.f32.mrb[0].mxu0
    %v600 = vadd.f32 0.0, %v599
    %v601 = vpop.f32.mrb[0].mxu0
    %v602 = vadd.f32 0.0, %v601
    %v603 = vpop.f32.mrb[0].mxu0
    %v604 = vadd.f32 0.0, %v603
    %605 = vmatprep.mubr.bf16.mxu0 0
    %606 = vmatmul.mubr.bf16.gmra.mrb[0].mxu0 %v216
    %v607 = vpop.f32.mrb[0].mxu0
    %v608 = vadd.f32 0.0, %v607
    %v609 = vpop.f32.mrb[0].mxu0
    %v610 = vadd.f32 0.0, %v609
    %v611 = vpop.f32.mrb[0].mxu0
    %v612 = vadd.f32 0.0, %v611
    %v613 = vpop.f32.mrb[0].mxu0
    %v614 = vadd.f32 0.0, %v613
    %615 = vmatprep.mubr.bf16.mxu0 0
    %616 = vmatmul.mubr.bf16.gmra.mrb[0].mxu0 %v217
    %v617 = vpop.f32.mrb[0].mxu0
    %v618 = vadd.f32 0.0, %v617
    %v619 = vpop.f32.mrb[0].mxu0
    %v620 = vadd.f32 0.0, %v619
    %v621 = vpop.f32.mrb[0].mxu0
    %v622 = vadd.f32 0.0, %v621
    %v623 = vpop.f32.mrb[0].mxu0
    %v624 = vadd.f32 0.0, %v623
    %625 = vmatprep.mubr.bf16.mxu0 0
    %626 = vmatmul.mubr.bf16.gmra.mrb[0].mxu0 %v218
    %v627 = vpop.f32.mrb[0].mxu0
    %v628 = vadd.f32 0.0, %v627
    %v629 = vpop.f32.mrb[0].mxu0
    %v630 = vadd.f32 0.0, %v629
    %v631 = vpop.f32.mrb[0].mxu0
    %v632 = vadd.f32 0.0, %v631
    %v633 = vpop.f32.mrb[0].mxu0
    %v634 = vadd.f32 0.0, %v633
    %635 = vmatprep.mubr.bf16.mxu0 0
    %636 = vmatmul.mubr.bf16.gmra.mrb[0].mxu0 %v219
    %v637 = vpop.f32.mrb[0].mxu0
    %v638 = vadd.f32 0.0, %v637
    %v639 = vpop.f32.mrb[0].mxu0
    %v640 = vadd.f32 0.0, %v639
    %v641 = vpop.f32.mrb[0].mxu0
    %v642 = vadd.f32 0.0, %v641
    %v643 = vpop.f32.mrb[0].mxu0
    %v644 = vadd.f32 0.0, %v643
    %645 = vdwg.mxu0
    %v646 = vld [vmem:[#allocation6] sm:$0xf]
    %v647 = vld [vmem:[#allocation6 + $0x4] sm:$0xf]
    %v648 = vld [vmem:[#allocation6 + $0x8] sm:$0xf]
    %v649 = vld [vmem:[#allocation6 + $0xc] sm:$0xf]
    %v650 = vld [vmem:[#allocation6 + $0x10] sm:$0xf]
    %v651 = vld [vmem:[#allocation6 + $0x14] sm:$0xf]
    %v652 = vld [vmem:[#allocation6 + $0x18] sm:$0xf]
    %v653 = vld [vmem:[#allocation6 + $0x1c] sm:$0xf]
    %v654 = vld [vmem:[#allocation6 + $0x20] sm:$0xf]
    %v655 = vld [vmem:[#allocation6 + $0x24] sm:$0xf]
    %v656 = vld [vmem:[#allocation6 + $0x28] sm:$0xf]
    %v657 = vld [vmem:[#allocation6 + $0x2c] sm:$0xf]
    %v658 = vld [vmem:[#allocation6 + $0x30] sm:$0xf]
    %v659 = vld [vmem:[#allocation6 + $0x34] sm:$0xf]
    %v660 = vld [vmem:[#allocation6 + $0x38] sm:$0xf]
    %v661 = vld [vmem:[#allocation6 + $0x3c] sm:$0xf]
    %v678 = vunpack.c.l.b16 %v646
    %v679 = vunpack.c.l.b16 %v647
    %v680 = vunpack.c.l.b16 %v648
    %v681 = vunpack.c.l.b16 %v649
    %v682 = vunpack.c.l.b16 %v650
    %v683 = vunpack.c.l.b16 %v651
    %v684 = vunpack.c.l.b16 %v652
    %v685 = vunpack.c.l.b16 %v653
    %v686 = vunpack.c.l.b16 %v654
    %v687 = vunpack.c.l.b16 %v655
    %v688 = vunpack.c.l.b16 %v656
    %v689 = vunpack.c.l.b16 %v657
    %v690 = vunpack.c.l.b16 %v658
    %v691 = vunpack.c.l.b16 %v659
    %v692 = vunpack.c.l.b16 %v660
    %v693 = vunpack.c.l.b16 %v661
    %v694 = vpack.c.b16 %v679, %v678
    %v695 = vpack.c.b16 %v681, %v680
    %v696 = vpack.c.b16 %v683, %v682
    %v697 = vpack.c.b16 %v685, %v684
    %v698 = vpack.c.b16 %v687, %v686
    %v699 = vpack.c.b16 %v689, %v688
    %v700 = vpack.c.b16 %v691, %v690
    %v701 = vpack.c.b16 %v693, %v692
    %710 = vmatprep.subr.bf16.mxu0 0
    %711 = vmatpush1.bf16.xpose.msra.mxu0 %v356
    %712 = vmatprep.subr.bf16.mxu0 0
    %713 = vmatpush1.bf16.xpose.msra.mxu0 %v357
    %714 = vmatprep.subr.bf16.mxu0 0
    %715 = vmatpush1.bf16.xpose.msra.mxu0 %v358
    %716 = vmatprep.subr.bf16.mxu0 0
    %717 = vmatpush1.bf16.xpose.msra.mxu0 %v359
    %718 = vmatprep.subr.bf16.mxu0 0
    %719 = vmatpush1.bf16.xpose.msra.mxu0 %v360
    %720 = vmatprep.subr.bf16.mxu0 0
    %721 = vmatpush1.bf16.xpose.msra.mxu0 %v361
    %722 = vmatprep.subr.bf16.mxu0 0
    %723 = vmatpush1.bf16.xpose.msra.mxu0 %v362
    %724 = vmatprep.subr.bf16.mxu0 0
    %725 = vmatpush1.bf16.xpose.msra.mxu0 %v363
    %726 = vmatprep.subr.bf16.mxu0 0
    %727 = vmatpush1.bf16.xpose.msra.mxu0 %v364
    %728 = vmatprep.subr.bf16.mxu0 0
    %729 = vmatpush1.bf16.xpose.msra.mxu0 %v365
    %730 = vmatprep.subr.bf16.mxu0 0
    %731 = vmatpush1.bf16.xpose.msra.mxu0 %v366
    %732 = vmatprep.subr.bf16.mxu0 0
    %733 = vmatpush1.bf16.xpose.msra.mxu0 %v367
    %734 = vmatprep.subr.bf16.mxu0 0
    %735 = vmatpush1.bf16.xpose.msra.mxu0 %v368
    %736 = vmatprep.subr.bf16.mxu0 0
    %737 = vmatpush1.bf16.xpose.msra.mxu0 %v369
    %738 = vmatprep.subr.bf16.mxu0 0
    %739 = vmatpush1.bf16.xpose.msra.mxu0 %v370
    %740 = vmatprep.subr.bf16.mxu0 0
    %741 = vmatpush1.bf16.xpose.msra.mxu0 %v371
    %742 = vmatprep.mubr.bf16.mxu0 0
    %743 = vmatmul.mubr.bf16.gmra.mrb[0].mxu0 %v694
    %v744 = vpop.f32.mrb[0].mxu0
    %v745 = vadd.f32 0.0, %v744
    %v746 = vpop.f32.mrb[0].mxu0
    %v747 = vadd.f32 0.0, %v746
    %v748 = vpop.f32.mrb[0].mxu0
    %v749 = vadd.f32 0.0, %v748
    %v750 = vpop.f32.mrb[0].mxu0
    %v751 = vadd.f32 0.0, %v750
    %752 = vmatprep.mubr.bf16.mxu0 0
    %753 = vmatmul.mubr.bf16.gmra.mrb[0].mxu0 %v695
    %v754 = vpop.f32.mrb[0].mxu0
    %v755 = vadd.f32 0.0, %v754
    %v756 = vpop.f32.mrb[0].mxu0
    %v757 = vadd.f32 0.0, %v756
    %v758 = vpop.f32.mrb[0].mxu0
    %v759 = vadd.f32 0.0, %v758
    %v760 = vpop.f32.mrb[0].mxu0
    %v761 = vadd.f32 0.0, %v760
    %762 = vmatprep.mubr.bf16.mxu0 0
    %763 = vmatmul.mubr.bf16.gmra.mrb[0].mxu0 %v696
    %v764 = vpop.f32.mrb[0].mxu0
    %v765 = vadd.f32 0.0, %v764
    %v766 = vpop.f32.mrb[0].mxu0
    %v767 = vadd.f32 0.0, %v766
    %v768 = vpop.f32.mrb[0].mxu0
    %v769 = vadd.f32 0.0, %v768
    %v770 = vpop.f32.mrb[0].mxu0
    %v771 = vadd.f32 0.0, %v770
    %772 = vmatprep.mubr.bf16.mxu0 0
    %773 = vmatmul.mubr.bf16.gmra.mrb[0].mxu0 %v697
    %v774 = vpop.f32.mrb[0].mxu0
    %v775 = vadd.f32 0.0, %v774
    %v776 = vpop.f32.mrb[0].mxu0
    %v777 = vadd.f32 0.0, %v776
    %v778 = vpop.f32.mrb[0].mxu0
    %v779 = vadd.f32 0.0, %v778
    %v780 = vpop.f32.mrb[0].mxu0
    %v781 = vadd.f32 0.0, %v780
    %782 = vmatprep.mubr.bf16.mxu0 0
    %783 = vmatmul.mubr.bf16.gmra.mrb[0].mxu0 %v698
    %v784 = vpop.f32.mrb[0].mxu0
    %v785 = vadd.f32 0.0, %v784
    %v786 = vpop.f32.mrb[0].mxu0
    %v787 = vadd.f32 0.0, %v786
    %v788 = vpop.f32.mrb[0].mxu0
    %v789 = vadd.f32 0.0, %v788
    %v790 = vpop.f32.mrb[0].mxu0
    %v791 = vadd.f32 0.0, %v790
    %792 = vmatprep.mubr.bf16.mxu0 0
    %793 = vmatmul.mubr.bf16.gmra.mrb[0].mxu0 %v699
    %v794 = vpop.f32.mrb[0].mxu0
    %v795 = vadd.f32 0.0, %v794
    %v796 = vpop.f32.mrb[0].mxu0
    %v797 = vadd.f32 0.0, %v796
    %v798 = vpop.f32.mrb[0].mxu0
    %v799 = vadd.f32 0.0, %v798
    %v800 = vpop.f32.mrb[0].mxu0
    %v801 = vadd.f32 0.0, %v800
    %802 = vmatprep.mubr.bf16.mxu0 0
    %803 = vmatmul.mubr.bf16.gmra.mrb[0].mxu0 %v700
    %v804 = vpop.f32.mrb[0].mxu0
    %v805 = vadd.f32 0.0, %v804
    %v806 = vpop.f32.mrb[0].mxu0
    %v807 = vadd.f32 0.0, %v806
    %v808 = vpop.f32.mrb[0].mxu0
    %v809 = vadd.f32 0.0, %v808
    %v810 = vpop.f32.mrb[0].mxu0
    %v811 = vadd.f32 0.0, %v810
    %812 = vmatprep.mubr.bf16.mxu0 0
    %813 = vmatmul.mubr.bf16.gmra.mrb[0].mxu0 %v701
    %v814 = vpop.f32.mrb[0].mxu0
    %v815 = vadd.f32 0.0, %v814
    %v816 = vpop.f32.mrb[0].mxu0
    %v817 = vadd.f32 0.0, %v816
    %v818 = vpop.f32.mrb[0].mxu0
    %v819 = vadd.f32 0.0, %v818
    %v820 = vpop.f32.mrb[0].mxu0
    %v821 = vadd.f32 0.0, %v820
    %822 = vdwg.mxu0
    %823 = vmatprep.subr.bf16.mxu0 0
    %824 = vmatpush1.bf16.xpose.msra.mxu0 %v372
    %825 = vmatprep.subr.bf16.mxu0 0
    %826 = vmatpush1.bf16.xpose.msra.mxu0 %v373
    %827 = vmatprep.subr.bf16.mxu0 0
    %828 = vmatpush1.bf16.xpose.msra.mxu0 %v374
    %829 = vmatprep.subr.bf16.mxu0 0
    %830 = vmatpush1.bf16.xpose.msra.mxu0 %v375
    %831 = vmatprep.subr.bf16.mxu0 0
    %832 = vmatpush1.bf16.xpose.msra.mxu0 %v376
    %833 = vmatprep.subr.bf16.mxu0 0
    %834 = vmatpush1.bf16.xpose.msra.mxu0 %v377
    %835 = vmatprep.subr.bf16.mxu0 0
    %836 = vmatpush1.bf16.xpose.msra.mxu0 %v378
    %837 = vmatprep.subr.bf16.mxu0 0
    %838 = vmatpush1.bf16.xpose.msra.mxu0 %v379
    %839 = vmatprep.subr.bf16.mxu0 0
    %840 = vmatpush1.bf16.xpose.msra.mxu0 %v380
    %841 = vmatprep.subr.bf16.mxu0 0
    %842 = vmatpush1.bf16.xpose.msra.mxu0 %v381
    %843 = vmatprep.subr.bf16.mxu0 0
    %844 = vmatpush1.bf16.xpose.msra.mxu0 %v382
    %845 = vmatprep.subr.bf16.mxu0 0
    %846 = vmatpush1.bf16.xpose.msra.mxu0 %v383
    %847 = vmatprep.subr.bf16.mxu0 0
    %848 = vmatpush1.bf16.xpose.msra.mxu0 %v384
    %849 = vmatprep.subr.bf16.mxu0 0
    %850 = vmatpush1.bf16.xpose.msra.mxu0 %v385
    %851 = vmatprep.subr.bf16.mxu0 0
    %852 = vmatpush1.bf16.xpose.msra.mxu0 %v386
    %853 = vmatprep.subr.bf16.mxu0 0
    %854 = vmatpush1.bf16.xpose.msra.mxu0 %v387
    %855 = vmatprep.mubr.bf16.mxu0 0
    %856 = vmatmul.mubr.bf16.gmra.mrb[0].mxu0 %v694
    %v857 = vpop.f32.mrb[0].mxu0
    %v858 = vadd.f32 0.0, %v857
    %v859 = vpop.f32.mrb[0].mxu0
    %v860 = vadd.f32 0.0, %v859
    %v861 = vpop.f32.mrb[0].mxu0
    %v862 = vadd.f32 0.0, %v861
    %v863 = vpop.f32.mrb[0].mxu0
    %v864 = vadd.f32 0.0, %v863
    %865 = vmatprep.mubr.bf16.mxu0 0
    %866 = vmatmul.mubr.bf16.gmra.mrb[0].mxu0 %v695
    %v867 = vpop.f32.mrb[0].mxu0
    %v868 = vadd.f32 0.0, %v867
    %v869 = vpop.f32.mrb[0].mxu0
    %v870 = vadd.f32 0.0, %v869
    %v871 = vpop.f32.mrb[0].mxu0
    %v872 = vadd.f32 0.0, %v871
    %v873 = vpop.f32.mrb[0].mxu0
    %v874 = vadd.f32 0.0, %v873
    %875 = vmatprep.mubr.bf16.mxu0 0
    %876 = vmatmul.mubr.bf16.gmra.mrb[0].mxu0 %v696
    %v877 = vpop.f32.mrb[0].mxu0
    %v878 = vadd.f32 0.0, %v877
    %v879 = vpop.f32.mrb[0].mxu0
    %v880 = vadd.f32 0.0, %v879
    %v881 = vpop.f32.mrb[0].mxu0
    %v882 = vadd.f32 0.0, %v881
    %v883 = vpop.f32.mrb[0].mxu0
    %v884 = vadd.f32 0.0, %v883
    %885 = vmatprep.mubr.bf16.mxu0 0
    %886 = vmatmul.mubr.bf16.gmra.mrb[0].mxu0 %v697
    %v887 = vpop.f32.mrb[0].mxu0
    %v888 = vadd.f32 0.0, %v887
    %v889 = vpop.f32.mrb[0].mxu0
    %v890 = vadd.f32 0.0, %v889
    %v891 = vpop.f32.mrb[0].mxu0
    %v892 = vadd.f32 0.0, %v891
    %v893 = vpop.f32.mrb[0].mxu0
    %v894 = vadd.f32 0.0, %v893
    %895 = vmatprep.mubr.bf16.mxu0 0
    %896 = vmatmul.mubr.bf16.gmra.mrb[0].mxu0 %v698
    %v897 = vpop.f32.mrb[0].mxu0
    %v898 = vadd.f32 0.0, %v897
    %v899 = vpop.f32.mrb[0].mxu0
    %v900 = vadd.f32 0.0, %v899
    %v901 = vpop.f32.mrb[0].mxu0
    %v902 = vadd.f32 0.0, %v901
    %v903 = vpop.f32.mrb[0].mxu0
    %v904 = vadd.f32 0.0, %v903
    %905 = vmatprep.mubr.bf16.mxu0 0
    %906 = vmatmul.mubr.bf16.gmra.mrb[0].mxu0 %v699
    %v907 = vpop.f32.mrb[0].mxu0
    %v908 = vadd.f32 0.0, %v907
    %v909 = vpop.f32.mrb[0].mxu0
    %v910 = vadd.f32 0.0, %v909
    %v911 = vpop.f32.mrb[0].mxu0
    %v912 = vadd.f32 0.0, %v911
    %v913 = vpop.f32.mrb[0].mxu0
    %v914 = vadd.f32 0.0, %v913
    %915 = vmatprep.mubr.bf16.mxu0 0
    %916 = vmatmul.mubr.bf16.gmra.mrb[0].mxu0 %v700
    %v917 = vpop.f32.mrb[0].mxu0
    %v918 = vadd.f32 0.0, %v917
    %v919 = vpop.f32.mrb[0].mxu0
    %v920 = vadd.f32 0.0, %v919
    %v921 = vpop.f32.mrb[0].mxu0
    %v922 = vadd.f32 0.0, %v921
    %v923 = vpop.f32.mrb[0].mxu0
    %v924 = vadd.f32 0.0, %v923
    %925 = vmatprep.mubr.bf16.mxu0 0
    %926 = vmatmul.mubr.bf16.gmra.mrb[0].mxu0 %v701
    %v927 = vpop.f32.mrb[0].mxu0
    %v928 = vadd.f32 0.0, %v927
    %v929 = vpop.f32.mrb[0].mxu0
    %v930 = vadd.f32 0.0, %v929
    %v931 = vpop.f32.mrb[0].mxu0
    %v932 = vadd.f32 0.0, %v931
    %v933 = vpop.f32.mrb[0].mxu0
    %v934 = vadd.f32 0.0, %v933
    %935 = vdwg.mxu0
    %v936 = vld [vmem:[#allocation8] sm:$0xff]
    %v937 = vld [vmem:[#allocation8 + $0x8] sm:$0xff]
    %v938 = vld [vmem:[#allocation8 + $0x10] sm:$0xff]
    %v939 = vld [vmem:[#allocation8 + $0x18] sm:$0xff]
    %v940 = vld [vmem:[#allocation8 + $0x20] sm:$0xff]
    %v941 = vld [vmem:[#allocation8 + $0x28] sm:$0xff]
    %v942 = vld [vmem:[#allocation8 + $0x30] sm:$0xff]
    %v943 = vld [vmem:[#allocation8 + $0x38] sm:$0xff]
    %v944 = vld [vmem:[#allocation8 + $0x40] sm:$0xff]
    %v945 = vld [vmem:[#allocation8 + $0x48] sm:$0xff]
    %v946 = vld [vmem:[#allocation8 + $0x50] sm:$0xff]
    %v947 = vld [vmem:[#allocation8 + $0x58] sm:$0xff]
    %v948 = vld [vmem:[#allocation8 + $0x60] sm:$0xff]
    %v949 = vld [vmem:[#allocation8 + $0x68] sm:$0xff]
    %v950 = vld [vmem:[#allocation8 + $0x70] sm:$0xff]
    %v951 = vld [vmem:[#allocation8 + $0x78] sm:$0xff]
    %v952 = vunpack.c.0.s8 %v936
    %v953 = vunpack.c.0.s8 %v937
    %v954 = vunpack.c.0.s8 %v938
    %v955 = vunpack.c.0.s8 %v939
    %v956 = vunpack.c.1.s8 %v936
    %v957 = vunpack.c.1.s8 %v937
    %v958 = vunpack.c.1.s8 %v938
    %v959 = vunpack.c.1.s8 %v939
    %v960 = vunpack.c.2.s8 %v936
    %v961 = vunpack.c.2.s8 %v937
    %v962 = vunpack.c.2.s8 %v938
    %v963 = vunpack.c.2.s8 %v939
    %v964 = vunpack.c.3.s8 %v936
    %v965 = vunpack.c.3.s8 %v937
    %v966 = vunpack.c.3.s8 %v938
    %v967 = vunpack.c.3.s8 %v939
    %v968 = vunpack.c.0.s8 %v940
    %v969 = vunpack.c.0.s8 %v941
    %v970 = vunpack.c.0.s8 %v942
    %v971 = vunpack.c.0.s8 %v943
    %v972 = vunpack.c.1.s8 %v940
    %v973 = vunpack.c.1.s8 %v941
    %v974 = vunpack.c.1.s8 %v942
    %v975 = vunpack.c.1.s8 %v943
    %v976 = vunpack.c.2.s8 %v940
    %v977 = vunpack.c.2.s8 %v941
    %v978 = vunpack.c.2.s8 %v942
    %v979 = vunpack.c.2.s8 %v943
    %v980 = vunpack.c.3.s8 %v940
    %v981 = vunpack.c.3.s8 %v941
    %v982 = vunpack.c.3.s8 %v942
    %v983 = vunpack.c.3.s8 %v943
    %v984 = vunpack.c.0.s8 %v944
    %v985 = vunpack.c.0.s8 %v945
    %v986 = vunpack.c.0.s8 %v946
    %v987 = vunpack.c.0.s8 %v947
    %v988 = vunpack.c.1.s8 %v944
    %v989 = vunpack.c.1.s8 %v945
    %v990 = vunpack.c.1.s8 %v946
    %v991 = vunpack.c.1.s8 %v947
    %v992 = vunpack.c.2.s8 %v944
    %v993 = vunpack.c.2.s8 %v945
    %v994 = vunpack.c.2.s8 %v946
    %v995 = vunpack.c.2.s8 %v947
    %v996 = vunpack.c.3.s8 %v944
    %v997 = vunpack.c.3.s8 %v945
    %v998 = vunpack.c.3.s8 %v946
    %v999 = vunpack.c.3.s8 %v947
    %v1000 = vunpack.c.0.s8 %v948
    %v1001 = vunpack.c.0.s8 %v949
    %v1002 = vunpack.c.0.s8 %v950
    %v1003 = vunpack.c.0.s8 %v951
    %v1004 = vunpack.c.1.s8 %v948
    %v1005 = vunpack.c.1.s8 %v949
    %v1006 = vunpack.c.1.s8 %v950
    %v1007 = vunpack.c.1.s8 %v951
    %v1008 = vunpack.c.2.s8 %v948
    %v1009 = vunpack.c.2.s8 %v949
    %v1010 = vunpack.c.2.s8 %v950
    %v1011 = vunpack.c.2.s8 %v951
    %v1012 = vunpack.c.3.s8 %v948
    %v1013 = vunpack.c.3.s8 %v949
    %v1014 = vunpack.c.3.s8 %v950
    %v1015 = vunpack.c.3.s8 %v951
    %v1016 = vcvt.s32.f32 %v952
    %v1017 = vcvt.s32.f32 %v953
    %v1018 = vcvt.s32.f32 %v954
    %v1019 = vcvt.s32.f32 %v955
    %v1020 = vcvt.s32.f32 %v956
    %v1021 = vcvt.s32.f32 %v957
    %v1022 = vcvt.s32.f32 %v958
    %v1023 = vcvt.s32.f32 %v959
    %v1024 = vcvt.s32.f32 %v960
    %v1025 = vcvt.s32.f32 %v961
    %v1026 = vcvt.s32.f32 %v962
    %v1027 = vcvt.s32.f32 %v963
    %v1028 = vcvt.s32.f32 %v964
    %v1029 = vcvt.s32.f32 %v965
    %v1030 = vcvt.s32.f32 %v966
    %v1031 = vcvt.s32.f32 %v967
    %v1032 = vcvt.s32.f32 %v968
    %v1033 = vcvt.s32.f32 %v969
    %v1034 = vcvt.s32.f32 %v970
    %v1035 = vcvt.s32.f32 %v971
    %v1036 = vcvt.s32.f32 %v972
    %v1037 = vcvt.s32.f32 %v973
    %v1038 = vcvt.s32.f32 %v974
    %v1039 = vcvt.s32.f32 %v975
    %v1040 = vcvt.s32.f32 %v976
    %v1041 = vcvt.s32.f32 %v977
    %v1042 = vcvt.s32.f32 %v978
    %v1043 = vcvt.s32.f32 %v979
    %v1044 = vcvt.s32.f32 %v980
    %v1045 = vcvt.s32.f32 %v981
    %v1046 = vcvt.s32.f32 %v982
    %v1047 = vcvt.s32.f32 %v983
    %v1048 = vcvt.s32.f32 %v984
    %v1049 = vcvt.s32.f32 %v985
    %v1050 = vcvt.s32.f32 %v986
    %v1051 = vcvt.s32.f32 %v987
    %v1052 = vcvt.s32.f32 %v988
    %v1053 = vcvt.s32.f32 %v989
    %v1054 = vcvt.s32.f32 %v990
    %v1055 = vcvt.s32.f32 %v991
    %v1056 = vcvt.s32.f32 %v992
    %v1057 = vcvt.s32.f32 %v993
    %v1058 = vcvt.s32.f32 %v994
    %v1059 = vcvt.s32.f32 %v995
    %v1060 = vcvt.s32.f32 %v996
    %v1061 = vcvt.s32.f32 %v997
    %v1062 = vcvt.s32.f32 %v998
    %v1063 = vcvt.s32.f32 %v999
    %v1064 = vcvt.s32.f32 %v1000
    %v1065 = vcvt.s32.f32 %v1001
    %v1066 = vcvt.s32.f32 %v1002
    %v1067 = vcvt.s32.f32 %v1003
    %v1068 = vcvt.s32.f32 %v1004
    %v1069 = vcvt.s32.f32 %v1005
    %v1070 = vcvt.s32.f32 %v1006
    %v1071 = vcvt.s32.f32 %v1007
    %v1072 = vcvt.s32.f32 %v1008
    %v1073 = vcvt.s32.f32 %v1009
    %v1074 = vcvt.s32.f32 %v1010
    %v1075 = vcvt.s32.f32 %v1011
    %v1076 = vcvt.s32.f32 %v1012
    %v1077 = vcvt.s32.f32 %v1013
    %v1078 = vcvt.s32.f32 %v1014
    %v1079 = vcvt.s32.f32 %v1015
    %v1080 = vld [vmem:[#allocation9] sm:$0xff]
    %v1081 = vld [vmem:[#allocation9 + $0x8] sm:$0xff]
    %v1082 = vld [vmem:[#allocation9 + $0x10] sm:$0xff]
    %v1083 = vld [vmem:[#allocation9 + $0x18] sm:$0xff]
    %v1084 = vld [vmem:[#allocation9 + $0x20] sm:$0xff]
    %v1085 = vld [vmem:[#allocation9 + $0x28] sm:$0xff]
    %v1086 = vld [vmem:[#allocation9 + $0x30] sm:$0xff]
    %v1087 = vld [vmem:[#allocation9 + $0x38] sm:$0xff]
    %v1088 = vld [vmem:[#allocation9 + $0x40] sm:$0xff]
    %v1089 = vld [vmem:[#allocation9 + $0x48] sm:$0xff]
    %v1090 = vld [vmem:[#allocation9 + $0x50] sm:$0xff]
    %v1091 = vld [vmem:[#allocation9 + $0x58] sm:$0xff]
    %v1092 = vld [vmem:[#allocation9 + $0x60] sm:$0xff]
    %v1093 = vld [vmem:[#allocation9 + $0x68] sm:$0xff]
    %v1094 = vld [vmem:[#allocation9 + $0x70] sm:$0xff]
    %v1095 = vld [vmem:[#allocation9 + $0x78] sm:$0xff]
    %v1096 = vunpack.c.0.s8 %v1080
    %v1097 = vunpack.c.0.s8 %v1081
    %v1098 = vunpack.c.0.s8 %v1082
    %v1099 = vunpack.c.0.s8 %v1083
    %v1100 = vunpack.c.1.s8 %v1080
    %v1101 = vunpack.c.1.s8 %v1081
    %v1102 = vunpack.c.1.s8 %v1082
    %v1103 = vunpack.c.1.s8 %v1083
    %v1104 = vunpack.c.2.s8 %v1080
    %v1105 = vunpack.c.2.s8 %v1081
    %v1106 = vunpack.c.2.s8 %v1082
    %v1107 = vunpack.c.2.s8 %v1083
    %v1108 = vunpack.c.3.s8 %v1080
    %v1109 = vunpack.c.3.s8 %v1081
    %v1110 = vunpack.c.3.s8 %v1082
    %v1111 = vunpack.c.3.s8 %v1083
    %v1112 = vunpack.c.0.s8 %v1084
    %v1113 = vunpack.c.0.s8 %v1085
    %v1114 = vunpack.c.0.s8 %v1086
    %v1115 = vunpack.c.0.s8 %v1087
    %v1116 = vunpack.c.1.s8 %v1084
    %v1117 = vunpack.c.1.s8 %v1085
    %v1118 = vunpack.c.1.s8 %v1086
    %v1119 = vunpack.c.1.s8 %v1087
    %v1120 = vunpack.c.2.s8 %v1084
    %v1121 = vunpack.c.2.s8 %v1085
    %v1122 = vunpack.c.2.s8 %v1086
    %v1123 = vunpack.c.2.s8 %v1087
    %v1124 = vunpack.c.3.s8 %v1084
    %v1125 = vunpack.c.3.s8 %v1085
    %v1126 = vunpack.c.3.s8 %v1086
    %v1127 = vunpack.c.3.s8 %v1087
    %v1128 = vunpack.c.0.s8 %v1088
    %v1129 = vunpack.c.0.s8 %v1089
    %v1130 = vunpack.c.0.s8 %v1090
    %v1131 = vunpack.c.0.s8 %v1091
    %v1132 = vunpack.c.1.s8 %v1088
    %v1133 = vunpack.c.1.s8 %v1089
    %v1134 = vunpack.c.1.s8 %v1090
    %v1135 = vunpack.c.1.s8 %v1091
    %v1136 = vunpack.c.2.s8 %v1088
    %v1137 = vunpack.c.2.s8 %v1089
    %v1138 = vunpack.c.2.s8 %v1090
    %v1139 = vunpack.c.2.s8 %v1091
    %v1140 = vunpack.c.3.s8 %v1088
    %v1141 = vunpack.c.3.s8 %v1089
    %v1142 = vunpack.c.3.s8 %v1090
    %v1143 = vunpack.c.3.s8 %v1091
    %v1144 = vunpack.c.0.s8 %v1092
    %v1145 = vunpack.c.0.s8 %v1093
    %v1146 = vunpack.c.0.s8 %v1094
    %v1147 = vunpack.c.0.s8 %v1095
    %v1148 = vunpack.c.1.s8 %v1092
    %v1149 = vunpack.c.1.s8 %v1093
    %v1150 = vunpack.c.1.s8 %v1094
    %v1151 = vunpack.c.1.s8 %v1095
    %v1152 = vunpack.c.2.s8 %v1092
    %v1153 = vunpack.c.2.s8 %v1093
    %v1154 = vunpack.c.2.s8 %v1094
    %v1155 = vunpack.c.2.s8 %v1095
    %v1156 = vunpack.c.3.s8 %v1092
    %v1157 = vunpack.c.3.s8 %v1093
    %v1158 = vunpack.c.3.s8 %v1094
    %v1159 = vunpack.c.3.s8 %v1095
    %v1160 = vcvt.s32.f32 %v1096
    %v1161 = vcvt.s32.f32 %v1097
    %v1162 = vcvt.s32.f32 %v1098
    %v1163 = vcvt.s32.f32 %v1099
    %v1164 = vcvt.s32.f32 %v1100
    %v1165 = vcvt.s32.f32 %v1101
    %v1166 = vcvt.s32.f32 %v1102
    %v1167 = vcvt.s32.f32 %v1103
    %v1168 = vcvt.s32.f32 %v1104
    %v1169 = vcvt.s32.f32 %v1105
    %v1170 = vcvt.s32.f32 %v1106
    %v1171 = vcvt.s32.f32 %v1107
    %v1172 = vcvt.s32.f32 %v1108
    %v1173 = vcvt.s32.f32 %v1109
    %v1174 = vcvt.s32.f32 %v1110
    %v1175 = vcvt.s32.f32 %v1111
    %v1176 = vcvt.s32.f32 %v1112
    %v1177 = vcvt.s32.f32 %v1113
    %v1178 = vcvt.s32.f32 %v1114
    %v1179 = vcvt.s32.f32 %v1115
    %v1180 = vcvt.s32.f32 %v1116
    %v1181 = vcvt.s32.f32 %v1117
    %v1182 = vcvt.s32.f32 %v1118
    %v1183 = vcvt.s32.f32 %v1119
    %v1184 = vcvt.s32.f32 %v1120
    %v1185 = vcvt.s32.f32 %v1121
    %v1186 = vcvt.s32.f32 %v1122
    %v1187 = vcvt.s32.f32 %v1123
    %v1188 = vcvt.s32.f32 %v1124
    %v1189 = vcvt.s32.f32 %v1125
    %v1190 = vcvt.s32.f32 %v1126
    %v1191 = vcvt.s32.f32 %v1127
    %v1192 = vcvt.s32.f32 %v1128
    %v1193 = vcvt.s32.f32 %v1129
    %v1194 = vcvt.s32.f32 %v1130
    %v1195 = vcvt.s32.f32 %v1131
    %v1196 = vcvt.s32.f32 %v1132
    %v1197 = vcvt.s32.f32 %v1133
    %v1198 = vcvt.s32.f32 %v1134
    %v1199 = vcvt.s32.f32 %v1135
    %v1200 = vcvt.s32.f32 %v1136
    %v1201 = vcvt.s32.f32 %v1137
    %v1202 = vcvt.s32.f32 %v1138
    %v1203 = vcvt.s32.f32 %v1139
    %v1204 = vcvt.s32.f32 %v1140
    %v1205 = vcvt.s32.f32 %v1141
    %v1206 = vcvt.s32.f32 %v1142
    %v1207 = vcvt.s32.f32 %v1143
    %v1208 = vcvt.s32.f32 %v1144
    %v1209 = vcvt.s32.f32 %v1145
    %v1210 = vcvt.s32.f32 %v1146
    %v1211 = vcvt.s32.f32 %v1147
    %v1212 = vcvt.s32.f32 %v1148
    %v1213 = vcvt.s32.f32 %v1149
    %v1214 = vcvt.s32.f32 %v1150
    %v1215 = vcvt.s32.f32 %v1151
    %v1216 = vcvt.s32.f32 %v1152
    %v1217 = vcvt.s32.f32 %v1153
    %v1218 = vcvt.s32.f32 %v1154
    %v1219 = vcvt.s32.f32 %v1155
    %v1220 = vcvt.s32.f32 %v1156
    %v1221 = vcvt.s32.f32 %v1157
    %v1222 = vcvt.s32.f32 %v1158
    %v1223 = vcvt.s32.f32 %v1159
    %v1224 = vmul.f32 %v1016, %v1160
    %v1225 = vmul.f32 %v1017, %v1161
    %v1226 = vmul.f32 %v1018, %v1162
    %v1227 = vmul.f32 %v1019, %v1163
    %v1228 = vmul.f32 %v1020, %v1164
    %v1229 = vmul.f32 %v1021, %v1165
    %v1230 = vmul.f32 %v1022, %v1166
    %v1231 = vmul.f32 %v1023, %v1167
    %v1232 = vmul.f32 %v1024, %v1168
    %v1233 = vmul.f32 %v1025, %v1169
    %v1234 = vmul.f32 %v1026, %v1170
    %v1235 = vmul.f32 %v1027, %v1171
    %v1236 = vmul.f32 %v1028, %v1172
    %v1237 = vmul.f32 %v1029, %v1173
    %v1238 = vmul.f32 %v1030, %v1174
    %v1239 = vmul.f32 %v1031, %v1175
    %v1240 = vmul.f32 %v1032, %v1176
    %v1241 = vmul.f32 %v1033, %v1177
    %v1242 = vmul.f32 %v1034, %v1178
    %v1243 = vmul.f32 %v1035, %v1179
    %v1244 = vmul.f32 %v1036, %v1180
    %v1245 = vmul.f32 %v1037, %v1181
    %v1246 = vmul.f32 %v1038, %v1182
    %v1247 = vmul.f32 %v1039, %v1183
    %v1248 = vmul.f32 %v1040, %v1184
    %v1249 = vmul.f32 %v1041, %v1185
    %v1250 = vmul.f32 %v1042, %v1186
    %v1251 = vmul.f32 %v1043, %v1187
    %v1252 = vmul.f32 %v1044, %v1188
    %v1253 = vmul.f32 %v1045, %v1189
    %v1254 = vmul.f32 %v1046, %v1190
    %v1255 = vmul.f32 %v1047, %v1191
    %v1256 = vmul.f32 %v1048, %v1192
    %v1257 = vmul.f32 %v1049, %v1193
    %v1258 = vmul.f32 %v1050, %v1194
    %v1259 = vmul.f32 %v1051, %v1195
    %v1260 = vmul.f32 %v1052, %v1196
    %v1261 = vmul.f32 %v1053, %v1197
    %v1262 = vmul.f32 %v1054, %v1198
    %v1263 = vmul.f32 %v1055, %v1199
    %v1264 = vmul.f32 %v1056, %v1200
    %v1265 = vmul.f32 %v1057, %v1201
    %v1266 = vmul.f32 %v1058, %v1202
    %v1267 = vmul.f32 %v1059, %v1203
    %v1268 = vmul.f32 %v1060, %v1204
    %v1269 = vmul.f32 %v1061, %v1205
    %v1270 = vmul.f32 %v1062, %v1206
    %v1271 = vmul.f32 %v1063, %v1207
    %v1272 = vmul.f32 %v1064, %v1208
    %v1273 = vmul.f32 %v1065, %v1209
    %v1274 = vmul.f32 %v1066, %v1210
    %v1275 = vmul.f32 %v1067, %v1211
    %v1276 = vmul.f32 %v1068, %v1212
    %v1277 = vmul.f32 %v1069, %v1213
    %v1278 = vmul.f32 %v1070, %v1214
    %v1279 = vmul.f32 %v1071, %v1215
    %v1280 = vmul.f32 %v1072, %v1216
    %v1281 = vmul.f32 %v1073, %v1217
    %v1282 = vmul.f32 %v1074, %v1218
    %v1283 = vmul.f32 %v1075, %v1219
    %v1284 = vmul.f32 %v1076, %v1220
    %v1285 = vmul.f32 %v1077, %v1221
    %v1286 = vmul.f32 %v1078, %v1222
    %v1287 = vmul.f32 %v1079, %v1223
    %v1288 = vmul.f32 %v455, %v745
    %v1289 = vmul.f32 %v457, %v747
    %v1290 = vmul.f32 %v568, %v858
    %v1291 = vmul.f32 %v570, %v860
    %v1292 = vmul.f32 %v459, %v749
    %v1293 = vmul.f32 %v461, %v751
    %v1294 = vmul.f32 %v572, %v862
    %v1295 = vmul.f32 %v574, %v864
    %v1296 = vmul.f32 %v465, %v755
    %v1297 = vmul.f32 %v467, %v757
    %v1298 = vmul.f32 %v578, %v868
    %v1299 = vmul.f32 %v580, %v870
    %v1300 = vmul.f32 %v469, %v759
    %v1301 = vmul.f32 %v471, %v761
    %v1302 = vmul.f32 %v582, %v872
    %v1303 = vmul.f32 %v584, %v874
    %v1304 = vmul.f32 %v475, %v765
    %v1305 = vmul.f32 %v477, %v767
    %v1306 = vmul.f32 %v588, %v878
    %v1307 = vmul.f32 %v590, %v880
    %v1308 = vmul.f32 %v479, %v769
    %v1309 = vmul.f32 %v481, %v771
    %v1310 = vmul.f32 %v592, %v882
    %v1311 = vmul.f32 %v594, %v884
    %v1312 = vmul.f32 %v485, %v775
    %v1313 = vmul.f32 %v487, %v777
    %v1314 = vmul.f32 %v598, %v888
    %v1315 = vmul.f32 %v600, %v890
    %v1316 = vmul.f32 %v489, %v779
    %v1317 = vmul.f32 %v491, %v781
    %v1318 = vmul.f32 %v602, %v892
    %v1319 = vmul.f32 %v604, %v894
    %v1320 = vmul.f32 %v495, %v785
    %v1321 = vmul.f32 %v497, %v787
    %v1322 = vmul.f32 %v608, %v898
    %v1323 = vmul.f32 %v610, %v900
    %v1324 = vmul.f32 %v499, %v789
    %v1325 = vmul.f32 %v501, %v791
    %v1326 = vmul.f32 %v612, %v902
    %v1327 = vmul.f32 %v614, %v904
    %v1328 = vmul.f32 %v505, %v795
    %v1329 = vmul.f32 %v507, %v797
    %v1330 = vmul.f32 %v618, %v908
    %v1331 = vmul.f32 %v620, %v910
    %v1332 = vmul.f32 %v509, %v799
    %v1333 = vmul.f32 %v511, %v801
    %v1334 = vmul.f32 %v622, %v912
    %v1335 = vmul.f32 %v624, %v914
    %v1336 = vmul.f32 %v515, %v805
    %v1337 = vmul.f32 %v517, %v807
    %v1338 = vmul.f32 %v628, %v918
    %v1339 = vmul.f32 %v630, %v920
    %v1340 = vmul.f32 %v519, %v809
    %v1341 = vmul.f32 %v521, %v811
    %v1342 = vmul.f32 %v632, %v922
    %v1343 = vmul.f32 %v634, %v924
    %v1344 = vmul.f32 %v525, %v815
    %v1345 = vmul.f32 %v527, %v817
    %v1346 = vmul.f32 %v638, %v928
    %v1347 = vmul.f32 %v640, %v930
    %v1348 = vmul.f32 %v529, %v819
    %v1349 = vmul.f32 %v531, %v821
    %v1350 = vmul.f32 %v642, %v932
    %v1351 = vmul.f32 %v644, %v934
    %v1352 = vmul.f32 %v1224, %v1288
    %v1353 = vmul.f32 %v1225, %v1289
    %v1354 = vmul.f32 %v1226, %v1290
    %v1355 = vmul.f32 %v1227, %v1291
    %v1356 = vmul.f32 %v1228, %v1292
    %v1357 = vmul.f32 %v1229, %v1293
    %v1358 = vmul.f32 %v1230, %v1294
    %v1359 = vmul.f32 %v1231, %v1295
    %v1360 = vmul.f32 %v1232, %v1296
    %v1361 = vmul.f32 %v1233, %v1297
    %v1362 = vmul.f32 %v1234, %v1298
    %v1363 = vmul.f32 %v1235, %v1299
    %v1364 = vmul.f32 %v1236, %v1300
    %v1365 = vmul.f32 %v1237, %v1301
    %v1366 = vmul.f32 %v1238, %v1302
    %v1367 = vmul.f32 %v1239, %v1303
    %v1368 = vmul.f32 %v1240, %v1304
    %v1369 = vmul.f32 %v1241, %v1305
    %v1370 = vmul.f32 %v1242, %v1306
    %v1371 = vmul.f32 %v1243, %v1307
    %v1372 = vmul.f32 %v1244, %v1308
    %v1373 = vmul.f32 %v1245, %v1309
    %v1374 = vmul.f32 %v1246, %v1310
    %v1375 = vmul.f32 %v1247, %v1311
    %v1376 = vmul.f32 %v1248, %v1312
    %v1377 = vmul.f32 %v1249, %v1313
    %v1378 = vmul.f32 %v1250, %v1314
    %v1379 = vmul.f32 %v1251, %v1315
    %v1380 = vmul.f32 %v1252, %v1316
    %v1381 = vmul.f32 %v1253, %v1317
    %v1382 = vmul.f32 %v1254, %v1318
    %v1383 = vmul.f32 %v1255, %v1319
    %v1384 = vmul.f32 %v1256, %v1320
    %v1385 = vmul.f32 %v1257, %v1321
    %v1386 = vmul.f32 %v1258, %v1322
    %v1387 = vmul.f32 %v1259, %v1323
    %v1388 = vmul.f32 %v1260, %v1324
    %v1389 = vmul.f32 %v1261, %v1325
    %v1390 = vmul.f32 %v1262, %v1326
    %v1391 = vmul.f32 %v1263, %v1327
    %v1392 = vmul.f32 %v1264, %v1328
    %v1393 = vmul.f32 %v1265, %v1329
    %v1394 = vmul.f32 %v1266, %v1330
    %v1395 = vmul.f32 %v1267, %v1331
    %v1396 = vmul.f32 %v1268, %v1332
    %v1397 = vmul.f32 %v1269, %v1333
    %v1398 = vmul.f32 %v1270, %v1334
    %v1399 = vmul.f32 %v1271, %v1335
    %v1400 = vmul.f32 %v1272, %v1336
    %v1401 = vmul.f32 %v1273, %v1337
    %v1402 = vmul.f32 %v1274, %v1338
    %v1403 = vmul.f32 %v1275, %v1339
    %v1404 = vmul.f32 %v1276, %v1340
    %v1405 = vmul.f32 %v1277, %v1341
    %v1406 = vmul.f32 %v1278, %v1342
    %v1407 = vmul.f32 %v1279, %v1343
    %v1408 = vmul.f32 %v1280, %v1344
    %v1409 = vmul.f32 %v1281, %v1345
    %v1410 = vmul.f32 %v1282, %v1346
    %v1411 = vmul.f32 %v1283, %v1347
    %v1412 = vmul.f32 %v1284, %v1348
    %v1413 = vmul.f32 %v1285, %v1349
    %v1414 = vmul.f32 %v1286, %v1350
    %v1415 = vmul.f32 %v1287, %v1351
    %v1416 = vld [vmem:[#allocation2] sm:$0x1]
    %1417 = vmatprep.subr.mxu0 %v1353
    %1418 = vmatpush1.xpose.msra.mxu0 %v1352
    %1419 = vmatprep.subr.mxu0 %v1357
    %1420 = vmatpush1.xpose.msra.mxu0 %v1356
    %1421 = vmatprep.subr.mxu0 %v1361
    %1422 = vmatpush1.xpose.msra.mxu0 %v1360
    %1423 = vmatprep.subr.mxu0 %v1365
    %1424 = vmatpush1.xpose.msra.mxu0 %v1364
    %1425 = vmatprep.subr.mxu0 %v1369
    %1426 = vmatpush1.xpose.msra.mxu0 %v1368
    %1427 = vmatprep.subr.mxu0 %v1373
    %1428 = vmatpush1.xpose.msra.mxu0 %v1372
    %1429 = vmatprep.subr.mxu0 %v1377
    %1430 = vmatpush1.xpose.msra.mxu0 %v1376
    %1431 = vmatprep.subr.mxu0 %v1381
    %1432 = vmatpush1.xpose.msra.mxu0 %v1380
    %1433 = vmatprep.subr.mxu0 %v1385
    %1434 = vmatpush1.xpose.msra.mxu0 %v1384
    %1435 = vmatprep.subr.mxu0 %v1389
    %1436 = vmatpush1.xpose.msra.mxu0 %v1388
    %1437 = vmatprep.subr.mxu0 %v1393
    %1438 = vmatpush1.xpose.msra.mxu0 %v1392
    %1439 = vmatprep.subr.mxu0 %v1397
    %1440 = vmatpush1.xpose.msra.mxu0 %v1396
    %1441 = vmatprep.subr.mxu0 %v1401
    %1442 = vmatpush1.xpose.msra.mxu0 %v1400
    %1443 = vmatprep.subr.mxu0 %v1405
    %1444 = vmatpush1.xpose.msra.mxu0 %v1404
    %1445 = vmatprep.subr.mxu0 %v1409
    %1446 = vmatpush1.xpose.msra.mxu0 %v1408
    %1447 = vmatprep.subr.mxu0 %v1413
    %1448 = vmatpush1.xpose.msra.mxu0 %v1412
    %1449 = vmatprep.subr.mxu0 0.0
    %1450 = vmatpush1.xpose.msra.mxu0 0.0
    %1451 = vmatprep.subr.mxu0 0.0
    %1452 = vmatpush1.xpose.msra.mxu0 0.0
    %1453 = vmatprep.subr.mxu0 0.0
    %1454 = vmatpush1.xpose.msra.mxu0 0.0
    %1455 = vmatprep.subr.mxu0 0.0
    %1456 = vmatpush1.xpose.msra.mxu0 0.0
    %1457 = vmatprep.subr.mxu0 0.0
    %1458 = vmatpush1.xpose.msra.mxu0 0.0
    %1459 = vmatprep.subr.mxu0 0.0
    %1460 = vmatpush1.xpose.msra.mxu0 0.0
    %1461 = vmatprep.subr.mxu0 0.0
    %1462 = vmatpush1.xpose.msra.mxu0 0.0
    %1463 = vmatprep.subr.mxu0 0.0
    %1464 = vmatpush1.xpose.msra.mxu0 0.0
    %1465 = vmatprep.subr.mxu0 0.0
    %1466 = vmatpush1.xpose.msra.mxu0 0.0
    %1467 = vmatprep.subr.mxu0 0.0
    %1468 = vmatpush1.xpose.msra.mxu0 0.0
    %1469 = vmatprep.subr.mxu0 0.0
    %1470 = vmatpush1.xpose.msra.mxu0 0.0
    %1471 = vmatprep.subr.mxu0 0.0
    %1472 = vmatpush1.xpose.msra.mxu0 0.0
    %1473 = vmatprep.subr.mxu0 0.0
    %1474 = vmatpush1.xpose.msra.mxu0 0.0
    %1475 = vmatprep.subr.mxu0 0.0
    %1476 = vmatpush1.xpose.msra.mxu0 0.0
    %1477 = vmatprep.subr.mxu0 0.0
    %1478 = vmatpush1.xpose.msra.mxu0 0.0
    %1479 = vmatprep.subr.mxu0 0.0
    %1480 = vmatpush1.xpose.msra.mxu0 0.0
    %1481 = vmatprep.mubr.f32.mxu0 1.0
    %1482 = vmatmul.mubr.f32.gmra.mrb[0].mxu0 1.0
    %v1483 = vpop.f32.mrb[0].mxu0
    %v1484 = vadd.f32 0.0, %v1483
    %v1485 = vpop.f32.mrb[0].mxu0
    %1486 = vdwg.mxu0
    %1487 = vmatprep.subr.mxu0 %v1355
    %1488 = vmatpush1.xpose.msra.mxu0 %v1354
    %1489 = vmatprep.subr.mxu0 %v1359
    %1490 = vmatpush1.xpose.msra.mxu0 %v1358
    %1491 = vmatprep.subr.mxu0 %v1363
    %1492 = vmatpush1.xpose.msra.mxu0 %v1362
    %1493 = vmatprep.subr.mxu0 %v1367
    %1494 = vmatpush1.xpose.msra.mxu0 %v1366
    %1495 = vmatprep.subr.mxu0 %v1371
    %1496 = vmatpush1.xpose.msra.mxu0 %v1370
    %1497 = vmatprep.subr.mxu0 %v1375
    %1498 = vmatpush1.xpose.msra.mxu0 %v1374
    %1499 = vmatprep.subr.mxu0 %v1379
    %1500 = vmatpush1.xpose.msra.mxu0 %v1378
    %1501 = vmatprep.subr.mxu0 %v1383
    %1502 = vmatpush1.xpose.msra.mxu0 %v1382
    %1503 = vmatprep.subr.mxu0 %v1387
    %1504 = vmatpush1.xpose.msra.mxu0 %v1386
    %1505 = vmatprep.subr.mxu0 %v1391
    %1506 = vmatpush1.xpose.msra.mxu0 %v1390
    %1507 = vmatprep.subr.mxu0 %v1395
    %1508 = vmatpush1.xpose.msra.mxu0 %v1394
    %1509 = vmatprep.subr.mxu0 %v1399
    %1510 = vmatpush1.xpose.msra.mxu0 %v1398
    %1511 = vmatprep.subr.mxu0 %v1403
    %1512 = vmatpush1.xpose.msra.mxu0 %v1402
    %1513 = vmatprep.subr.mxu0 %v1407
    %1514 = vmatpush1.xpose.msra.mxu0 %v1406
    %1515 = vmatprep.subr.mxu0 %v1411
    %1516 = vmatpush1.xpose.msra.mxu0 %v1410
    %1517 = vmatprep.subr.mxu0 %v1415
    %1518 = vmatpush1.xpose.msra.mxu0 %v1414
    %1519 = vmatprep.subr.mxu0 0.0
    %1520 = vmatpush1.xpose.msra.mxu0 0.0
    %1521 = vmatprep.subr.mxu0 0.0
    %1522 = vmatpush1.xpose.msra.mxu0 0.0
    %1523 = vmatprep.subr.mxu0 0.0
    %1524 = vmatpush1.xpose.msra.mxu0 0.0
    %1525 = vmatprep.subr.mxu0 0.0
    %1526 = vmatpush1.xpose.msra.mxu0 0.0
    %1527 = vmatprep.subr.mxu0 0.0
    %1528 = vmatpush1.xpose.msra.mxu0 0.0
    %1529 = vmatprep.subr.mxu0 0.0
    %1530 = vmatpush1.xpose.msra.mxu0 0.0
    %1531 = vmatprep.subr.mxu0 0.0
    %1532 = vmatpush1.xpose.msra.mxu0 0.0
    %1533 = vmatprep.subr.mxu0 0.0
    %1534 = vmatpush1.xpose.msra.mxu0 0.0
    %1535 = vmatprep.subr.mxu0 0.0
    %1536 = vmatpush1.xpose.msra.mxu0 0.0
    %1537 = vmatprep.subr.mxu0 0.0
    %1538 = vmatpush1.xpose.msra.mxu0 0.0
    %1539 = vmatprep.subr.mxu0 0.0
    %1540 = vmatpush1.xpose.msra.mxu0 0.0
    %1541 = vmatprep.subr.mxu0 0.0
    %1542 = vmatpush1.xpose.msra.mxu0 0.0
    %1543 = vmatprep.subr.mxu0 0.0
    %1544 = vmatpush1.xpose.msra.mxu0 0.0
    %1545 = vmatprep.subr.mxu0 0.0
    %1546 = vmatpush1.xpose.msra.mxu0 0.0
    %1547 = vmatprep.subr.mxu0 0.0
    %1548 = vmatpush1.xpose.msra.mxu0 0.0
    %1549 = vmatprep.subr.mxu0 0.0
    %1550 = vmatpush1.xpose.msra.mxu0 0.0
    %1551 = vmatprep.mubr.f32.mxu0 1.0
    %1552 = vmatmul.mubr.f32.gmra.mrb[0].mxu0 1.0
    %v1553 = vpop.f32.mrb[0].mxu0
    %v1554 = vadd.f32 %v1484, %v1553
    %v1555 = vpop.f32.mrb[0].mxu0
    %1556 = vdwg.mxu0
    %v1557 = vadd.f32 %v1416, %v1554
    %1558 = vst [vmem:[#allocation2] sm:$0x1] %v1557
    // Predicated region
    $region46: #{weighted_common_neighbors_predictor.3} parent=1 // pred_check
      %p1559 = pneg %p90
    $region47: #{weighted_common_neighbors_predictor.3} parent=1 // pred_check_branch
      %1561 = sbr.rel (%p1559) target = $region49
    $region48: #{weighted_common_neighbors_predictor.3} parent=1 // pred_region
      %v1562 = vld [vmem:[#allocation2] sm:$0x1]
      %v1563 = vxor.u32 %v1562, 2147483648
      %v1564 = vmul.f32 %v1563, 1.442695
      %v1565 = vpow.pop %v1564
      %v1566 = vadd.f32 %v1565, 1.0
      %v1567 = vrcp.pop %v1566
      %v1568 = vmul.f32 1.0, %v1567
      %1569 = vst [vmem:[#allocation12] sm:$0x1] %v1568
    $region49: #{weighted_common_neighbors_predictor.3} parent=1 // pred_fallthru
      _
    // Predicated region
    $region50: #{weighted_common_neighbors_predictor.3} parent=1 // pred_check
      _
    $region51: #{weighted_common_neighbors_predictor.3} parent=1 // pred_check_branch
      %1571 = sbr.rel (0) target = $region53
    $region52: #{weighted_common_neighbors_predictor.3} parent=1 // pred_region
      %s1573 = ssub.s32 16, 16
      %1574 = vsyncadd [#allocation5], %s1573
      %s1576 = sshll.u32 [#allocation12], 4
      %s1577 = int_to_ptr.vmem [resolvable:$true] %s1576
      %1579 = dma.vmem_to_hbm [thread:$0]  %s1577, 16, %s5, [#allocation5]
    $region53: #{weighted_common_neighbors_predictor.3} parent=1 // pred_fallthru
      _
    // Predicated region
    $region54: #{weighted_common_neighbors_predictor.3} parent=1 // pred_check
      _
    $region55: #{weighted_common_neighbors_predictor.3} parent=1 // pred_check_branch
      %1581 = sbr.rel (0) target = $region57
    $region56: #{weighted_common_neighbors_predictor.3} parent=1 // pred_region
      %1582 = dma.done [#allocation5], 16
    $region57: #{weighted_common_neighbors_predictor.3} parent=1 // pred_fallthru
      _
    %1583 = vsyncpa [#allocation4], 1
    %1584 = vsyncpa [#allocation7], 1
    %1585 = vsyncpa [#allocation10], 1
    %1586 = vsyncpa [#allocation5], 1

</llo_original>
